<compile_context>
chip_gen: v7x
topology: tpu7x:2x2x1
jax: 0.10.0
libtpu: 0.0.40
codegen_flags: <defaults>
</compile_context>

<pallas_src>
import functools

import jax
import jax.numpy as jnp
from jax import lax
from jax.experimental import pallas as pl
from jax.experimental.pallas import tpu as pltpu

K = 7            # conv stem kernel size
STRIDE = 2
PAD = 3
COUT = 64        # real conv-stem output channels
CP = 128         # channel dim padded for lane-dense tiles
KP = 384         # im2col contraction dim 343 padded to a multiple of 128
BN_EPS = 1e-5
NORM_EPS = 1e-10
STATS_EPS = 1e-12
VMEM_LIMIT_BYTES = 32 * 1024 * 1024   # >= v5e's 16 MiB scoped default, == v6e/v7x default


def _round_up(x, m):
    return ((x + m - 1) // m) * m


# ---------------------------------------------------------------------------
# Kernel 1a: lane-partial sums of both volumes (pass 1 of the two-pass stats).
# ---------------------------------------------------------------------------
def _sum_kernel(xi_ref, xt_ref, o_ref):
    @pl.when(pl.program_id(0) == 0)
    def _():
        o_ref[...] = jnp.zeros_like(o_ref)

    part = jnp.concatenate(
        [jnp.sum(xi_ref[...], axis=0, keepdims=True),
         jnp.sum(xt_ref[...], axis=0, keepdims=True)],
        axis=0)                                   # (2, 128) lane partials
    o_ref[...] += part


# ---------------------------------------------------------------------------
# Kernel 1b: lane-partial centered sums of squares (pass 2 of the stats).
# The means come in as a tiny (2, 128) VMEM-resident tile.
# ---------------------------------------------------------------------------
def _censq_kernel(mean_ref, xi_ref, xt_ref, o_ref):
    @pl.when(pl.program_id(0) == 0)
    def _():
        o_ref[...] = jnp.zeros_like(o_ref)

    ci = xi_ref[...] - mean_ref[0:1, :]
    ct = xt_ref[...] - mean_ref[1:2, :]
    part = jnp.concatenate(
        [jnp.sum(ci * ci, axis=0, keepdims=True),
         jnp.sum(ct * ct, axis=0, keepdims=True)],
        axis=0)                                   # (2, 128)
    o_ref[...] += part


def _volume_stats(x_i, x_t):
    """Batch-pooled mean / inv_std for input and target (matches the reference)."""
    n = x_i.size
    rows = min(2048, _round_up(pl.cdiv(n, 128), 8))    # block rows (multiple of 8)
    block_elems = rows * 128
    n_chunks = pl.cdiv(n, block_elems)
    tot = n_chunks * block_elems
    pad = tot - n                                       # static Python int

    def prep(x):
        flat = x.astype(jnp.float32).reshape(-1)
        if pad:  # only materialise a padded copy when the volume is not an exact multiple
            flat = jnp.pad(flat, (0, pad))
        return flat.reshape(n_chunks * rows, 128)

    xi2d = prep(x_i)
    xt2d = prep(x_t)

    blk = pl.BlockSpec((rows, 128), lambda i: (i, 0))
    out_spec = pl.BlockSpec((2, 128), lambda i: (0, 0))
    cparams = pltpu.CompilerParams(dimension_semantics=("arbitrary",))

    sums = pl.pallas_call(
        _sum_kernel,
        out_shape=jax.ShapeDtypeStruct((2, 128), jnp.float32),
        grid=(n_chunks,),
        in_specs=[blk, blk],
        out_specs=out_spec,
        compiler_params=cparams,
    )(xi2d, xt2d)

    mean_i = jnp.sum(sums[0]) / n
    mean_t = jnp.sum(sums[1]) / n

    means_tile = jnp.broadcast_to(jnp.stack([mean_i, mean_t])[:, None], (2, 128))
    censq = pl.pallas_call(
        _censq_kernel,
        out_shape=jax.ShapeDtypeStruct((2, 128), jnp.float32),
        grid=(n_chunks,),
        in_specs=[pl.BlockSpec((2, 128), lambda i: (0, 0)), blk, blk],
        out_specs=out_spec,
        compiler_params=cparams,
    )(means_tile, xi2d, xt2d)

    # Padded entries are exactly 0.0, so each contributes exactly mean^2 to the centered
    # sum of squares; subtract that analytically instead of masking in-kernel.
    cs_i = jnp.sum(censq[0]) - pad * mean_i * mean_i
    cs_t = jnp.sum(censq[1]) - pad * mean_t * mean_t

    def finish(cs):
        var = cs / (n - 1)                        # torch.std: unbiased estimator
        return lax.rsqrt(jnp.maximum(var, 0.0) + STATS_EPS)

    return (mean_i, finish(cs_i)), (mean_t, finish(cs_t))


# ---------------------------------------------------------------------------
# Kernel 2: fused conv stem (im2col matmul) + folded BN/intensity scale + ReLU
#           + channel-L2 normalisation + perceptual reduction.
# Input and target rows of the same tile are packed into one block and consumed with a
# single MXU matmul; per-(batch, grid-half) per-channel partial loss sums are accumulated
# across the row-tile (reduction) axis.  No [B, P, C] feature tensor ever touches HBM.
# ---------------------------------------------------------------------------
def _fused_conv_loss_kernel(p_ref, w_ref, sb_ref, o_ref):
    @pl.when(pl.program_id(2) == 0)
    def _():
        o_ref[...] = jnp.zeros_like(o_ref)

    tm = p_ref.shape[2]
    kp = p_ref.shape[3]

    # Single bf16 MXU matmul over both branches (2*tm rows) keeps the RHS pushed once per
    # tile and avoids a drain between back-to-back dots; f32 accumulation + f32 epilogue.
    p = p_ref[...].reshape(2 * tm, kp)                                  # leading-dim merge
    acc = jnp.dot(p, w_ref[...], preferred_element_type=jnp.float32)    # (2*tm, CP)
    acc = acc.reshape(2, tm, CP)

    sb = sb_ref[...]                                                    # (2, 2, CP) f32
    f = jnp.maximum(acc * sb[:, 0:1, :] + sb[:, 1:2, :], 0.0)           # folded BN + ReLU
    ssq = jnp.sum(f * f, axis=-1, keepdims=True)                        # (2, tm, 1)
    inv_norm = pl.reciprocal(jnp.sqrt(ssq) + NORM_EPS, approx=True)     # EUP slot
    fn = f * inv_norm

    # Padded patch rows contribute exactly zero: their im2col rows are all zeros, so acc==0
    # and (shared bias, shared eps) both branches yield identical features -> diff == 0.
    d = fn[0] - fn[1]
    part = jnp.sum(d * d, axis=0, keepdims=True)                        # (1, CP) channel partials
    o_ref[...] += part[None, :, :]                                      # replicate over sublanes


def _fused_conv_perceptual(p_all, w, sb, tm):
    B, _, p_pad, kp = p_all.shape
    n_half = p_pad // (2 * tm)
    grid = (B, 2, n_half)   # (batch, row-axis half for v7x megacore, row tiles = reduction)
    out = pl.pallas_call(
        _fused_conv_loss_kernel,
        out_shape=jax.ShapeDtypeStruct((B, 2, 8, CP), jnp.float32),
        grid=grid,
        in_specs=[
            pl.BlockSpec((1, 2, tm, kp), lambda b, c, r: (b, 0, c * n_half + r, 0)),
            pl.BlockSpec((kp, CP), lambda b, c, r: (0, 0)),        # weights (resident)
            pl.BlockSpec((2, 2, CP), lambda b, c, r: (0, 0, 0)),   # scale/bias per branch
        ],
        out_specs=pl.BlockSpec((1, 1, 8, CP), lambda b, c, r: (b, c, 0, 0)),
        compiler_params=pltpu.CompilerParams(
            dimension_semantics=("parallel", "parallel", "arbitrary"),
            vmem_limit_bytes=VMEM_LIMIT_BYTES),
    )(p_all, w, sb)
    # sublane rows are replicas -> take row 0; sum the two grid halves and the channels
    return jnp.sum(out[:, :, 0, :], axis=(1, 2))                   # (B,)


# ---------------------------------------------------------------------------
# JAX glue: centered im2col (pure slice / stack), bf16 to halve the patch HBM traffic.
# TODO(synk): move patch extraction into the Pallas kernel via halo DMA (memory_space=pl.ANY
# volumes + pltpu.make_async_copy depth slabs) to remove the ~K^3/stride^3 patch inflation.
# ---------------------------------------------------------------------------
def _im2col_centered(x, mean, p_pad):
    """x: (B, D, H, W) f32.  Centering before the zero padding keeps the padding semantics
    of the reference (which zero-pads the *normalised* volume); the 1/std factor is folded
    into the conv epilogue scale."""
    B, D, H, W = x.shape
    xp = jnp.pad((x - mean).astype(jnp.bfloat16),
                 ((0, 0), (PAD, PAD), (PAD, PAD), (PAD, PAD)))
    Do = (D + 2 * PAD - K) // STRIDE + 1
    Ho = (H + 2 * PAD - K) // STRIDE + 1
    Wo = (W + 2 * PAD - K) // STRIDE + 1
    cols = []
    for kd in range(K):
        for kh in range(K):
            for kw in range(K):
                cols.append(
                    xp[:,
                       kd:kd + STRIDE * Do:STRIDE,
                       kh:kh + STRIDE * Ho:STRIDE,
                       kw:kw + STRIDE * Wo:STRIDE])
    patches = jnp.stack(cols, axis=-1).reshape(B, Do * Ho * Wo, K * K * K)
    P = Do * Ho * Wo
    return jnp.pad(patches, ((0, 0), (0, p_pad - P), (0, KP - K * K * K)))


# ---------------------------------------------------------------------------
# Full forward pass.
# ---------------------------------------------------------------------------
def medicalnet_perceptual_similarity(inp, tgt, params):
    B, C, D, H, W = inp.shape
    assert C == 1, "MedicalNet backbone expects single-channel volumes"
    x_i = inp.astype(jnp.float32).reshape(B, D, H, W)
    x_t = tgt.astype(jnp.float32).reshape(B, D, H, W)

    # intensity-normalisation statistics (Pallas kernels 1a/1b, two-pass)
    (mean_i, inv_i), (mean_t, inv_t) = _volume_stats(x_i, x_t)

    # output geometry and row tiling
    Do = (D + 2 * PAD - K) // STRIDE + 1
    Ho = (H + 2 * PAD - K) // STRIDE + 1
    Wo = (W + 2 * PAD - K) // STRIDE + 1
    P = Do * Ho * Wo
    tm = min(4096, _round_up(P, 512))     # large row tile (feedback); fits 32 MiB scoped VMEM
    p_pad = _round_up(P, 2 * tm)          # multiple of 2*tm so the v7x half-split divides

    # centered im2col (JAX glue); pack input+target patches into one operand
    pi = _im2col_centered(x_i, mean_i, p_pad)
    pt = _im2col_centered(x_t, mean_t, p_pad)
    p_all = jnp.stack([pi, pt], axis=1)                       # (B, 2, p_pad, KP) bf16

    scale, bias = params["scale"], params["bias"]
    sb = jnp.stack([jnp.stack([scale * inv_i, bias]),
                    jnp.stack([scale * inv_t, bias])])        # (2, 2, CP) f32

    # fused conv stem + perceptual loss (Pallas kernel 2)
    per_batch = _fused_conv_perceptual(p_all, params["w"], sb, tm)
    loss = per_batch / P                  # spatial mean of the channel-summed squared diff
    return loss.reshape(B, 1, 1, 1, 1)    # matches PyTorch BCDHW output


def init_params():
    key = jax.random.PRNGKey(42)
    kw_, kg, kb, km, kv = jax.random.split(key, 5)
    w = jax.random.normal(kw_, (K * K * K, COUT), jnp.float32) * 0.05
    gamma = 1.0 + 0.1 * jax.random.normal(kg, (COUT,), jnp.float32)
    beta = 0.1 * jax.random.normal(kb, (COUT,), jnp.float32)
    rmean = 0.01 * jax.random.normal(km, (COUT,), jnp.float32)
    rvar = 1.0 + 0.1 * jax.random.uniform(kv, (COUT,), jnp.float32)
    inv_std = gamma / jnp.sqrt(rvar + BN_EPS)
    # Pad to lane-dense shapes: channels 64..127 and taps 343..383 are exact zeros and are
    # inert through the matmul, ReLU, L2-norm and the squared difference.
    w_pad = jnp.zeros((KP, CP), jnp.float32).at[:K * K * K, :COUT].set(w)
    scale = jnp.zeros((CP,), jnp.float32).at[:COUT].set(inv_std)
    bias = jnp.zeros((CP,), jnp.float32).at[:COUT].set(beta - rmean * inv_std)
    return {"w": w_pad.astype(jnp.bfloat16), "scale": scale, "bias": bias}


if __name__ == "__main__":
    B, C, D, H, W = 2, 1, 16, 16, 16
    key = jax.random.PRNGKey(0)
    k1, k2 = jax.random.split(key)
    inp = jax.random.normal(k1, (B, C, D, H, W), jnp.float32)
    tgt = jax.random.normal(k2, (B, C, D, H, W), jnp.float32)

    params = init_params()
    fwd = jax.jit(functools.partial(medicalnet_perceptual_similarity, params=params))
    out = fwd(inp, tgt)
    jax.block_until_ready(out)

    assert out.shape == (B, 1, 1, 1, 1), out.shape
    assert jnp.all(jnp.isfinite(out))
    print("KERNEL_OK")
</pallas_src>

<mosaic_0001>
module attributes {stable_mosaic.version = 11 : i64} {
  func.func @_sum_kernel(%arg0: i32, %arg1: memref<64x128xf32, #tpu.memory_space<vmem>>, %arg2: memref<64x128xf32, #tpu.memory_space<vmem>>, %arg3: memref<2x128xf32, #tpu.memory_space<vmem>>) attributes {dimension_semantics = [#tpu.dimension_semantics<arbitrary>], iteration_bounds = array<i64: 1>, scalar_prefetch = 0 : i64, scratch_operands = 0 : i64, tpu.core_type = #tpu.core_type<tc>, window_params = [{transform_indices = @transform_0, window_bounds = array<i64: 64, 128>}, {transform_indices = @transform_1, window_bounds = array<i64: 64, 128>}, {pipeline_mode = #tpu.pipeline_mode<synchronous>, transform_indices = @transform_2, window_bounds = array<i64: 2, 128>}]} {
    %c0_i32 = arith.constant 0 : i32
    %0 = arith.cmpi eq, %arg0, %c0_i32 : i32
    %1 = arith.extui %0 : i1 to i32
    %c0_i32_0 = arith.constant 0 : i32
    %2 = arith.cmpi ne, %1, %c0_i32_0 : i32
    scf.if %2 {
      %cst_9 = arith.constant 0.000000e+00 : f32
      %13 = vector.broadcast %cst_9 : f32 to vector<2x128xf32>
      %c0_10 = arith.constant 0 : index
      %c0_11 = arith.constant 0 : index
      %14 = vector.load %arg3[%c0_10, %c0_11] : memref<2x128xf32, #tpu.memory_space<vmem>>, vector<2x128xf32>
      tpu.vector_store %arg3[%c0_10, %c0_11], %13 {strides = array<i32>} : memref<2x128xf32, #tpu.memory_space<vmem>>, vector<2x128xf32>,
    } else {
    }
    %c0 = arith.constant 0 : index
    %c0_1 = arith.constant 0 : index
    %3 = vector.load %arg1[%c0, %c0_1] : memref<64x128xf32, #tpu.memory_space<vmem>>, vector<64x128xf32>
    %cst = arith.constant dense<0.000000e+00> : vector<128xf32>
    %4 = vector.multi_reduction <add>, %3, %cst [0] : vector<64x128xf32> to vector<128xf32>
    %5 = vector.shape_cast %4 : vector<128xf32> to vector<1x128xf32>
    %c0_2 = arith.constant 0 : index
    %c0_3 = arith.constant 0 : index
    %6 = vector.load %arg2[%c0_2, %c0_3] : memref<64x128xf32, #tpu.memory_space<vmem>>, vector<64x128xf32>
    %cst_4 = arith.constant dense<0.000000e+00> : vector<128xf32>
    %7 = vector.multi_reduction <add>, %6, %cst_4 [0] : vector<64x128xf32> to vector<128xf32>
    %8 = vector.shape_cast %7 : vector<128xf32> to vector<1x128xf32>
    %9 = tpu.concatenate %5, %8 in 0 : vector<1x128xf32>, vector<1x128xf32> -> vector<2x128xf32>
    %c0_5 = arith.constant 0 : index
    %c0_6 = arith.constant 0 : index
    %10 = vector.load %arg3[%c0_5, %c0_6] : memref<2x128xf32, #tpu.memory_space<vmem>>, vector<2x128xf32>
    %11 = arith.addf %10, %9 : vector<2x128xf32>
    %c0_7 = arith.constant 0 : index
    %c0_8 = arith.constant 0 : index
    %12 = vector.load %arg3[%c0_7, %c0_8] : memref<2x128xf32, #tpu.memory_space<vmem>>, vector<2x128xf32>
    tpu.vector_store %arg3[%c0_7, %c0_8], %11 {strides = array<i32>} : memref<2x128xf32, #tpu.memory_space<vmem>>, vector<2x128xf32>,
    return
  }
  func.func @transform_0(%arg0: i32) -> (i32, i32) {
    %c0_i32 = arith.constant 0 : i32
    %c0_i32_0 = arith.constant 0 : i32
    return %arg0, %c0_i32 : i32, i32
  }
  func.func @transform_1(%arg0: i32) -> (i32, i32) {
    %c0_i32 = arith.constant 0 : i32
    %c0_i32_0 = arith.constant 0 : i32
    return %arg0, %c0_i32 : i32, i32
  }
  func.func @transform_2(%arg0: i32) -> (i32, i32) {
    %c0_i32 = arith.constant 0 : i32
    %c0_i32_0 = arith.constant 0 : i32
    %c0_i32_1 = arith.constant 0 : i32
    return %c0_i32, %c0_i32_0 : i32, i32
  }
}

module attributes {stable_mosaic.version = 11 : i64} {
  func.func @_censq_kernel(%arg0: i32, %arg1: memref<2x128xf32, #tpu.memory_space<vmem>>, %arg2: memref<64x128xf32, #tpu.memory_space<vmem>>, %arg3: memref<64x128xf32, #tpu.memory_space<vmem>>, %arg4: memref<2x128xf32, #tpu.memory_space<vmem>>) attributes {dimension_semantics = [#tpu.dimension_semantics<arbitrary>], iteration_bounds = array<i64: 1>, scalar_prefetch = 0 : i64, scratch_operands = 0 : i64, tpu.core_type = #tpu.core_type<tc>, window_params = [{pipeline_mode = #tpu.pipeline_mode<synchronous>, transform_indices = @transform_0, window_bounds = array<i64: 2, 128>}, {transform_indices = @transform_1, window_bounds = array<i64: 64, 128>}, {transform_indices = @transform_2, window_bounds = array<i64: 64, 128>}, {pipeline_mode = #tpu.pipeline_mode<synchronous>, transform_indices = @transform_3, window_bounds = array<i64: 2, 128>}]} {
    %c0_i32 = arith.constant 0 : i32
    %0 = arith.cmpi eq, %arg0, %c0_i32 : i32
    %1 = arith.extui %0 : i1 to i32
    %c0_i32_0 = arith.constant 0 : i32
    %2 = arith.cmpi ne, %1, %c0_i32_0 : i32
    scf.if %2 {
      %cst_12 = arith.constant 0.000000e+00 : f32
      %21 = vector.broadcast %cst_12 : f32 to vector<2x128xf32>
      %c0_13 = arith.constant 0 : index
      %c0_14 = arith.constant 0 : index
      %22 = vector.load %arg4[%c0_13, %c0_14] : memref<2x128xf32, #tpu.memory_space<vmem>>, vector<2x128xf32>
      tpu.vector_store %arg4[%c0_13, %c0_14], %21 {strides = array<i32>} : memref<2x128xf32, #tpu.memory_space<vmem>>, vector<2x128xf32>,
    } else {
    }
    %c0 = arith.constant 0 : index
    %c0_1 = arith.constant 0 : index
    %3 = vector.load %arg2[%c0, %c0_1] : memref<64x128xf32, #tpu.memory_space<vmem>>, vector<64x128xf32>
    %c0_2 = arith.constant 0 : index
    %c0_3 = arith.constant 0 : index
    %4 = vector.load %arg1[%c0_2, %c0_3] : memref<2x128xf32, #tpu.memory_space<vmem>>, vector<1x128xf32>
    %5 = vector.broadcast %4 : vector<1x128xf32> to vector<64x128xf32>
    %6 = arith.subf %3, %5 : vector<64x128xf32>
    %c0_4 = arith.constant 0 : index
    %c0_5 = arith.constant 0 : index
    %7 = vector.load %arg3[%c0_4, %c0_5] : memref<64x128xf32, #tpu.memory_space<vmem>>, vector<64x128xf32>
    %c1 = arith.constant 1 : index
    %c0_6 = arith.constant 0 : index
    %8 = vector.load %arg1[%c1, %c0_6] : memref<2x128xf32, #tpu.memory_space<vmem>>, vector<1x128xf32>
    %9 = vector.broadcast %8 : vector<1x128xf32> to vector<64x128xf32>
    %10 = arith.subf %7, %9 : vector<64x128xf32>
    %11 = arith.mulf %6, %6 : vector<64x128xf32>
    %cst = arith.constant dense<0.000000e+00> : vector<128xf32>
    %12 = vector.multi_reduction <add>, %11, %cst [0] : vector<64x128xf32> to vector<128xf32>
    %13 = vector.shape_cast %12 : vector<128xf32> to vector<1x128xf32>
    %14 = arith.mulf %10, %10 : vector<64x128xf32>
    %cst_7 = arith.constant dense<0.000000e+00> : vector<128xf32>
    %15 = vector.multi_reduction <add>, %14, %cst_7 [0] : vector<64x128xf32> to vector<128xf32>
    %16 = vector.shape_cast %15 : vector<128xf32> to vector<1x128xf32>
    %17 = tpu.concatenate %13, %16 in 0 : vector<1x128xf32>, vector<1x128xf32> -> vector<2x128xf32>
    %c0_8 = arith.constant 0 : index
    %c0_9 = arith.constant 0 : index
    %18 = vector.load %arg4[%c0_8, %c0_9] : memref<2x128xf32, #tpu.memory_space<vmem>>, vector<2x128xf32>
    %19 = arith.addf %18, %17 : vector<2x128xf32>
    %c0_10 = arith.constant 0 : index
    %c0_11 = arith.constant 0 : index
    %20 = vector.load %arg4[%c0_10, %c0_11] : memref<2x128xf32, #tpu.memory_space<vmem>>, vector<2x128xf32>
    tpu.vector_store %arg4[%c0_10, %c0_11], %19 {strides = array<i32>} : memref<2x128xf32, #tpu.memory_space<vmem>>, vector<2x128xf32>,
    return
  }
  func.func @transform_0(%arg0: i32) -> (i32, i32) {
    %c0_i32 = arith.constant 0 : i32
    %c0_i32_0 = arith.constant 0 : i32
    %c0_i32_1 = arith.constant 0 : i32
    return %c0_i32, %c0_i32_0 : i32, i32
  }
  func.func @transform_1(%arg0: i32) -> (i32, i32) {
    %c0_i32 = arith.constant 0 : i32
    %c0_i32_0 = arith.constant 0 : i32
    return %arg0, %c0_i32 : i32, i32
  }
  func.func @transform_2(%arg0: i32) -> (i32, i32) {
    %c0_i32 = arith.constant 0 : i32
    %c0_i32_0 = arith.constant 0 : i32
    return %arg0, %c0_i32 : i32, i32
  }
  func.func @transform_3(%arg0: i32) -> (i32, i32) {
    %c0_i32 = arith.constant 0 : i32
    %c0_i32_0 = arith.constant 0 : i32
    %c0_i32_1 = arith.constant 0 : i32
    return %c0_i32, %c0_i32_0 : i32, i32
  }
}

module attributes {stable_mosaic.version = 11 : i64} {
  func.func @_fused_conv_loss_kernel(%arg0: i32, %arg1: i32, %arg2: i32, %arg3: memref<1x2x512x384xbf16, #tpu.memory_space<vmem>>, %arg4: memref<384x128xbf16, #tpu.memory_space<vmem>>, %arg5: memref<2x2x128xf32, #tpu.memory_space<vmem>>, %arg6: memref<1x1x8x128xf32, #tpu.memory_space<vmem>>) attributes {dimension_semantics = [#tpu.dimension_semantics<parallel>, #tpu.dimension_semantics<parallel>, #tpu.dimension_semantics<arbitrary>], iteration_bounds = array<i64: 2, 2, 1>, scalar_prefetch = 0 : i64, scratch_operands = 0 : i64, tpu.core_type = #tpu.core_type<tc>, window_params = [{transform_indices = @transform_0, window_bounds = array<i64: 1, 2, 512, 384>}, {pipeline_mode = #tpu.pipeline_mode<synchronous>, transform_indices = @transform_1, window_bounds = array<i64: 384, 128>}, {pipeline_mode = #tpu.pipeline_mode<synchronous>, transform_indices = @transform_2, window_bounds = array<i64: 2, 2, 128>}, {transform_indices = @transform_3, window_bounds = array<i64: 1, 1, 8, 128>}]} {
    %c0_i32 = arith.constant 0 : i32
    %0 = arith.cmpi eq, %arg2, %c0_i32 : i32
    %1 = arith.extui %0 : i1 to i32
    %c0_i32_0 = arith.constant 0 : i32
    %2 = arith.cmpi ne, %1, %c0_i32_0 : i32
    scf.if %2 {
      %cst_21 = arith.constant 0.000000e+00 : f32
      %40 = vector.broadcast %cst_21 : f32 to vector<1x1x8x128xf32>
      %c0_22 = arith.constant 0 : index
      %c0_23 = arith.constant 0 : index
      %c0_24 = arith.constant 0 : index
      %c0_25 = arith.constant 0 : index
      %41 = vector.load %arg6[%c0_22, %c0_23, %c0_24, %c0_25] : memref<1x1x8x128xf32, #tpu.memory_space<vmem>>, vector<1x1x8x128xf32>
      tpu.vector_store %arg6[%c0_22, %c0_23, %c0_24, %c0_25], %40 {strides = array<i32>} : memref<1x1x8x128xf32, #tpu.memory_space<vmem>>, vector<1x1x8x128xf32>,
    } else {
    }
    %c0 = arith.constant 0 : index
    %c0_1 = arith.constant 0 : index
    %c0_2 = arith.constant 0 : index
    %c0_3 = arith.constant 0 : index
    %3 = vector.load %arg3[%c0, %c0_1, %c0_2, %c0_3] : memref<1x2x512x384xbf16, #tpu.memory_space<vmem>>, vector<1x2x512x384xbf16>
    %4 = vector.shape_cast %3 : vector<1x2x512x384xbf16> to vector<1024x384xbf16>
    %c0_4 = arith.constant 0 : index
    %c0_5 = arith.constant 0 : index
    %5 = vector.load %arg4[%c0_4, %c0_5] : memref<384x128xbf16, #tpu.memory_space<vmem>>, vector<384x128xbf16>
    %cst = arith.constant dense<0.000000e+00> : vector<1024x128xf32>
    %6 = tpu.matmul %4, %5, %cst {dimension_numbers = #tpu.dot_dimension_numbers<[1], [0], [0], [1], [0, 0, 1, 1], [], []>} : vector<1024x384xbf16>, vector<384x128xbf16>, vector<1024x128xf32> -> vector<1024x128xf32>
    %7 = vector.shape_cast %6 : vector<1024x128xf32> to vector<2x512x128xf32>
    %c0_6 = arith.constant 0 : index
    %c0_7 = arith.constant 0 : index
    %c0_8 = arith.constant 0 : index
    %8 = vector.load %arg5[%c0_6, %c0_7, %c0_8] : memref<2x2x128xf32, #tpu.memory_space<vmem>>, vector<2x2x128xf32>
    %9 = vector.extract_strided_slice %8 {offsets = [0, 0, 0], sizes = [2, 1, 128], strides = [1, 1, 1]} : vector<2x2x128xf32> to vector<2x1x128xf32>
    %10 = vector.broadcast %9 : vector<2x1x128xf32> to vector<2x512x128xf32>
    %11 = arith.mulf %7, %10 : vector<2x512x128xf32>
    %12 = vector.extract_strided_slice %8 {offsets = [0, 1, 0], sizes = [2, 1, 128], strides = [1, 1, 1]} : vector<2x2x128xf32> to vector<2x1x128xf32>
    %13 = vector.broadcast %12 : vector<2x1x128xf32> to vector<2x512x128xf32>
    %14 = arith.addf %11, %13 : vector<2x512x128xf32>
    %cst_9 = arith.constant 0.000000e+00 : f32
    %15 = vector.broadcast %cst_9 : f32 to vector<2x512x128xf32>
    %16 = arith.maximumf %14, %15 : vector<2x512x128xf32>
    %17 = arith.mulf %16, %16 : vector<2x512x128xf32>
    %cst_10 = arith.constant dense<0.000000e+00> : vector<2x512xf32>
    %18 = vector.multi_reduction <add>, %17, %cst_10 [2] : vector<2x512x128xf32> to vector<2x512xf32>
    %19 = vector.shape_cast %18 : vector<2x512xf32> to vector<2x512x1xf32>
    %20 = math.sqrt %19 : vector<2x512x1xf32>
    %cst_11 = arith.constant 1.000000e-10 : f32
    %21 = vector.broadcast %cst_11 : f32 to vector<2x512x1xf32>
    %22 = arith.addf %20, %21 : vector<2x512x1xf32>
    %23 = tpu.reciprocal %22 {approx = true} : vector<2x512x1xf32> -> vector<2x512x1xf32>
    %24 = vector.broadcast %23 : vector<2x512x1xf32> to vector<2x512x128xf32>
    %25 = arith.mulf %16, %24 : vector<2x512x128xf32>
    %26 = vector.extract_strided_slice %25 {offsets = [0, 0, 0], sizes = [1, 512, 128], strides = [1, 1, 1]} : vector<2x512x128xf32> to vector<1x512x128xf32>
    %27 = vector.shape_cast %26 : vector<1x512x128xf32> to vector<512x128xf32>
    %28 = vector.extract_strided_slice %25 {offsets = [1, 0, 0], sizes = [1, 512, 128], strides = [1, 1, 1]} : vector<2x512x128xf32> to vector<1x512x128xf32>
    %29 = vector.shape_cast %28 : vector<1x512x128xf32> to vector<512x128xf32>
    %30 = arith.subf %27, %29 : vector<512x128xf32>
    %31 = arith.mulf %30, %30 : vector<512x128xf32>
    %cst_12 = arith.constant dense<0.000000e+00> : vector<128xf32>
    %32 = vector.multi_reduction <add>, %31, %cst_12 [0] : vector<512x128xf32> to vector<128xf32>
    %33 = vector.shape_cast %32 : vector<128xf32> to vector<1x128xf32>
    %c0_13 = arith.constant 0 : index
    %c0_14 = arith.constant 0 : index
    %c0_15 = arith.constant 0 : index
    %c0_16 = arith.constant 0 : index
    %34 = vector.load %arg6[%c0_13, %c0_14, %c0_15, %c0_16] : memref<1x1x8x128xf32, #tpu.memory_space<vmem>>, vector<1x1x8x128xf32>
    %35 = vector.shape_cast %33 : vector<1x128xf32> to vector<1x1x128xf32>
    %36 = vector.shape_cast %35 : vector<1x1x128xf32> to vector<1x1x1x128xf32>
    %37 = vector.broadcast %36 : vector<1x1x1x128xf32> to vector<1x1x8x128xf32>
    %38 = arith.addf %34, %37 : vector<1x1x8x128xf32>
    %c0_17 = arith.constant 0 : index
    %c0_18 = arith.constant 0 : index
    %c0_19 = arith.constant 0 : index
    %c0_20 = arith.constant 0 : index
    %39 = vector.load %arg6[%c0_17, %c0_18, %c0_19, %c0_20] : memref<1x1x8x128xf32, #tpu.memory_space<vmem>>, vector<1x1x8x128xf32>
    tpu.vector_store %arg6[%c0_17, %c0_18, %c0_19, %c0_20], %38 {strides = array<i32>} : memref<1x1x8x128xf32, #tpu.memory_space<vmem>>, vector<1x1x8x128xf32>,
    return
  }
  func.func @transform_0(%arg0: i32, %arg1: i32, %arg2: i32) -> (i32, i32, i32, i32) {
    %c1_i32 = arith.constant 1 : i32
    %0 = arith.muli %arg1, %c1_i32 : i32
    %1 = arith.addi %0, %arg2 : i32
    %c0_i32 = arith.constant 0 : i32
    %c0_i32_0 = arith.constant 0 : i32
    %c0_i32_1 = arith.constant 0 : i32
    return %arg0, %c0_i32, %1, %c0_i32_0 : i32, i32, i32, i32
  }
  func.func @transform_1(%arg0: i32, %arg1: i32, %arg2: i32) -> (i32, i32) {
    %c0_i32 = arith.constant 0 : i32
    %c0_i32_0 = arith.constant 0 : i32
    %c0_i32_1 = arith.constant 0 : i32
    return %c0_i32, %c0_i32_0 : i32, i32
  }
  func.func @transform_2(%arg0: i32, %arg1: i32, %arg2: i32) -> (i32, i32, i32) {
    %c0_i32 = arith.constant 0 : i32
    %c0_i32_0 = arith.constant 0 : i32
    %c0_i32_1 = arith.constant 0 : i32
    %c0_i32_2 = arith.constant 0 : i32
    return %c0_i32, %c0_i32_0, %c0_i32_1 : i32, i32, i32
  }
  func.func @transform_3(%arg0: i32, %arg1: i32, %arg2: i32) -> (i32, i32, i32, i32) {
    %c0_i32 = arith.constant 0 : i32
    %c0_i32_0 = arith.constant 0 : i32
    %c0_i32_1 = arith.constant 0 : i32
    return %arg0, %arg1, %c0_i32, %c0_i32_0 : i32, i32, i32, i32
  }
}

</mosaic_0001>

<llo_original>
// kernel: medicalnet_perceptual_similarity.3
$region0: #{medicalnet_perceptual_similarity.3}
  #allocation0 [shape = 'u32[]', space=smem, size = 0x4, offset = 0x4, fixed_abs, tag = 'smem constant byte address 0x4 - core index']
  #allocation1 [shape = 'u32[144,128]{1,0:T(1,128)}', space=vmem, size = 0x12000, scoped, tag = 'internal scratch']
  %s0 = inlined_call_operand.vmem [shape: f32[64,128], index: 0, kind: input, shape index: {}]
  %s1 = inlined_call_operand.vmem [shape: f32[64,128], index: 1, kind: input, shape index: {}]
  %s2 = inlined_call_operand.vmem [shape: f32[2,128], index: 2, kind: output, shape index: {}]
  %s3 = sld [smem:[#allocation0]]
  $region22: #{medicalnet_perceptual_similarity.3} parent=0
    _
  %s5 = ssub.s32 1, %s3
  %s6 = scalar_select 0, %s5, %s3
  // Predicated region
  $region2: #{medicalnet_perceptual_similarity.3} parent=0 // pred_check
    _
  $region3: #{medicalnet_perceptual_similarity.3} parent=0 // pred_check_branch
    %8 = sbr.rel (0) target = $region5
  $region4: #{medicalnet_perceptual_similarity.3} parent=0 // pred_region
    _
  $region5: #{medicalnet_perceptual_similarity.3} parent=0 // pred_fallthru
    _
  // Predicated region
  $region6: #{medicalnet_perceptual_similarity.3} parent=0 // pred_check
    _
  $region7: #{medicalnet_perceptual_similarity.3} parent=0 // pred_check_branch
    %10 = sbr.rel (0) target = $region9
  $region8: #{medicalnet_perceptual_similarity.3} parent=0 // pred_region
    _
  $region9: #{medicalnet_perceptual_similarity.3} parent=0 // pred_fallthru
    _
  %p11 = scmp.eq.s32.totalorder 0, 0
  // Predicated region
  $region10: #{medicalnet_perceptual_similarity.3} parent=0 // pred_check
    %p12 = pneg %p11
  $region11: #{medicalnet_perceptual_similarity.3} parent=0 // pred_check_branch
    %14 = sbr.rel (%p12) target = $region13
  $region12: #{medicalnet_perceptual_similarity.3} parent=0 // pred_region
    %15 = vst [vmem:[%s2] sm:$0x3] 0.0
  $region13: #{medicalnet_perceptual_similarity.3} parent=0 // pred_fallthru
    _
  %v16 = vld [vmem:[%s0] sm:$0xff]
  %v17 = vld [vmem:[%s0 + $0x8] sm:$0xff]
  %v18 = vld [vmem:[%s0 + $0x10] sm:$0xff]
  %v19 = vld [vmem:[%s0 + $0x18] sm:$0xff]
  %v20 = vld [vmem:[%s0 + $0x20] sm:$0xff]
  %v21 = vld [vmem:[%s0 + $0x28] sm:$0xff]
  %v22 = vld [vmem:[%s0 + $0x30] sm:$0xff]
  %v23 = vld [vmem:[%s0 + $0x38] sm:$0xff]
  %v24 = vadd.f32 %v16, %v17
  %v25 = vadd.f32 %v24, %v18
  %v26 = vadd.f32 %v25, %v19
  %v27 = vadd.f32 %v26, %v20
  %v28 = vadd.f32 %v27, %v21
  %v29 = vadd.f32 %v28, %v22
  %v30 = vadd.f32 %v29, %v23
  %v31 = vrot.slane %v30, 4
  %v32 = vadd.f32 %v30, %v31
  %v33 = vrot.slane %v32, 2
  %v34 = vadd.f32 %v32, %v33
  %v35 = vrot.slane %v34, 1
  %v36 = vadd.f32 %v34, %v35
  %v37 = vld [vmem:[%s1] sm:$0xff]
  %v38 = vld [vmem:[%s1 + $0x8] sm:$0xff]
  %v39 = vld [vmem:[%s1 + $0x10] sm:$0xff]
  %v40 = vld [vmem:[%s1 + $0x18] sm:$0xff]
  %v41 = vld [vmem:[%s1 + $0x20] sm:$0xff]
  %v42 = vld [vmem:[%s1 + $0x28] sm:$0xff]
  %v43 = vld [vmem:[%s1 + $0x30] sm:$0xff]
  %v44 = vld [vmem:[%s1 + $0x38] sm:$0xff]
  %v45 = vadd.f32 %v37, %v38
  %v46 = vadd.f32 %v45, %v39
  %v47 = vadd.f32 %v46, %v40
  %v48 = vadd.f32 %v47, %v41
  %v49 = vadd.f32 %v48, %v42
  %v50 = vadd.f32 %v49, %v43
  %v51 = vadd.f32 %v50, %v44
  %v52 = vrot.slane %v51, 4
  %v53 = vadd.f32 %v51, %v52
  %v54 = vrot.slane %v53, 2
  %v55 = vadd.f32 %v53, %v54
  %v56 = vrot.slane %v55, 1
  %v57 = vadd.f32 %v55, %v56
  %vm58 = vcmask 1040384
  %v59 = vsel %vm58, %v36, %v57
  %v60 = vld [vmem:[%s2] sm:$0x3]
  %v61 = vadd.f32 %v60, %v59
  %62 = vst [vmem:[%s2] sm:$0x3] %v61
  // Predicated region
  $region14: #{medicalnet_perceptual_similarity.3} parent=0 // pred_check
    _
  $region15: #{medicalnet_perceptual_similarity.3} parent=0 // pred_check_branch
    %64 = sbr.rel (0) target = $region17
  $region16: #{medicalnet_perceptual_similarity.3} parent=0 // pred_region
    _
  $region17: #{medicalnet_perceptual_similarity.3} parent=0 // pred_fallthru
    _
  // Predicated region
  $region18: #{medicalnet_perceptual_similarity.3} parent=0 // pred_check
    _
  $region19: #{medicalnet_perceptual_similarity.3} parent=0 // pred_check_branch
    %66 = sbr.rel (0) target = $region21
  $region20: #{medicalnet_perceptual_similarity.3} parent=0 // pred_region
    _
  $region21: #{medicalnet_perceptual_similarity.3} parent=0 // pred_fallthru
    _

// kernel: medicalnet_perceptual_similarity.4
$region0: #{medicalnet_perceptual_similarity.4}
  #allocation0 [shape = 'u32[]', space=smem, size = 0x4, offset = 0x4, fixed_abs, tag = 'smem constant byte address 0x4 - core index']
  #allocation1 [shape = 'u32[144,128]{1,0:T(1,128)}', space=vmem, size = 0x12000, scoped, tag = 'internal scratch']
  %s0 = inlined_call_operand.vmem [shape: f32[2,128], index: 0, kind: input, shape index: {}]
  %s1 = inlined_call_operand.vmem [shape: f32[64,128], index: 1, kind: input, shape index: {}]
  %s2 = inlined_call_operand.vmem [shape: f32[64,128], index: 2, kind: input, shape index: {}]
  %s3 = inlined_call_operand.vmem [shape: f32[2,128], index: 3, kind: output, shape index: {}]
  %s4 = sld [smem:[#allocation0]]
  $region26: #{medicalnet_perceptual_similarity.4} parent=0
    _
  %s6 = ssub.s32 1, %s4
  %s7 = scalar_select 0, %s6, %s4
  // Predicated region
  $region2: #{medicalnet_perceptual_similarity.4} parent=0 // pred_check
    _
  $region3: #{medicalnet_perceptual_similarity.4} parent=0 // pred_check_branch
    %9 = sbr.rel (0) target = $region5
  $region4: #{medicalnet_perceptual_similarity.4} parent=0 // pred_region
    _
  $region5: #{medicalnet_perceptual_similarity.4} parent=0 // pred_fallthru
    _
  // Predicated region
  $region6: #{medicalnet_perceptual_similarity.4} parent=0 // pred_check
    _
  $region7: #{medicalnet_perceptual_similarity.4} parent=0 // pred_check_branch
    %11 = sbr.rel (0) target = $region9
  $region8: #{medicalnet_perceptual_similarity.4} parent=0 // pred_region
    _
  $region9: #{medicalnet_perceptual_similarity.4} parent=0 // pred_fallthru
    _
  // Predicated region
  $region10: #{medicalnet_perceptual_similarity.4} parent=0 // pred_check
    _
  $region11: #{medicalnet_perceptual_similarity.4} parent=0 // pred_check_branch
    %13 = sbr.rel (0) target = $region13
  $region12: #{medicalnet_perceptual_similarity.4} parent=0 // pred_region
    _
  $region13: #{medicalnet_perceptual_similarity.4} parent=0 // pred_fallthru
    _
  %p14 = scmp.eq.s32.totalorder 0, 0
  // Predicated region
  $region14: #{medicalnet_perceptual_similarity.4} parent=0 // pred_check
    %p15 = pneg %p14
  $region15: #{medicalnet_perceptual_similarity.4} parent=0 // pred_check_branch
    %17 = sbr.rel (%p15) target = $region17
  $region16: #{medicalnet_perceptual_similarity.4} parent=0 // pred_region
    %18 = vst [vmem:[%s3] sm:$0x3] 0.0
  $region17: #{medicalnet_perceptual_similarity.4} parent=0 // pred_fallthru
    _
  %v19 = vld [vmem:[%s1] sm:$0xff]
  %v20 = vld [vmem:[%s1 + $0x8] sm:$0xff]
  %v21 = vld [vmem:[%s1 + $0x10] sm:$0xff]
  %v22 = vld [vmem:[%s1 + $0x18] sm:$0xff]
  %v23 = vld [vmem:[%s1 + $0x20] sm:$0xff]
  %v24 = vld [vmem:[%s1 + $0x28] sm:$0xff]
  %v25 = vld [vmem:[%s1 + $0x30] sm:$0xff]
  %v26 = vld [vmem:[%s1 + $0x38] sm:$0xff]
  %v27 = vld [vmem:[%s0] sm:$0x1]
  %v28 = vlaneseq
  %v29 = vshrl.u32 %v28, 7
  %v30 = vsub.s32 0, %v29
  %v31 = vrot.slane %v27, %v30
  %v32 = vsub.f32 %v19, %v31
  %v33 = vsub.f32 %v20, %v31
  %v34 = vsub.f32 %v21, %v31
  %v35 = vsub.f32 %v22, %v31
  %v36 = vsub.f32 %v23, %v31
  %v37 = vsub.f32 %v24, %v31
  %v38 = vsub.f32 %v25, %v31
  %v39 = vsub.f32 %v26, %v31
  %v40 = vld [vmem:[%s2] sm:$0xff]
  %v41 = vld [vmem:[%s2 + $0x8] sm:$0xff]
  %v42 = vld [vmem:[%s2 + $0x10] sm:$0xff]
  %v43 = vld [vmem:[%s2 + $0x18] sm:$0xff]
  %v44 = vld [vmem:[%s2 + $0x20] sm:$0xff]
  %v45 = vld [vmem:[%s2 + $0x28] sm:$0xff]
  %v46 = vld [vmem:[%s2 + $0x30] sm:$0xff]
  %v47 = vld [vmem:[%s2 + $0x38] sm:$0xff]
  %v48 = vld [vmem:[%s0 + $0x1] sm:$0x1]
  %v49 = vlaneseq
  %v50 = vshrl.u32 %v49, 7
  %v51 = vsub.s32 0, %v50
  %v52 = vrot.slane %v48, %v51
  %v53 = vsub.f32 %v40, %v52
  %v54 = vsub.f32 %v41, %v52
  %v55 = vsub.f32 %v42, %v52
  %v56 = vsub.f32 %v43, %v52
  %v57 = vsub.f32 %v44, %v52
  %v58 = vsub.f32 %v45, %v52
  %v59 = vsub.f32 %v46, %v52
  %v60 = vsub.f32 %v47, %v52
  %v61 = vmul.f32 %v32, %v32
  %v62 = vmul.f32 %v33, %v33
  %v63 = vmul.f32 %v34, %v34
  %v64 = vmul.f32 %v35, %v35
  %v65 = vmul.f32 %v36, %v36
  %v66 = vmul.f32 %v37, %v37
  %v67 = vmul.f32 %v38, %v38
  %v68 = vmul.f32 %v39, %v39
  %v69 = vadd.f32 %v61, %v62
  %v70 = vadd.f32 %v69, %v63
  %v71 = vadd.f32 %v70, %v64
  %v72 = vadd.f32 %v71, %v65
  %v73 = vadd.f32 %v72, %v66
  %v74 = vadd.f32 %v73, %v67
  %v75 = vadd.f32 %v74, %v68
  %v76 = vrot.slane %v75, 4
  %v77 = vadd.f32 %v75, %v76
  %v78 = vrot.slane %v77, 2
  %v79 = vadd.f32 %v77, %v78
  %v80 = vrot.slane %v79, 1
  %v81 = vadd.f32 %v79, %v80
  %v82 = vmul.f32 %v53, %v53
  %v83 = vmul.f32 %v54, %v54
  %v84 = vmul.f32 %v55, %v55
  %v85 = vmul.f32 %v56, %v56
  %v86 = vmul.f32 %v57, %v57
  %v87 = vmul.f32 %v58, %v58
  %v88 = vmul.f32 %v59, %v59
  %v89 = vmul.f32 %v60, %v60
  %v90 = vadd.f32 %v82, %v83
  %v91 = vadd.f32 %v90, %v84
  %v92 = vadd.f32 %v91, %v85
  %v93 = vadd.f32 %v92, %v86
  %v94 = vadd.f32 %v93, %v87
  %v95 = vadd.f32 %v94, %v88
  %v96 = vadd.f32 %v95, %v89
  %v97 = vrot.slane %v96, 4
  %v98 = vadd.f32 %v96, %v97
  %v99 = vrot.slane %v98, 2
  %v100 = vadd.f32 %v98, %v99
  %v101 = vrot.slane %v100, 1
  %v102 = vadd.f32 %v100, %v101
  %vm103 = vcmask 1040384
  %v104 = vsel %vm103, %v81, %v102
  %v105 = vld [vmem:[%s3] sm:$0x3]
  %v106 = vadd.f32 %v105, %v104
  %107 = vst [vmem:[%s3] sm:$0x3] %v106
  // Predicated region
  $region18: #{medicalnet_perceptual_similarity.4} parent=0 // pred_check
    _
  $region19: #{medicalnet_perceptual_similarity.4} parent=0 // pred_check_branch
    %109 = sbr.rel (0) target = $region21
  $region20: #{medicalnet_perceptual_similarity.4} parent=0 // pred_region
    _
  $region21: #{medicalnet_perceptual_similarity.4} parent=0 // pred_fallthru
    _
  // Predicated region
  $region22: #{medicalnet_perceptual_similarity.4} parent=0 // pred_check
    _
  $region23: #{medicalnet_perceptual_similarity.4} parent=0 // pred_check_branch
    %111 = sbr.rel (0) target = $region25
  $region24: #{medicalnet_perceptual_similarity.4} parent=0 // pred_region
    _
  $region25: #{medicalnet_perceptual_similarity.4} parent=0 // pred_fallthru
    _

// kernel: medicalnet_perceptual_similarity.5
$region0: #{medicalnet_perceptual_similarity.5}
  #allocation0 [shape = 'u32[]', space=smem, size = 0x4, offset = 0x4, fixed_abs, tag = 'smem constant byte address 0x4 - core index']
  #allocation1 [shape = 'u32[144,128]{1,0:T(1,128)}', space=vmem, size = 0x12000, scoped, tag = 'internal scratch']
  %s0 = inlined_call_operand.vmem [shape: bf16[2,2,1024,384], index: 0, kind: input, shape index: {}]
  %s1 = inlined_call_operand.vmem [shape: bf16[384,128], index: 1, kind: input, shape index: {}]
  %s2 = inlined_call_operand.vmem [shape: f32[2,2,128], index: 2, kind: input, shape index: {}]
  %s3 = inlined_call_operand.vmem [shape: f32[2,2,8,128], index: 3, kind: output, shape index: {}]
  %s4 = sld [smem:[#allocation0]]
  $region75: #{medicalnet_perceptual_similarity.5} parent=0
    _
  %s6 = ssub.s32 1, %s4
  %s7 = scalar_select 0, %s6, %s4
  $region1: #{medicalnet_perceptual_similarity.5} parent=0
    #allocation2 [shape = 'u8[1572864]{0}', space=vmem, size = 0x180000, scoped, tag = 'input window, operand 0']
    loop: start=0, step=1, limit=6
    $region2: #{medicalnet_perceptual_similarity.5} parent=1 // loop_pre_header
      _
    $region3: #{medicalnet_perceptual_similarity.5} parent=1 // loop_header
      %s9 = sphi 0, %s13
      %p10 = scmp.ge.s32.totalorder %s9, 6
      %s16 = sphi 0, %s35
      %s17 = sphi 0, %s31
      %s18 = sphi 0, %s27
      %s19 = sphi 0, %s16
      %s20 = sphi 0, %s17
      %s21 = sphi 0, %s18
      %s22 = sphi 0, %s19
      %s23 = sphi 0, %s20
      %s24 = sphi 0, %s21
      %s42 = sphi 0, %s44
      %s45 = sphi 0, %s42
      %s46 = sphi 0, %s45
      %s62 = sphi 0, %s46
      %s66 = sphi 0, %s66
      %s68 = sphi 0, %s66
      %s69 = sphi 0, %s68
      %s83 = sphi 0, %s69
      %s87 = sphi 0, %s87
      %s89 = sphi 0, %s87
      %s90 = sphi 0, %s89
      %s104 = sphi 0, %s90
      %s112 = sphi 0, %s114
      %s115 = sphi 0, %s112
      %s116 = sphi 0, %s115
      %s132 = sphi 0, %s116
    $region4: #{medicalnet_perceptual_similarity.5} parent=1 // loop_header_branch
      %12 = sbr.rel (%p10) target = $region8
    $region5: #{medicalnet_perceptual_similarity.5} parent=1 // loop_body
      %s14 = ssub.s32 %s9, 1
      %s15 = ssub.s32 %s9, 2
      %s25 = sadd.s32 1, %s18
      %p26 = scmp.ge.s32.totalorder %s25, 1
      %s27 = scalar_select %p26, 0, %s25
      %s28 = sadd.s32 1, %s17
      %s29 = scalar_select %p26, %s28, %s17
      %p30 = scmp.ge.s32.totalorder %s29, 2
      %s31 = scalar_select %p30, 0, %s29
      %s32 = sadd.s32 1, %s16
      %s33 = scalar_select %p30, %s32, %s16
      %p34 = scmp.ge.s32.totalorder %s33, 2
      %s35 = scalar_select %p34, 0, %s33
      %s36 = sadd.s32 %s17, %s18
      %s37 = sadd.s32 %s31, %s27
      %s38 = ssub.s32 %s16, %s35
      %s39 = ssub.s32 %s36, %s37
      %s40 = sor.u32 %s38, %s39
      %p41 = scmp.eq.s32.totalorder %s40, 0
      %s43 = sadd.s32 %s42, 1
      %s44 = scalar_select %p41, %s42, %s43
      %p47 = pneg %p41
      %p48 = scmp.eq.s32.totalorder %s9, 3
      %p49 = por %p47, %p48
      %p50 = scmp.ne.s32.totalorder %s42, %s45
      %p51 = scmp.eq.s32.totalorder %s9, 0
      %p52 = por %p50, %p51
      %p53 = scmp.ne.s32.totalorder %s42, %s45
      %p54 = scmp.eq.s32.totalorder %s14, 3
      %p55 = por %p53, %p54
      %p56 = scmp.ne.s32.totalorder %s45, %s46
      %p57 = scmp.eq.s32.totalorder %s14, 0
      %p58 = por %p56, %p57
      %p59 = scmp.ne.s32.totalorder %s45, %s46
      %p60 = scmp.eq.s32.totalorder %s15, 3
      %p61 = por %p59, %p60
      %p63 = scmp.ne.s32.totalorder %s46, %s62
      %p64 = scmp.eq.s32.totalorder %s15, 0
      %p65 = por %p63, %p64
      %s67 = sadd.s32 %s66, 1
      %p70 = scmp.eq.s32.totalorder %s9, 3
      %p71 = scmp.ne.s32.totalorder %s66, %s68
      %p72 = scmp.eq.s32.totalorder %s9, 0
      %p73 = por %p71, %p72
      %p74 = scmp.ne.s32.totalorder %s66, %s68
      %p75 = scmp.eq.s32.totalorder %s14, 3
      %p76 = por %p74, %p75
      %p77 = scmp.ne.s32.totalorder %s68, %s69
      %p78 = scmp.eq.s32.totalorder %s14, 0
      %p79 = por %p77, %p78
      %p80 = scmp.ne.s32.totalorder %s68, %s69
      %p81 = scmp.eq.s32.totalorder %s15, 3
      %p82 = por %p80, %p81
      %p84 = scmp.ne.s32.totalorder %s69, %s83
      %p85 = scmp.eq.s32.totalorder %s15, 0
      %p86 = por %p84, %p85
      %s88 = sadd.s32 %s87, 1
      %p91 = scmp.eq.s32.totalorder %s9, 3
      %p92 = scmp.ne.s32.totalorder %s87, %s89
      %p93 = scmp.eq.s32.totalorder %s9, 0
      %p94 = por %p92, %p93
      %p95 = scmp.ne.s32.totalorder %s87, %s89
      %p96 = scmp.eq.s32.totalorder %s14, 3
      %p97 = por %p95, %p96
      %p98 = scmp.ne.s32.totalorder %s89, %s90
      %p99 = scmp.eq.s32.totalorder %s14, 0
      %p100 = por %p98, %p99
      %p101 = scmp.ne.s32.totalorder %s89, %s90
      %p102 = scmp.eq.s32.totalorder %s15, 3
      %p103 = por %p101, %p102
      %p105 = scmp.ne.s32.totalorder %s90, %s104
      %p106 = scmp.eq.s32.totalorder %s15, 0
      %p107 = por %p105, %p106
      %s108 = ssub.s32 %s16, %s35
      %s109 = ssub.s32 %s17, %s31
      %s110 = sor.u32 %s108, %s109
      %p111 = scmp.eq.s32.totalorder %s110, 0
      %s113 = sadd.s32 %s112, 1
      %s114 = scalar_select %p111, %s112, %s113
      %p117 = pneg %p111
      %p118 = scmp.eq.s32.totalorder %s9, 3
      %p119 = por %p117, %p118
      %p120 = scmp.ne.s32.totalorder %s112, %s115
      %p121 = scmp.eq.s32.totalorder %s9, 0
      %p122 = por %p120, %p121
      %p123 = scmp.ne.s32.totalorder %s112, %s115
      %p124 = scmp.eq.s32.totalorder %s14, 3
      %p125 = por %p123, %p124
      %p126 = scmp.ne.s32.totalorder %s115, %s116
      %p127 = scmp.eq.s32.totalorder %s14, 0
      %p128 = por %p126, %p127
      %p129 = scmp.ne.s32.totalorder %s115, %s116
      %p130 = scmp.eq.s32.totalorder %s15, 3
      %p131 = por %p129, %p130
      %p133 = scmp.ne.s32.totalorder %s116, %s132
      %p134 = scmp.eq.s32.totalorder %s15, 0
      %p135 = por %p133, %p134
      %p136 = scmp.le.s32.totalorder 1, %s9
      %p137 = scmp.lt.s32.totalorder %s9, 5
      %p138 = pnand %p136, %p137
      %p139 = pneg %p138
      // Predicated region
      $region9: #{medicalnet_perceptual_similarity.5} parent=5 // pred_check
        _
      $region10: #{medicalnet_perceptual_similarity.5} parent=5 // pred_check_branch
        %141 = sbr.rel (%p138) target = $region12
      $region11: #{medicalnet_perceptual_similarity.5} parent=5 // pred_region
        %s142 = ssub.s32 %s9, 1
        // Predicated region
        $region13: #{medicalnet_perceptual_similarity.5} parent=11 // pred_check
          %p143 = pneg %p79
        $region14: #{medicalnet_perceptual_similarity.5} parent=11 // pred_check_branch
          %145 = sbr.rel (%p143) target = $region16
        $region15: #{medicalnet_perceptual_similarity.5} parent=11 // pred_region
          _
        $region16: #{medicalnet_perceptual_similarity.5} parent=11 // pred_fallthru
          _
        // Predicated region
        $region17: #{medicalnet_perceptual_similarity.5} parent=11 // pred_check
          %p146 = pneg %p100
        $region18: #{medicalnet_perceptual_similarity.5} parent=11 // pred_check_branch
          %148 = sbr.rel (%p146) target = $region20
        $region19: #{medicalnet_perceptual_similarity.5} parent=11 // pred_region
          _
        $region20: #{medicalnet_perceptual_similarity.5} parent=11 // pred_fallthru
          _
      $region12: #{medicalnet_perceptual_similarity.5} parent=5 // pred_fallthru
        _
      %p149 = scmp.lt.s32.totalorder %s9, 4
      // Predicated region
      $region21: #{medicalnet_perceptual_similarity.5} parent=5 // pred_check
        %p150 = pneg %p149
      $region22: #{medicalnet_perceptual_similarity.5} parent=5 // pred_check_branch
        %152 = sbr.rel (%p150) target = $region24
      $region23: #{medicalnet_perceptual_similarity.5} parent=5 // pred_region
        // Predicated region
        $region25: #{medicalnet_perceptual_similarity.5} parent=23 // pred_check
          %p153 = pneg %p52
        $region26: #{medicalnet_perceptual_similarity.5} parent=23 // pred_check_branch
          %155 = sbr.rel (%p153) target = $region28
        $region27: #{medicalnet_perceptual_similarity.5} parent=23 // pred_region
          %s156 = sand.u32 %s42, 1
          %s157 = sand.u32 %s42, 1
          %s158 = smul.addr %s157, 1536
          %s159 = scalar_lea.vmem [#allocation2], %s158
          %s160 = sadd.s32 %s17, %s18
          %s161 = smul.u32 64, %s160
          %s162 = smul.addr %s161, 3
          %s163 = smul.addr %s16, 768
          %s164 = sadd.s32 %s162, %s163
          %s165 = smul.addr %s164, 4
          %s166 = scalar_lea.vmem %s0, %s165
          // Predicated region
          $region29: #{medicalnet_perceptual_similarity.5} parent=27 // pred_check
            _
          $region30: #{medicalnet_perceptual_similarity.5} parent=27 // pred_check_branch
            %168 = sbr.rel (0) target = $region32
          $region31: #{medicalnet_perceptual_similarity.5} parent=27 // pred_region
            // Predicated region
            $region33: #{medicalnet_perceptual_similarity.5} parent=31 // pred_check
              _
            $region34: #{medicalnet_perceptual_similarity.5} parent=31 // pred_check_branch
              %170 = sbr.rel (0) target = $region36
            $region35: #{medicalnet_perceptual_similarity.5} parent=31 // pred_region
              %s171 = scalar_lea.vmem %s166, 8
              %s172 = scalar_lea.vmem %s159, 8 [#allocation2]
              loop: start=0, step=1, limit=1
              $region37: #{medicalnet_perceptual_similarity.5} parent=35 // loop_pre_header
                _
              $region38: #{medicalnet_perceptual_similarity.5} parent=35 // loop_header
                %s174 = sphi 0, %s178
                %p175 = scmp.ge.s32.totalorder %s174, 1
                %s179 = sphi %s166, %s166
                %s180 = sphi %s159, %s159
              $region39: #{medicalnet_perceptual_similarity.5} parent=35 // loop_header_branch
                %177 = sbr.rel (%p175) target = $region43
              $region40: #{medicalnet_perceptual_similarity.5} parent=35 // loop_body
                %v181 = vld [vmem:[%s179] sm:$0xff]
                %182 = vst [vmem:[%s180] sm:$0xff] %v181
                %v183 = vld [vmem:[%s179 + $0xc] sm:$0xff]
                %184 = vst [vmem:[%s180 + $0xc] sm:$0xff] %v183
                %v185 = vld [vmem:[%s179 + $0x18] sm:$0xff]
                %186 = vst [vmem:[%s180 + $0x18] sm:$0xff] %v185
                %v187 = vld [vmem:[%s179 + $0x24] sm:$0xff]
                %188 = vst [vmem:[%s180 + $0x24] sm:$0xff] %v187
                %v189 = vld [vmem:[%s179 + $0x30] sm:$0xff]
                %190 = vst [vmem:[%s180 + $0x30] sm:$0xff] %v189
                %v191 = vld [vmem:[%s179 + $0x3c] sm:$0xff]
                %192 = vst [vmem:[%s180 + $0x3c] sm:$0xff] %v191
                %v193 = vld [vmem:[%s179 + $0x48] sm:$0xff]
                %194 = vst [vmem:[%s180 + $0x48] sm:$0xff] %v193
                %v195 = vld [vmem:[%s179 + $0x54] sm:$0xff]
                %196 = vst [vmem:[%s180 + $0x54] sm:$0xff] %v195
                %v197 = vld [vmem:[%s179 + $0x60] sm:$0xff]
                %198 = vst [vmem:[%s180 + $0x60] sm:$0xff] %v197
                %v199 = vld [vmem:[%s179 + $0x6c] sm:$0xff]
                %200 = vst [vmem:[%s180 + $0x6c] sm:$0xff] %v199
                %v201 = vld [vmem:[%s179 + $0x78] sm:$0xff]
                %202 = vst [vmem:[%s180 + $0x78] sm:$0xff] %v201
                %v203 = vld [vmem:[%s179 + $0x84] sm:$0xff]
                %204 = vst [vmem:[%s180 + $0x84] sm:$0xff] %v203
                %v205 = vld [vmem:[%s179 + $0x90] sm:$0xff]
                %206 = vst [vmem:[%s180 + $0x90] sm:$0xff] %v205
                %v207 = vld [vmem:[%s179 + $0x9c] sm:$0xff]
                %208 = vst [vmem:[%s180 + $0x9c] sm:$0xff] %v207
                %v209 = vld [vmem:[%s179 + $0xa8] sm:$0xff]
                %210 = vst [vmem:[%s180 + $0xa8] sm:$0xff] %v209
                %v211 = vld [vmem:[%s179 + $0xb4] sm:$0xff]
                %212 = vst [vmem:[%s180 + $0xb4] sm:$0xff] %v211
                %v213 = vld [vmem:[%s179 + $0xc0] sm:$0xff]
                %214 = vst [vmem:[%s180 + $0xc0] sm:$0xff] %v213
                %v215 = vld [vmem:[%s179 + $0xcc] sm:$0xff]
                %216 = vst [vmem:[%s180 + $0xcc] sm:$0xff] %v215
                %v217 = vld [vmem:[%s179 + $0xd8] sm:$0xff]
                %218 = vst [vmem:[%s180 + $0xd8] sm:$0xff] %v217
                %v219 = vld [vmem:[%s179 + $0xe4] sm:$0xff]
                %220 = vst [vmem:[%s180 + $0xe4] sm:$0xff] %v219
                %v221 = vld [vmem:[%s179 + $0xf0] sm:$0xff]
                %222 = vst [vmem:[%s180 + $0xf0] sm:$0xff] %v221
                %v223 = vld [vmem:[%s179 + $0xfc] sm:$0xff]
                %224 = vst [vmem:[%s180 + $0xfc] sm:$0xff] %v223
                %v225 = vld [vmem:[%s179 + $0x108] sm:$0xff]
                %226 = vst [vmem:[%s180 + $0x108] sm:$0xff] %v225
                %v227 = vld [vmem:[%s179 + $0x114] sm:$0xff]
                %228 = vst [vmem:[%s180 + $0x114] sm:$0xff] %v227
                %v229 = vld [vmem:[%s179 + $0x120] sm:$0xff]
                %230 = vst [vmem:[%s180 + $0x120] sm:$0xff] %v229
                %v231 = vld [vmem:[%s179 + $0x12c] sm:$0xff]
                %232 = vst [vmem:[%s180 + $0x12c] sm:$0xff] %v231
                %v233 = vld [vmem:[%s179 + $0x138] sm:$0xff]
                %234 = vst [vmem:[%s180 + $0x138] sm:$0xff] %v233
                %v235 = vld [vmem:[%s179 + $0x144] sm:$0xff]
                %236 = vst [vmem:[%s180 + $0x144] sm:$0xff] %v235
                %v237 = vld [vmem:[%s179 + $0x150] sm:$0xff]
                %238 = vst [vmem:[%s180 + $0x150] sm:$0xff] %v237
                %v239 = vld [vmem:[%s179 + $0x15c] sm:$0xff]
                %240 = vst [vmem:[%s180 + $0x15c] sm:$0xff] %v239
                %v241 = vld [vmem:[%s179 + $0x168] sm:$0xff]
                %242 = vst [vmem:[%s180 + $0x168] sm:$0xff] %v241
                %v243 = vld [vmem:[%s179 + $0x174] sm:$0xff]
                %244 = vst [vmem:[%s180 + $0x174] sm:$0xff] %v243
                %v245 = vld [vmem:[%s179 + $0x180] sm:$0xff]
                %246 = vst [vmem:[%s180 + $0x180] sm:$0xff] %v245
                %v247 = vld [vmem:[%s179 + $0x18c] sm:$0xff]
                %248 = vst [vmem:[%s180 + $0x18c] sm:$0xff] %v247
                %v249 = vld [vmem:[%s179 + $0x198] sm:$0xff]
                %250 = vst [vmem:[%s180 + $0x198] sm:$0xff] %v249
                %v251 = vld [vmem:[%s179 + $0x1a4] sm:$0xff]
                %252 = vst [vmem:[%s180 + $0x1a4] sm:$0xff] %v251
                %v253 = vld [vmem:[%s179 + $0x1b0] sm:$0xff]
                %254 = vst [vmem:[%s180 + $0x1b0] sm:$0xff] %v253
                %v255 = vld [vmem:[%s179 + $0x1bc] sm:$0xff]
                %256 = vst [vmem:[%s180 + $0x1bc] sm:$0xff] %v255
                %v257 = vld [vmem:[%s179 + $0x1c8] sm:$0xff]
                %258 = vst [vmem:[%s180 + $0x1c8] sm:$0xff] %v257
                %v259 = vld [vmem:[%s179 + $0x1d4] sm:$0xff]
                %260 = vst [vmem:[%s180 + $0x1d4] sm:$0xff] %v259
                %v261 = vld [vmem:[%s179 + $0x1e0] sm:$0xff]
                %262 = vst [vmem:[%s180 + $0x1e0] sm:$0xff] %v261
                %v263 = vld [vmem:[%s179 + $0x1ec] sm:$0xff]
                %264 = vst [vmem:[%s180 + $0x1ec] sm:$0xff] %v263
                %v265 = vld [vmem:[%s179 + $0x1f8] sm:$0xff]
                %266 = vst [vmem:[%s180 + $0x1f8] sm:$0xff] %v265
                %v267 = vld [vmem:[%s179 + $0x204] sm:$0xff]
                %268 = vst [vmem:[%s180 + $0x204] sm:$0xff] %v267
                %v269 = vld [vmem:[%s179 + $0x210] sm:$0xff]
                %270 = vst [vmem:[%s180 + $0x210] sm:$0xff] %v269
                %v271 = vld [vmem:[%s179 + $0x21c] sm:$0xff]
                %272 = vst [vmem:[%s180 + $0x21c] sm:$0xff] %v271
                %v273 = vld [vmem:[%s179 + $0x228] sm:$0xff]
                %274 = vst [vmem:[%s180 + $0x228] sm:$0xff] %v273
                %v275 = vld [vmem:[%s179 + $0x234] sm:$0xff]
                %276 = vst [vmem:[%s180 + $0x234] sm:$0xff] %v275
                %v277 = vld [vmem:[%s179 + $0x240] sm:$0xff]
                %278 = vst [vmem:[%s180 + $0x240] sm:$0xff] %v277
                %v279 = vld [vmem:[%s179 + $0x24c] sm:$0xff]
                %280 = vst [vmem:[%s180 + $0x24c] sm:$0xff] %v279
                %v281 = vld [vmem:[%s179 + $0x258] sm:$0xff]
                %282 = vst [vmem:[%s180 + $0x258] sm:$0xff] %v281
                %v283 = vld [vmem:[%s179 + $0x264] sm:$0xff]
                %284 = vst [vmem:[%s180 + $0x264] sm:$0xff] %v283
                %v285 = vld [vmem:[%s179 + $0x270] sm:$0xff]
                %286 = vst [vmem:[%s180 + $0x270] sm:$0xff] %v285
                %v287 = vld [vmem:[%s179 + $0x27c] sm:$0xff]
                %288 = vst [vmem:[%s180 + $0x27c] sm:$0xff] %v287
                %v289 = vld [vmem:[%s179 + $0x288] sm:$0xff]
                %290 = vst [vmem:[%s180 + $0x288] sm:$0xff] %v289
                %v291 = vld [vmem:[%s179 + $0x294] sm:$0xff]
                %292 = vst [vmem:[%s180 + $0x294] sm:$0xff] %v291
                %v293 = vld [vmem:[%s179 + $0x2a0] sm:$0xff]
                %294 = vst [vmem:[%s180 + $0x2a0] sm:$0xff] %v293
                %v295 = vld [vmem:[%s179 + $0x2ac] sm:$0xff]
                %296 = vst [vmem:[%s180 + $0x2ac] sm:$0xff] %v295
                %v297 = vld [vmem:[%s179 + $0x2b8] sm:$0xff]
                %298 = vst [vmem:[%s180 + $0x2b8] sm:$0xff] %v297
                %v299 = vld [vmem:[%s179 + $0x2c4] sm:$0xff]
                %300 = vst [vmem:[%s180 + $0x2c4] sm:$0xff] %v299
                %v301 = vld [vmem:[%s179 + $0x2d0] sm:$0xff]
                %302 = vst [vmem:[%s180 + $0x2d0] sm:$0xff] %v301
                %v303 = vld [vmem:[%s179 + $0x2dc] sm:$0xff]
                %304 = vst [vmem:[%s180 + $0x2dc] sm:$0xff] %v303
                %v305 = vld [vmem:[%s179 + $0x2e8] sm:$0xff]
                %306 = vst [vmem:[%s180 + $0x2e8] sm:$0xff] %v305
                %v307 = vld [vmem:[%s179 + $0x2f4] sm:$0xff]
                %308 = vst [vmem:[%s180 + $0x2f4] sm:$0xff] %v307
                %v309 = vld [vmem:[%s179 + $0x600] sm:$0xff]
                %310 = vst [vmem:[%s180 + $0x300] sm:$0xff] %v309
                %v311 = vld [vmem:[%s179 + $0x60c] sm:$0xff]
                %312 = vst [vmem:[%s180 + $0x30c] sm:$0xff] %v311
                %v313 = vld [vmem:[%s179 + $0x618] sm:$0xff]
                %314 = vst [vmem:[%s180 + $0x318] sm:$0xff] %v313
                %v315 = vld [vmem:[%s179 + $0x624] sm:$0xff]
                %316 = vst [vmem:[%s180 + $0x324] sm:$0xff] %v315
                %v317 = vld [vmem:[%s179 + $0x630] sm:$0xff]
                %318 = vst [vmem:[%s180 + $0x330] sm:$0xff] %v317
                %v319 = vld [vmem:[%s179 + $0x63c] sm:$0xff]
                %320 = vst [vmem:[%s180 + $0x33c] sm:$0xff] %v319
                %v321 = vld [vmem:[%s179 + $0x648] sm:$0xff]
                %322 = vst [vmem:[%s180 + $0x348] sm:$0xff] %v321
                %v323 = vld [vmem:[%s179 + $0x654] sm:$0xff]
                %324 = vst [vmem:[%s180 + $0x354] sm:$0xff] %v323
                %v325 = vld [vmem:[%s179 + $0x660] sm:$0xff]
                %326 = vst [vmem:[%s180 + $0x360] sm:$0xff] %v325
                %v327 = vld [vmem:[%s179 + $0x66c] sm:$0xff]
                %328 = vst [vmem:[%s180 + $0x36c] sm:$0xff] %v327
                %v329 = vld [vmem:[%s179 + $0x678] sm:$0xff]
                %330 = vst [vmem:[%s180 + $0x378] sm:$0xff] %v329
                %v331 = vld [vmem:[%s179 + $0x684] sm:$0xff]
                %332 = vst [vmem:[%s180 + $0x384] sm:$0xff] %v331
                %v333 = vld [vmem:[%s179 + $0x690] sm:$0xff]
                %334 = vst [vmem:[%s180 + $0x390] sm:$0xff] %v333
                %v335 = vld [vmem:[%s179 + $0x69c] sm:$0xff]
                %336 = vst [vmem:[%s180 + $0x39c] sm:$0xff] %v335
                %v337 = vld [vmem:[%s179 + $0x6a8] sm:$0xff]
                %338 = vst [vmem:[%s180 + $0x3a8] sm:$0xff] %v337
                %v339 = vld [vmem:[%s179 + $0x6b4] sm:$0xff]
                %340 = vst [vmem:[%s180 + $0x3b4] sm:$0xff] %v339
                %v341 = vld [vmem:[%s179 + $0x6c0] sm:$0xff]
                %342 = vst [vmem:[%s180 + $0x3c0] sm:$0xff] %v341
                %v343 = vld [vmem:[%s179 + $0x6cc] sm:$0xff]
                %344 = vst [vmem:[%s180 + $0x3cc] sm:$0xff] %v343
                %v345 = vld [vmem:[%s179 + $0x6d8] sm:$0xff]
                %346 = vst [vmem:[%s180 + $0x3d8] sm:$0xff] %v345
                %v347 = vld [vmem:[%s179 + $0x6e4] sm:$0xff]
                %348 = vst [vmem:[%s180 + $0x3e4] sm:$0xff] %v347
                %v349 = vld [vmem:[%s179 + $0x6f0] sm:$0xff]
                %350 = vst [vmem:[%s180 + $0x3f0] sm:$0xff] %v349
                %v351 = vld [vmem:[%s179 + $0x6fc] sm:$0xff]
                %352 = vst [vmem:[%s180 + $0x3fc] sm:$0xff] %v351
                %v353 = vld [vmem:[%s179 + $0x708] sm:$0xff]
                %354 = vst [vmem:[%s180 + $0x408] sm:$0xff] %v353
                %v355 = vld [vmem:[%s179 + $0x714] sm:$0xff]
                %356 = vst [vmem:[%s180 + $0x414] sm:$0xff] %v355
                %v357 = vld [vmem:[%s179 + $0x720] sm:$0xff]
                %358 = vst [vmem:[%s180 + $0x420] sm:$0xff] %v357
                %v359 = vld [vmem:[%s179 + $0x72c] sm:$0xff]
                %360 = vst [vmem:[%s180 + $0x42c] sm:$0xff] %v359
                %v361 = vld [vmem:[%s179 + $0x738] sm:$0xff]
                %362 = vst [vmem:[%s180 + $0x438] sm:$0xff] %v361
                %v363 = vld [vmem:[%s179 + $0x744] sm:$0xff]
                %364 = vst [vmem:[%s180 + $0x444] sm:$0xff] %v363
                %v365 = vld [vmem:[%s179 + $0x750] sm:$0xff]
                %366 = vst [vmem:[%s180 + $0x450] sm:$0xff] %v365
                %v367 = vld [vmem:[%s179 + $0x75c] sm:$0xff]
                %368 = vst [vmem:[%s180 + $0x45c] sm:$0xff] %v367
                %v369 = vld [vmem:[%s179 + $0x768] sm:$0xff]
                %370 = vst [vmem:[%s180 + $0x468] sm:$0xff] %v369
                %v371 = vld [vmem:[%s179 + $0x774] sm:$0xff]
                %372 = vst [vmem:[%s180 + $0x474] sm:$0xff] %v371
                %v373 = vld [vmem:[%s179 + $0x780] sm:$0xff]
                %374 = vst [vmem:[%s180 + $0x480] sm:$0xff] %v373
                %v375 = vld [vmem:[%s179 + $0x78c] sm:$0xff]
                %376 = vst [vmem:[%s180 + $0x48c] sm:$0xff] %v375
                %v377 = vld [vmem:[%s179 + $0x798] sm:$0xff]
                %378 = vst [vmem:[%s180 + $0x498] sm:$0xff] %v377
                %v379 = vld [vmem:[%s179 + $0x7a4] sm:$0xff]
                %380 = vst [vmem:[%s180 + $0x4a4] sm:$0xff] %v379
                %v381 = vld [vmem:[%s179 + $0x7b0] sm:$0xff]
                %382 = vst [vmem:[%s180 + $0x4b0] sm:$0xff] %v381
                %v383 = vld [vmem:[%s179 + $0x7bc] sm:$0xff]
                %384 = vst [vmem:[%s180 + $0x4bc] sm:$0xff] %v383
                %v385 = vld [vmem:[%s179 + $0x7c8] sm:$0xff]
                %386 = vst [vmem:[%s180 + $0x4c8] sm:$0xff] %v385
                %v387 = vld [vmem:[%s179 + $0x7d4] sm:$0xff]
                %388 = vst [vmem:[%s180 + $0x4d4] sm:$0xff] %v387
                %v389 = vld [vmem:[%s179 + $0x7e0] sm:$0xff]
                %390 = vst [vmem:[%s180 + $0x4e0] sm:$0xff] %v389
                %v391 = vld [vmem:[%s179 + $0x7ec] sm:$0xff]
                %392 = vst [vmem:[%s180 + $0x4ec] sm:$0xff] %v391
                %v393 = vld [vmem:[%s179 + $0x7f8] sm:$0xff]
                %394 = vst [vmem:[%s180 + $0x4f8] sm:$0xff] %v393
                %v395 = vld [vmem:[%s179 + $0x804] sm:$0xff]
                %396 = vst [vmem:[%s180 + $0x504] sm:$0xff] %v395
                %v397 = vld [vmem:[%s179 + $0x810] sm:$0xff]
                %398 = vst [vmem:[%s180 + $0x510] sm:$0xff] %v397
                %v399 = vld [vmem:[%s179 + $0x81c] sm:$0xff]
                %400 = vst [vmem:[%s180 + $0x51c] sm:$0xff] %v399
                %v401 = vld [vmem:[%s179 + $0x828] sm:$0xff]
                %402 = vst [vmem:[%s180 + $0x528] sm:$0xff] %v401
                %v403 = vld [vmem:[%s179 + $0x834] sm:$0xff]
                %404 = vst [vmem:[%s180 + $0x534] sm:$0xff] %v403
                %v405 = vld [vmem:[%s179 + $0x840] sm:$0xff]
                %406 = vst [vmem:[%s180 + $0x540] sm:$0xff] %v405
                %v407 = vld [vmem:[%s179 + $0x84c] sm:$0xff]
                %408 = vst [vmem:[%s180 + $0x54c] sm:$0xff] %v407
                %v409 = vld [vmem:[%s179 + $0x858] sm:$0xff]
                %410 = vst [vmem:[%s180 + $0x558] sm:$0xff] %v409
                %v411 = vld [vmem:[%s179 + $0x864] sm:$0xff]
                %412 = vst [vmem:[%s180 + $0x564] sm:$0xff] %v411
                %v413 = vld [vmem:[%s179 + $0x870] sm:$0xff]
                %414 = vst [vmem:[%s180 + $0x570] sm:$0xff] %v413
                %v415 = vld [vmem:[%s179 + $0x87c] sm:$0xff]
                %416 = vst [vmem:[%s180 + $0x57c] sm:$0xff] %v415
                %v417 = vld [vmem:[%s179 + $0x888] sm:$0xff]
                %418 = vst [vmem:[%s180 + $0x588] sm:$0xff] %v417
                %v419 = vld [vmem:[%s179 + $0x894] sm:$0xff]
                %420 = vst [vmem:[%s180 + $0x594] sm:$0xff] %v419
                %v421 = vld [vmem:[%s179 + $0x8a0] sm:$0xff]
                %422 = vst [vmem:[%s180 + $0x5a0] sm:$0xff] %v421
                %v423 = vld [vmem:[%s179 + $0x8ac] sm:$0xff]
                %424 = vst [vmem:[%s180 + $0x5ac] sm:$0xff] %v423
                %v425 = vld [vmem:[%s179 + $0x8b8] sm:$0xff]
                %426 = vst [vmem:[%s180 + $0x5b8] sm:$0xff] %v425
                %v427 = vld [vmem:[%s179 + $0x8c4] sm:$0xff]
                %428 = vst [vmem:[%s180 + $0x5c4] sm:$0xff] %v427
                %v429 = vld [vmem:[%s179 + $0x8d0] sm:$0xff]
                %430 = vst [vmem:[%s180 + $0x5d0] sm:$0xff] %v429
                %v431 = vld [vmem:[%s179 + $0x8dc] sm:$0xff]
                %432 = vst [vmem:[%s180 + $0x5dc] sm:$0xff] %v431
                %v433 = vld [vmem:[%s179 + $0x8e8] sm:$0xff]
                %434 = vst [vmem:[%s180 + $0x5e8] sm:$0xff] %v433
                %v435 = vld [vmem:[%s179 + $0x8f4] sm:$0xff]
                %436 = vst [vmem:[%s180 + $0x5f4] sm:$0xff] %v435
              $region41: #{medicalnet_perceptual_similarity.5} parent=35 // loop_footer
                %s178 = sadd.s32 1, %s174
              $region42: #{medicalnet_perceptual_similarity.5} parent=35 // loop_footer_branch
                %173 = sbr.rel target = $region38
              $region43: #{medicalnet_perceptual_similarity.5} parent=35 // loop_exit
                _
              loop: start=0, step=1, limit=1
              $region44: #{medicalnet_perceptual_similarity.5} parent=35 // loop_pre_header
                _
              $region45: #{medicalnet_perceptual_similarity.5} parent=35 // loop_header
                %s439 = sphi 0, %s443
                %p440 = scmp.ge.s32.totalorder %s439, 1
                %s444 = sphi %s171, %s171
                %s445 = sphi %s172, %s172
              $region46: #{medicalnet_perceptual_similarity.5} parent=35 // loop_header_branch
                %442 = sbr.rel (%p440) target = $region50
              $region47: #{medicalnet_perceptual_similarity.5} parent=35 // loop_body
                %v446 = vld [vmem:[%s444] sm:$0xf]
                %447 = vst [vmem:[%s445] sm:$0xf] %v446
                %v448 = vld [vmem:[%s444 + $0xc] sm:$0xf]
                %449 = vst [vmem:[%s445 + $0xc] sm:$0xf] %v448
                %v450 = vld [vmem:[%s444 + $0x18] sm:$0xf]
                %451 = vst [vmem:[%s445 + $0x18] sm:$0xf] %v450
                %v452 = vld [vmem:[%s444 + $0x24] sm:$0xf]
                %453 = vst [vmem:[%s445 + $0x24] sm:$0xf] %v452
                %v454 = vld [vmem:[%s444 + $0x30] sm:$0xf]
                %455 = vst [vmem:[%s445 + $0x30] sm:$0xf] %v454
                %v456 = vld [vmem:[%s444 + $0x3c] sm:$0xf]
                %457 = vst [vmem:[%s445 + $0x3c] sm:$0xf] %v456
                %v458 = vld [vmem:[%s444 + $0x48] sm:$0xf]
                %459 = vst [vmem:[%s445 + $0x48] sm:$0xf] %v458
                %v460 = vld [vmem:[%s444 + $0x54] sm:$0xf]
                %461 = vst [vmem:[%s445 + $0x54] sm:$0xf] %v460
                %v462 = vld [vmem:[%s444 + $0x60] sm:$0xf]
                %463 = vst [vmem:[%s445 + $0x60] sm:$0xf] %v462
                %v464 = vld [vmem:[%s444 + $0x6c] sm:$0xf]
                %465 = vst [vmem:[%s445 + $0x6c] sm:$0xf] %v464
                %v466 = vld [vmem:[%s444 + $0x78] sm:$0xf]
                %467 = vst [vmem:[%s445 + $0x78] sm:$0xf] %v466
                %v468 = vld [vmem:[%s444 + $0x84] sm:$0xf]
                %469 = vst [vmem:[%s445 + $0x84] sm:$0xf] %v468
                %v470 = vld [vmem:[%s444 + $0x90] sm:$0xf]
                %471 = vst [vmem:[%s445 + $0x90] sm:$0xf] %v470
                %v472 = vld [vmem:[%s444 + $0x9c] sm:$0xf]
                %473 = vst [vmem:[%s445 + $0x9c] sm:$0xf] %v472
                %v474 = vld [vmem:[%s444 + $0xa8] sm:$0xf]
                %475 = vst [vmem:[%s445 + $0xa8] sm:$0xf] %v474
                %v476 = vld [vmem:[%s444 + $0xb4] sm:$0xf]
                %477 = vst [vmem:[%s445 + $0xb4] sm:$0xf] %v476
                %v478 = vld [vmem:[%s444 + $0xc0] sm:$0xf]
                %479 = vst [vmem:[%s445 + $0xc0] sm:$0xf] %v478
                %v480 = vld [vmem:[%s444 + $0xcc] sm:$0xf]
                %481 = vst [vmem:[%s445 + $0xcc] sm:$0xf] %v480
                %v482 = vld [vmem:[%s444 + $0xd8] sm:$0xf]
                %483 = vst [vmem:[%s445 + $0xd8] sm:$0xf] %v482
                %v484 = vld [vmem:[%s444 + $0xe4] sm:$0xf]
                %485 = vst [vmem:[%s445 + $0xe4] sm:$0xf] %v484
                %v486 = vld [vmem:[%s444 + $0xf0] sm:$0xf]
                %487 = vst [vmem:[%s445 + $0xf0] sm:$0xf] %v486
                %v488 = vld [vmem:[%s444 + $0xfc] sm:$0xf]
                %489 = vst [vmem:[%s445 + $0xfc] sm:$0xf] %v488
                %v490 = vld [vmem:[%s444 + $0x108] sm:$0xf]
                %491 = vst [vmem:[%s445 + $0x108] sm:$0xf] %v490
                %v492 = vld [vmem:[%s444 + $0x114] sm:$0xf]
                %493 = vst [vmem:[%s445 + $0x114] sm:$0xf] %v492
                %v494 = vld [vmem:[%s444 + $0x120] sm:$0xf]
                %495 = vst [vmem:[%s445 + $0x120] sm:$0xf] %v494
                %v496 = vld [vmem:[%s444 + $0x12c] sm:$0xf]
                %497 = vst [vmem:[%s445 + $0x12c] sm:$0xf] %v496
                %v498 = vld [vmem:[%s444 + $0x138] sm:$0xf]
                %499 = vst [vmem:[%s445 + $0x138] sm:$0xf] %v498
                %v500 = vld [vmem:[%s444 + $0x144] sm:$0xf]
                %501 = vst [vmem:[%s445 + $0x144] sm:$0xf] %v500
                %v502 = vld [vmem:[%s444 + $0x150] sm:$0xf]
                %503 = vst [vmem:[%s445 + $0x150] sm:$0xf] %v502
                %v504 = vld [vmem:[%s444 + $0x15c] sm:$0xf]
                %505 = vst [vmem:[%s445 + $0x15c] sm:$0xf] %v504
                %v506 = vld [vmem:[%s444 + $0x168] sm:$0xf]
                %507 = vst [vmem:[%s445 + $0x168] sm:$0xf] %v506
                %v508 = vld [vmem:[%s444 + $0x174] sm:$0xf]
                %509 = vst [vmem:[%s445 + $0x174] sm:$0xf] %v508
                %v510 = vld [vmem:[%s444 + $0x180] sm:$0xf]
                %511 = vst [vmem:[%s445 + $0x180] sm:$0xf] %v510
                %v512 = vld [vmem:[%s444 + $0x18c] sm:$0xf]
                %513 = vst [vmem:[%s445 + $0x18c] sm:$0xf] %v512
                %v514 = vld [vmem:[%s444 + $0x198] sm:$0xf]
                %515 = vst [vmem:[%s445 + $0x198] sm:$0xf] %v514
                %v516 = vld [vmem:[%s444 + $0x1a4] sm:$0xf]
                %517 = vst [vmem:[%s445 + $0x1a4] sm:$0xf] %v516
                %v518 = vld [vmem:[%s444 + $0x1b0] sm:$0xf]
                %519 = vst [vmem:[%s445 + $0x1b0] sm:$0xf] %v518
                %v520 = vld [vmem:[%s444 + $0x1bc] sm:$0xf]
                %521 = vst [vmem:[%s445 + $0x1bc] sm:$0xf] %v520
                %v522 = vld [vmem:[%s444 + $0x1c8] sm:$0xf]
                %523 = vst [vmem:[%s445 + $0x1c8] sm:$0xf] %v522
                %v524 = vld [vmem:[%s444 + $0x1d4] sm:$0xf]
                %525 = vst [vmem:[%s445 + $0x1d4] sm:$0xf] %v524
                %v526 = vld [vmem:[%s444 + $0x1e0] sm:$0xf]
                %527 = vst [vmem:[%s445 + $0x1e0] sm:$0xf] %v526
                %v528 = vld [vmem:[%s444 + $0x1ec] sm:$0xf]
                %529 = vst [vmem:[%s445 + $0x1ec] sm:$0xf] %v528
                %v530 = vld [vmem:[%s444 + $0x1f8] sm:$0xf]
                %531 = vst [vmem:[%s445 + $0x1f8] sm:$0xf] %v530
                %v532 = vld [vmem:[%s444 + $0x204] sm:$0xf]
                %533 = vst [vmem:[%s445 + $0x204] sm:$0xf] %v532
                %v534 = vld [vmem:[%s444 + $0x210] sm:$0xf]
                %535 = vst [vmem:[%s445 + $0x210] sm:$0xf] %v534
                %v536 = vld [vmem:[%s444 + $0x21c] sm:$0xf]
                %537 = vst [vmem:[%s445 + $0x21c] sm:$0xf] %v536
                %v538 = vld [vmem:[%s444 + $0x228] sm:$0xf]
                %539 = vst [vmem:[%s445 + $0x228] sm:$0xf] %v538
                %v540 = vld [vmem:[%s444 + $0x234] sm:$0xf]
                %541 = vst [vmem:[%s445 + $0x234] sm:$0xf] %v540
                %v542 = vld [vmem:[%s444 + $0x240] sm:$0xf]
                %543 = vst [vmem:[%s445 + $0x240] sm:$0xf] %v542
                %v544 = vld [vmem:[%s444 + $0x24c] sm:$0xf]
                %545 = vst [vmem:[%s445 + $0x24c] sm:$0xf] %v544
                %v546 = vld [vmem:[%s444 + $0x258] sm:$0xf]
                %547 = vst [vmem:[%s445 + $0x258] sm:$0xf] %v546
                %v548 = vld [vmem:[%s444 + $0x264] sm:$0xf]
                %549 = vst [vmem:[%s445 + $0x264] sm:$0xf] %v548
                %v550 = vld [vmem:[%s444 + $0x270] sm:$0xf]
                %551 = vst [vmem:[%s445 + $0x270] sm:$0xf] %v550
                %v552 = vld [vmem:[%s444 + $0x27c] sm:$0xf]
                %553 = vst [vmem:[%s445 + $0x27c] sm:$0xf] %v552
                %v554 = vld [vmem:[%s444 + $0x288] sm:$0xf]
                %555 = vst [vmem:[%s445 + $0x288] sm:$0xf] %v554
                %v556 = vld [vmem:[%s444 + $0x294] sm:$0xf]
                %557 = vst [vmem:[%s445 + $0x294] sm:$0xf] %v556
                %v558 = vld [vmem:[%s444 + $0x2a0] sm:$0xf]
                %559 = vst [vmem:[%s445 + $0x2a0] sm:$0xf] %v558
                %v560 = vld [vmem:[%s444 + $0x2ac] sm:$0xf]
                %561 = vst [vmem:[%s445 + $0x2ac] sm:$0xf] %v560
                %v562 = vld [vmem:[%s444 + $0x2b8] sm:$0xf]
                %563 = vst [vmem:[%s445 + $0x2b8] sm:$0xf] %v562
                %v564 = vld [vmem:[%s444 + $0x2c4] sm:$0xf]
                %565 = vst [vmem:[%s445 + $0x2c4] sm:$0xf] %v564
                %v566 = vld [vmem:[%s444 + $0x2d0] sm:$0xf]
                %567 = vst [vmem:[%s445 + $0x2d0] sm:$0xf] %v566
                %v568 = vld [vmem:[%s444 + $0x2dc] sm:$0xf]
                %569 = vst [vmem:[%s445 + $0x2dc] sm:$0xf] %v568
                %v570 = vld [vmem:[%s444 + $0x2e8] sm:$0xf]
                %571 = vst [vmem:[%s445 + $0x2e8] sm:$0xf] %v570
                %v572 = vld [vmem:[%s444 + $0x2f4] sm:$0xf]
                %573 = vst [vmem:[%s445 + $0x2f4] sm:$0xf] %v572
                %v574 = vld [vmem:[%s444 + $0x600] sm:$0xf]
                %575 = vst [vmem:[%s445 + $0x300] sm:$0xf] %v574
                %v576 = vld [vmem:[%s444 + $0x60c] sm:$0xf]
                %577 = vst [vmem:[%s445 + $0x30c] sm:$0xf] %v576
                %v578 = vld [vmem:[%s444 + $0x618] sm:$0xf]
                %579 = vst [vmem:[%s445 + $0x318] sm:$0xf] %v578
                %v580 = vld [vmem:[%s444 + $0x624] sm:$0xf]
                %581 = vst [vmem:[%s445 + $0x324] sm:$0xf] %v580
                %v582 = vld [vmem:[%s444 + $0x630] sm:$0xf]
                %583 = vst [vmem:[%s445 + $0x330] sm:$0xf] %v582
                %v584 = vld [vmem:[%s444 + $0x63c] sm:$0xf]
                %585 = vst [vmem:[%s445 + $0x33c] sm:$0xf] %v584
                %v586 = vld [vmem:[%s444 + $0x648] sm:$0xf]
                %587 = vst [vmem:[%s445 + $0x348] sm:$0xf] %v586
                %v588 = vld [vmem:[%s444 + $0x654] sm:$0xf]
                %589 = vst [vmem:[%s445 + $0x354] sm:$0xf] %v588
                %v590 = vld [vmem:[%s444 + $0x660] sm:$0xf]
                %591 = vst [vmem:[%s445 + $0x360] sm:$0xf] %v590
                %v592 = vld [vmem:[%s444 + $0x66c] sm:$0xf]
                %593 = vst [vmem:[%s445 + $0x36c] sm:$0xf] %v592
                %v594 = vld [vmem:[%s444 + $0x678] sm:$0xf]
                %595 = vst [vmem:[%s445 + $0x378] sm:$0xf] %v594
                %v596 = vld [vmem:[%s444 + $0x684] sm:$0xf]
                %597 = vst [vmem:[%s445 + $0x384] sm:$0xf] %v596
                %v598 = vld [vmem:[%s444 + $0x690] sm:$0xf]
                %599 = vst [vmem:[%s445 + $0x390] sm:$0xf] %v598
                %v600 = vld [vmem:[%s444 + $0x69c] sm:$0xf]
                %601 = vst [vmem:[%s445 + $0x39c] sm:$0xf] %v600
                %v602 = vld [vmem:[%s444 + $0x6a8] sm:$0xf]
                %603 = vst [vmem:[%s445 + $0x3a8] sm:$0xf] %v602
                %v604 = vld [vmem:[%s444 + $0x6b4] sm:$0xf]
                %605 = vst [vmem:[%s445 + $0x3b4] sm:$0xf] %v604
                %v606 = vld [vmem:[%s444 + $0x6c0] sm:$0xf]
                %607 = vst [vmem:[%s445 + $0x3c0] sm:$0xf] %v606
                %v608 = vld [vmem:[%s444 + $0x6cc] sm:$0xf]
                %609 = vst [vmem:[%s445 + $0x3cc] sm:$0xf] %v608
                %v610 = vld [vmem:[%s444 + $0x6d8] sm:$0xf]
                %611 = vst [vmem:[%s445 + $0x3d8] sm:$0xf] %v610
                %v612 = vld [vmem:[%s444 + $0x6e4] sm:$0xf]
                %613 = vst [vmem:[%s445 + $0x3e4] sm:$0xf] %v612
                %v614 = vld [vmem:[%s444 + $0x6f0] sm:$0xf]
                %615 = vst [vmem:[%s445 + $0x3f0] sm:$0xf] %v614
                %v616 = vld [vmem:[%s444 + $0x6fc] sm:$0xf]
                %617 = vst [vmem:[%s445 + $0x3fc] sm:$0xf] %v616
                %v618 = vld [vmem:[%s444 + $0x708] sm:$0xf]
                %619 = vst [vmem:[%s445 + $0x408] sm:$0xf] %v618
                %v620 = vld [vmem:[%s444 + $0x714] sm:$0xf]
                %621 = vst [vmem:[%s445 + $0x414] sm:$0xf] %v620
                %v622 = vld [vmem:[%s444 + $0x720] sm:$0xf]
                %623 = vst [vmem:[%s445 + $0x420] sm:$0xf] %v622
                %v624 = vld [vmem:[%s444 + $0x72c] sm:$0xf]
                %625 = vst [vmem:[%s445 + $0x42c] sm:$0xf] %v624
                %v626 = vld [vmem:[%s444 + $0x738] sm:$0xf]
                %627 = vst [vmem:[%s445 + $0x438] sm:$0xf] %v626
                %v628 = vld [vmem:[%s444 + $0x744] sm:$0xf]
                %629 = vst [vmem:[%s445 + $0x444] sm:$0xf] %v628
                %v630 = vld [vmem:[%s444 + $0x750] sm:$0xf]
                %631 = vst [vmem:[%s445 + $0x450] sm:$0xf] %v630
                %v632 = vld [vmem:[%s444 + $0x75c] sm:$0xf]
                %633 = vst [vmem:[%s445 + $0x45c] sm:$0xf] %v632
                %v634 = vld [vmem:[%s444 + $0x768] sm:$0xf]
                %635 = vst [vmem:[%s445 + $0x468] sm:$0xf] %v634
                %v636 = vld [vmem:[%s444 + $0x774] sm:$0xf]
                %637 = vst [vmem:[%s445 + $0x474] sm:$0xf] %v636
                %v638 = vld [vmem:[%s444 + $0x780] sm:$0xf]
                %639 = vst [vmem:[%s445 + $0x480] sm:$0xf] %v638
                %v640 = vld [vmem:[%s444 + $0x78c] sm:$0xf]
                %641 = vst [vmem:[%s445 + $0x48c] sm:$0xf] %v640
                %v642 = vld [vmem:[%s444 + $0x798] sm:$0xf]
                %643 = vst [vmem:[%s445 + $0x498] sm:$0xf] %v642
                %v644 = vld [vmem:[%s444 + $0x7a4] sm:$0xf]
                %645 = vst [vmem:[%s445 + $0x4a4] sm:$0xf] %v644
                %v646 = vld [vmem:[%s444 + $0x7b0] sm:$0xf]
                %647 = vst [vmem:[%s445 + $0x4b0] sm:$0xf] %v646
                %v648 = vld [vmem:[%s444 + $0x7bc] sm:$0xf]
                %649 = vst [vmem:[%s445 + $0x4bc] sm:$0xf] %v648
                %v650 = vld [vmem:[%s444 + $0x7c8] sm:$0xf]
                %651 = vst [vmem:[%s445 + $0x4c8] sm:$0xf] %v650
                %v652 = vld [vmem:[%s444 + $0x7d4] sm:$0xf]
                %653 = vst [vmem:[%s445 + $0x4d4] sm:$0xf] %v652
                %v654 = vld [vmem:[%s444 + $0x7e0] sm:$0xf]
                %655 = vst [vmem:[%s445 + $0x4e0] sm:$0xf] %v654
                %v656 = vld [vmem:[%s444 + $0x7ec] sm:$0xf]
                %657 = vst [vmem:[%s445 + $0x4ec] sm:$0xf] %v656
                %v658 = vld [vmem:[%s444 + $0x7f8] sm:$0xf]
                %659 = vst [vmem:[%s445 + $0x4f8] sm:$0xf] %v658
                %v660 = vld [vmem:[%s444 + $0x804] sm:$0xf]
                %661 = vst [vmem:[%s445 + $0x504] sm:$0xf] %v660
                %v662 = vld [vmem:[%s444 + $0x810] sm:$0xf]
                %663 = vst [vmem:[%s445 + $0x510] sm:$0xf] %v662
                %v664 = vld [vmem:[%s444 + $0x81c] sm:$0xf]
                %665 = vst [vmem:[%s445 + $0x51c] sm:$0xf] %v664
                %v666 = vld [vmem:[%s444 + $0x828] sm:$0xf]
                %667 = vst [vmem:[%s445 + $0x528] sm:$0xf] %v666
                %v668 = vld [vmem:[%s444 + $0x834] sm:$0xf]
                %669 = vst [vmem:[%s445 + $0x534] sm:$0xf] %v668
                %v670 = vld [vmem:[%s444 + $0x840] sm:$0xf]
                %671 = vst [vmem:[%s445 + $0x540] sm:$0xf] %v670
                %v672 = vld [vmem:[%s444 + $0x84c] sm:$0xf]
                %673 = vst [vmem:[%s445 + $0x54c] sm:$0xf] %v672
                %v674 = vld [vmem:[%s444 + $0x858] sm:$0xf]
                %675 = vst [vmem:[%s445 + $0x558] sm:$0xf] %v674
                %v676 = vld [vmem:[%s444 + $0x864] sm:$0xf]
                %677 = vst [vmem:[%s445 + $0x564] sm:$0xf] %v676
                %v678 = vld [vmem:[%s444 + $0x870] sm:$0xf]
                %679 = vst [vmem:[%s445 + $0x570] sm:$0xf] %v678
                %v680 = vld [vmem:[%s444 + $0x87c] sm:$0xf]
                %681 = vst [vmem:[%s445 + $0x57c] sm:$0xf] %v680
                %v682 = vld [vmem:[%s444 + $0x888] sm:$0xf]
                %683 = vst [vmem:[%s445 + $0x588] sm:$0xf] %v682
                %v684 = vld [vmem:[%s444 + $0x894] sm:$0xf]
                %685 = vst [vmem:[%s445 + $0x594] sm:$0xf] %v684
                %v686 = vld [vmem:[%s444 + $0x8a0] sm:$0xf]
                %687 = vst [vmem:[%s445 + $0x5a0] sm:$0xf] %v686
                %v688 = vld [vmem:[%s444 + $0x8ac] sm:$0xf]
                %689 = vst [vmem:[%s445 + $0x5ac] sm:$0xf] %v688
                %v690 = vld [vmem:[%s444 + $0x8b8] sm:$0xf]
                %691 = vst [vmem:[%s445 + $0x5b8] sm:$0xf] %v690
                %v692 = vld [vmem:[%s444 + $0x8c4] sm:$0xf]
                %693 = vst [vmem:[%s445 + $0x5c4] sm:$0xf] %v692
                %v694 = vld [vmem:[%s444 + $0x8d0] sm:$0xf]
                %695 = vst [vmem:[%s445 + $0x5d0] sm:$0xf] %v694
                %v696 = vld [vmem:[%s444 + $0x8dc] sm:$0xf]
                %697 = vst [vmem:[%s445 + $0x5dc] sm:$0xf] %v696
                %v698 = vld [vmem:[%s444 + $0x8e8] sm:$0xf]
                %699 = vst [vmem:[%s445 + $0x5e8] sm:$0xf] %v698
                %v700 = vld [vmem:[%s444 + $0x8f4] sm:$0xf]
                %701 = vst [vmem:[%s445 + $0x5f4] sm:$0xf] %v700
              $region48: #{medicalnet_perceptual_similarity.5} parent=35 // loop_footer
                %s443 = sadd.s32 1, %s439
              $region49: #{medicalnet_perceptual_similarity.5} parent=35 // loop_footer_branch
                %438 = sbr.rel target = $region45
              $region50: #{medicalnet_perceptual_similarity.5} parent=35 // loop_exit
                _
            $region36: #{medicalnet_perceptual_similarity.5} parent=31 // pred_fallthru
              _
          $region32: #{medicalnet_perceptual_similarity.5} parent=27 // pred_fallthru
            _
          %702 = vnop
        $region28: #{medicalnet_perceptual_similarity.5} parent=23 // pred_fallthru
          _
      $region24: #{medicalnet_perceptual_similarity.5} parent=5 // pred_fallthru
        _
      %p703 = scmp.le.s32.totalorder 1, %s9
      %p704 = scmp.lt.s32.totalorder %s9, 5
      %p705 = pnand %p703, %p704
      %p706 = pneg %p705
      // Predicated region
      $region51: #{medicalnet_perceptual_similarity.5} parent=5 // pred_check
        _
      $region52: #{medicalnet_perceptual_similarity.5} parent=5 // pred_check_branch
        %708 = sbr.rel (%p705) target = $region54
      $region53: #{medicalnet_perceptual_similarity.5} parent=5 // pred_region
        %s709 = ssub.s32 %s9, 1
        %s710 = sand.u32 %s45, 1
        %s711 = sand.u32 %s45, 1
        %s712 = smul.addr %s711, 1536
        %s713 = scalar_lea.vmem [#allocation2], %s712
        // Predicated region
        $region55: #{medicalnet_perceptual_similarity.5} parent=53 // pred_check
          %p714 = pneg %p58
        $region56: #{medicalnet_perceptual_similarity.5} parent=53 // pred_check_branch
          %716 = sbr.rel (%p714) target = $region58
        $region57: #{medicalnet_perceptual_similarity.5} parent=53 // pred_region
          _
        $region58: #{medicalnet_perceptual_similarity.5} parent=53 // pred_fallthru
          _
        %s717 = sand.u32 %s45, 1
        %s718 = sand.u32 %s45, 1
        %s719 = smul.addr %s718, 1536
        %s720 = scalar_lea.vmem [#allocation2], %s719
        %p721 = pneg %p58
        %p722 = pneg %p55
        %p723 = pneg %p79
        %p724 = pneg %p76
        %p725 = pneg %p100
        %p726 = pneg %p97
        %p727 = pneg %p128
        %p728 = pneg %p125
        %p729 = scmp.lt.s32.totalorder %s19, 1
        %s730 = scalar_select %p729, %s19, 1
        %p731 = scmp.lt.s32.totalorder %s20, 1
        %s732 = scalar_select %p731, %s20, 1
        %s733 = smul.addr %s730, 2
        %s734 = sadd.s32 %s732, %s733
        %s735 = smul.addr %s734, 8
        %s736 = scalar_lea.vmem %s3, %s735
        %s737 = sadd.s32 %s20, %s21
        %s738 = smul.u32 64, %s737
        %p739 = scmp.lt.s32.totalorder %s19, 1
        %s740 = scalar_select %p739, %s19, 1
        %p741 = scmp.lt.s32.totalorder %s20, 1
        %s742 = scalar_select %p741, %s20, 1
        %s743 = smul.addr %s740, 2
        %s744 = sadd.s32 %s742, %s743
        %s745 = smul.addr %s744, 8
        %s746 = scalar_lea.vmem %s3, %s745
        %p748 = scmp.eq.s32.totalorder %s21, 0
        // Predicated region
        $region59: #{medicalnet_perceptual_similarity.5} parent=53 // pred_check
          %p749 = pneg %p748
        $region60: #{medicalnet_perceptual_similarity.5} parent=53 // pred_check_branch
          %751 = sbr.rel (%p749) target = $region62
        $region61: #{medicalnet_perceptual_similarity.5} parent=53 // pred_region
          %752 = vst [vmem:[%s746] sm:$0xff] 0.0
        $region62: #{medicalnet_perceptual_similarity.5} parent=53 // pred_fallthru
          _
        %v753 = vld [vmem:[%s713] sm:$0xff]
        %v754 = vld [vmem:[%s713 + $0x8] sm:$0xf]
        %v755 = vld [vmem:[%s713 + $0xc] sm:$0xff]
        %v756 = vld [vmem:[%s713 + $0x14] sm:$0xf]
        %v757 = vld [vmem:[%s713 + $0x18] sm:$0xff]
        %v758 = vld [vmem:[%s713 + $0x20] sm:$0xf]
        %v759 = vld [vmem:[%s713 + $0x24] sm:$0xff]
        %v760 = vld [vmem:[%s713 + $0x2c] sm:$0xf]
        %v761 = vld [vmem:[%s713 + $0x30] sm:$0xff]
        %v762 = vld [vmem:[%s713 + $0x38] sm:$0xf]
        %v763 = vld [vmem:[%s713 + $0x3c] sm:$0xff]
        %v764 = vld [vmem:[%s713 + $0x44] sm:$0xf]
        %v765 = vld [vmem:[%s713 + $0x48] sm:$0xff]
        %v766 = vld [vmem:[%s713 + $0x50] sm:$0xf]
        %v767 = vld [vmem:[%s713 + $0x54] sm:$0xff]
        %v768 = vld [vmem:[%s713 + $0x5c] sm:$0xf]
        %v769 = vld [vmem:[%s713 + $0x60] sm:$0xff]
        %v770 = vld [vmem:[%s713 + $0x68] sm:$0xf]
        %v771 = vld [vmem:[%s713 + $0x6c] sm:$0xff]
        %v772 = vld [vmem:[%s713 + $0x74] sm:$0xf]
        %v773 = vld [vmem:[%s713 + $0x78] sm:$0xff]
        %v774 = vld [vmem:[%s713 + $0x80] sm:$0xf]
        %v775 = vld [vmem:[%s713 + $0x84] sm:$0xff]
        %v776 = vld [vmem:[%s713 + $0x8c] sm:$0xf]
        %v777 = vld [vmem:[%s713 + $0x90] sm:$0xff]
        %v778 = vld [vmem:[%s713 + $0x98] sm:$0xf]
        %v779 = vld [vmem:[%s713 + $0x9c] sm:$0xff]
        %v780 = vld [vmem:[%s713 + $0xa4] sm:$0xf]
        %v781 = vld [vmem:[%s713 + $0xa8] sm:$0xff]
        %v782 = vld [vmem:[%s713 + $0xb0] sm:$0xf]
        %v783 = vld [vmem:[%s713 + $0xb4] sm:$0xff]
        %v784 = vld [vmem:[%s713 + $0xbc] sm:$0xf]
        %v785 = vld [vmem:[%s713 + $0xc0] sm:$0xff]
        %v786 = vld [vmem:[%s713 + $0xc8] sm:$0xf]
        %v787 = vld [vmem:[%s713 + $0xcc] sm:$0xff]
        %v788 = vld [vmem:[%s713 + $0xd4] sm:$0xf]
        %v789 = vld [vmem:[%s713 + $0xd8] sm:$0xff]
        %v790 = vld [vmem:[%s713 + $0xe0] sm:$0xf]
        %v791 = vld [vmem:[%s713 + $0xe4] sm:$0xff]
        %v792 = vld [vmem:[%s713 + $0xec] sm:$0xf]
        %v793 = vld [vmem:[%s713 + $0xf0] sm:$0xff]
        %v794 = vld [vmem:[%s713 + $0xf8] sm:$0xf]
        %v795 = vld [vmem:[%s713 + $0xfc] sm:$0xff]
        %v796 = vld [vmem:[%s713 + $0x104] sm:$0xf]
        %v797 = vld [vmem:[%s713 + $0x108] sm:$0xff]
        %v798 = vld [vmem:[%s713 + $0x110] sm:$0xf]
        %v799 = vld [vmem:[%s713 + $0x114] sm:$0xff]
        %v800 = vld [vmem:[%s713 + $0x11c] sm:$0xf]
        %v801 = vld [vmem:[%s713 + $0x120] sm:$0xff]
        %v802 = vld [vmem:[%s713 + $0x128] sm:$0xf]
        %v803 = vld [vmem:[%s713 + $0x12c] sm:$0xff]
        %v804 = vld [vmem:[%s713 + $0x134] sm:$0xf]
        %v805 = vld [vmem:[%s713 + $0x138] sm:$0xff]
        %v806 = vld [vmem:[%s713 + $0x140] sm:$0xf]
        %v807 = vld [vmem:[%s713 + $0x144] sm:$0xff]
        %v808 = vld [vmem:[%s713 + $0x14c] sm:$0xf]
        %v809 = vld [vmem:[%s713 + $0x150] sm:$0xff]
        %v810 = vld [vmem:[%s713 + $0x158] sm:$0xf]
        %v811 = vld [vmem:[%s713 + $0x15c] sm:$0xff]
        %v812 = vld [vmem:[%s713 + $0x164] sm:$0xf]
        %v813 = vld [vmem:[%s713 + $0x168] sm:$0xff]
        %v814 = vld [vmem:[%s713 + $0x170] sm:$0xf]
        %v815 = vld [vmem:[%s713 + $0x174] sm:$0xff]
        %v816 = vld [vmem:[%s713 + $0x17c] sm:$0xf]
        %v817 = vld [vmem:[%s713 + $0x180] sm:$0xff]
        %v818 = vld [vmem:[%s713 + $0x188] sm:$0xf]
        %v819 = vld [vmem:[%s713 + $0x18c] sm:$0xff]
        %v820 = vld [vmem:[%s713 + $0x194] sm:$0xf]
        %v821 = vld [vmem:[%s713 + $0x198] sm:$0xff]
        %v822 = vld [vmem:[%s713 + $0x1a0] sm:$0xf]
        %v823 = vld [vmem:[%s713 + $0x1a4] sm:$0xff]
        %v824 = vld [vmem:[%s713 + $0x1ac] sm:$0xf]
        %v825 = vld [vmem:[%s713 + $0x1b0] sm:$0xff]
        %v826 = vld [vmem:[%s713 + $0x1b8] sm:$0xf]
        %v827 = vld [vmem:[%s713 + $0x1bc] sm:$0xff]
        %v828 = vld [vmem:[%s713 + $0x1c4] sm:$0xf]
        %v829 = vld [vmem:[%s713 + $0x1c8] sm:$0xff]
        %v830 = vld [vmem:[%s713 + $0x1d0] sm:$0xf]
        %v831 = vld [vmem:[%s713 + $0x1d4] sm:$0xff]
        %v832 = vld [vmem:[%s713 + $0x1dc] sm:$0xf]
        %v833 = vld [vmem:[%s713 + $0x1e0] sm:$0xff]
        %v834 = vld [vmem:[%s713 + $0x1e8] sm:$0xf]
        %v835 = vld [vmem:[%s713 + $0x1ec] sm:$0xff]
        %v836 = vld [vmem:[%s713 + $0x1f4] sm:$0xf]
        %v837 = vld [vmem:[%s713 + $0x1f8] sm:$0xff]
        %v838 = vld [vmem:[%s713 + $0x200] sm:$0xf]
        %v839 = vld [vmem:[%s713 + $0x204] sm:$0xff]
        %v840 = vld [vmem:[%s713 + $0x20c] sm:$0xf]
        %v841 = vld [vmem:[%s713 + $0x210] sm:$0xff]
        %v842 = vld [vmem:[%s713 + $0x218] sm:$0xf]
        %v843 = vld [vmem:[%s713 + $0x21c] sm:$0xff]
        %v844 = vld [vmem:[%s713 + $0x224] sm:$0xf]
        %v845 = vld [vmem:[%s713 + $0x228] sm:$0xff]
        %v846 = vld [vmem:[%s713 + $0x230] sm:$0xf]
        %v847 = vld [vmem:[%s713 + $0x234] sm:$0xff]
        %v848 = vld [vmem:[%s713 + $0x23c] sm:$0xf]
        %v849 = vld [vmem:[%s713 + $0x240] sm:$0xff]
        %v850 = vld [vmem:[%s713 + $0x248] sm:$0xf]
        %v851 = vld [vmem:[%s713 + $0x24c] sm:$0xff]
        %v852 = vld [vmem:[%s713 + $0x254] sm:$0xf]
        %v853 = vld [vmem:[%s713 + $0x258] sm:$0xff]
        %v854 = vld [vmem:[%s713 + $0x260] sm:$0xf]
        %v855 = vld [vmem:[%s713 + $0x264] sm:$0xff]
        %v856 = vld [vmem:[%s713 + $0x26c] sm:$0xf]
        %v857 = vld [vmem:[%s713 + $0x270] sm:$0xff]
        %v858 = vld [vmem:[%s713 + $0x278] sm:$0xf]
        %v859 = vld [vmem:[%s713 + $0x27c] sm:$0xff]
        %v860 = vld [vmem:[%s713 + $0x284] sm:$0xf]
        %v861 = vld [vmem:[%s713 + $0x288] sm:$0xff]
        %v862 = vld [vmem:[%s713 + $0x290] sm:$0xf]
        %v863 = vld [vmem:[%s713 + $0x294] sm:$0xff]
        %v864 = vld [vmem:[%s713 + $0x29c] sm:$0xf]
        %v865 = vld [vmem:[%s713 + $0x2a0] sm:$0xff]
        %v866 = vld [vmem:[%s713 + $0x2a8] sm:$0xf]
        %v867 = vld [vmem:[%s713 + $0x2ac] sm:$0xff]
        %v868 = vld [vmem:[%s713 + $0x2b4] sm:$0xf]
        %v869 = vld [vmem:[%s713 + $0x2b8] sm:$0xff]
        %v870 = vld [vmem:[%s713 + $0x2c0] sm:$0xf]
        %v871 = vld [vmem:[%s713 + $0x2c4] sm:$0xff]
        %v872 = vld [vmem:[%s713 + $0x2cc] sm:$0xf]
        %v873 = vld [vmem:[%s713 + $0x2d0] sm:$0xff]
        %v874 = vld [vmem:[%s713 + $0x2d8] sm:$0xf]
        %v875 = vld [vmem:[%s713 + $0x2dc] sm:$0xff]
        %v876 = vld [vmem:[%s713 + $0x2e4] sm:$0xf]
        %v877 = vld [vmem:[%s713 + $0x2e8] sm:$0xff]
        %v878 = vld [vmem:[%s713 + $0x2f0] sm:$0xf]
        %v879 = vld [vmem:[%s713 + $0x2f4] sm:$0xff]
        %v880 = vld [vmem:[%s713 + $0x2fc] sm:$0xf]
        %v881 = vld [vmem:[%s713 + $0x300] sm:$0xff]
        %v882 = vld [vmem:[%s713 + $0x308] sm:$0xf]
        %v883 = vld [vmem:[%s713 + $0x30c] sm:$0xff]
        %v884 = vld [vmem:[%s713 + $0x314] sm:$0xf]
        %v885 = vld [vmem:[%s713 + $0x318] sm:$0xff]
        %v886 = vld [vmem:[%s713 + $0x320] sm:$0xf]
        %v887 = vld [vmem:[%s713 + $0x324] sm:$0xff]
        %v888 = vld [vmem:[%s713 + $0x32c] sm:$0xf]
        %v889 = vld [vmem:[%s713 + $0x330] sm:$0xff]
        %v890 = vld [vmem:[%s713 + $0x338] sm:$0xf]
        %v891 = vld [vmem:[%s713 + $0x33c] sm:$0xff]
        %v892 = vld [vmem:[%s713 + $0x344] sm:$0xf]
        %v893 = vld [vmem:[%s713 + $0x348] sm:$0xff]
        %v894 = vld [vmem:[%s713 + $0x350] sm:$0xf]
        %v895 = vld [vmem:[%s713 + $0x354] sm:$0xff]
        %v896 = vld [vmem:[%s713 + $0x35c] sm:$0xf]
        %v897 = vld [vmem:[%s713 + $0x360] sm:$0xff]
        %v898 = vld [vmem:[%s713 + $0x368] sm:$0xf]
        %v899 = vld [vmem:[%s713 + $0x36c] sm:$0xff]
        %v900 = vld [vmem:[%s713 + $0x374] sm:$0xf]
        %v901 = vld [vmem:[%s713 + $0x378] sm:$0xff]
        %v902 = vld [vmem:[%s713 + $0x380] sm:$0xf]
        %v903 = vld [vmem:[%s713 + $0x384] sm:$0xff]
        %v904 = vld [vmem:[%s713 + $0x38c] sm:$0xf]
        %v905 = vld [vmem:[%s713 + $0x390] sm:$0xff]
        %v906 = vld [vmem:[%s713 + $0x398] sm:$0xf]
        %v907 = vld [vmem:[%s713 + $0x39c] sm:$0xff]
        %v908 = vld [vmem:[%s713 + $0x3a4] sm:$0xf]
        %v909 = vld [vmem:[%s713 + $0x3a8] sm:$0xff]
        %v910 = vld [vmem:[%s713 + $0x3b0] sm:$0xf]
        %v911 = vld [vmem:[%s713 + $0x3b4] sm:$0xff]
        %v912 = vld [vmem:[%s713 + $0x3bc] sm:$0xf]
        %v913 = vld [vmem:[%s713 + $0x3c0] sm:$0xff]
        %v914 = vld [vmem:[%s713 + $0x3c8] sm:$0xf]
        %v915 = vld [vmem:[%s713 + $0x3cc] sm:$0xff]
        %v916 = vld [vmem:[%s713 + $0x3d4] sm:$0xf]
        %v917 = vld [vmem:[%s713 + $0x3d8] sm:$0xff]
        %v918 = vld [vmem:[%s713 + $0x3e0] sm:$0xf]
        %v919 = vld [vmem:[%s713 + $0x3e4] sm:$0xff]
        %v920 = vld [vmem:[%s713 + $0x3ec] sm:$0xf]
        %v921 = vld [vmem:[%s713 + $0x3f0] sm:$0xff]
        %v922 = vld [vmem:[%s713 + $0x3f8] sm:$0xf]
        %v923 = vld [vmem:[%s713 + $0x3fc] sm:$0xff]
        %v924 = vld [vmem:[%s713 + $0x404] sm:$0xf]
        %v925 = vld [vmem:[%s713 + $0x408] sm:$0xff]
        %v926 = vld [vmem:[%s713 + $0x410] sm:$0xf]
        %v927 = vld [vmem:[%s713 + $0x414] sm:$0xff]
        %v928 = vld [vmem:[%s713 + $0x41c] sm:$0xf]
        %v929 = vld [vmem:[%s713 + $0x420] sm:$0xff]
        %v930 = vld [vmem:[%s713 + $0x428] sm:$0xf]
        %v931 = vld [vmem:[%s713 + $0x42c] sm:$0xff]
        %v932 = vld [vmem:[%s713 + $0x434] sm:$0xf]
        %v933 = vld [vmem:[%s713 + $0x438] sm:$0xff]
        %v934 = vld [vmem:[%s713 + $0x440] sm:$0xf]
        %v935 = vld [vmem:[%s713 + $0x444] sm:$0xff]
        %v936 = vld [vmem:[%s713 + $0x44c] sm:$0xf]
        %v937 = vld [vmem:[%s713 + $0x450] sm:$0xff]
        %v938 = vld [vmem:[%s713 + $0x458] sm:$0xf]
        %v939 = vld [vmem:[%s713 + $0x45c] sm:$0xff]
        %v940 = vld [vmem:[%s713 + $0x464] sm:$0xf]
        %v941 = vld [vmem:[%s713 + $0x468] sm:$0xff]
        %v942 = vld [vmem:[%s713 + $0x470] sm:$0xf]
        %v943 = vld [vmem:[%s713 + $0x474] sm:$0xff]
        %v944 = vld [vmem:[%s713 + $0x47c] sm:$0xf]
        %v945 = vld [vmem:[%s713 + $0x480] sm:$0xff]
        %v946 = vld [vmem:[%s713 + $0x488] sm:$0xf]
        %v947 = vld [vmem:[%s713 + $0x48c] sm:$0xff]
        %v948 = vld [vmem:[%s713 + $0x494] sm:$0xf]
        %v949 = vld [vmem:[%s713 + $0x498] sm:$0xff]
        %v950 = vld [vmem:[%s713 + $0x4a0] sm:$0xf]
        %v951 = vld [vmem:[%s713 + $0x4a4] sm:$0xff]
        %v952 = vld [vmem:[%s713 + $0x4ac] sm:$0xf]
        %v953 = vld [vmem:[%s713 + $0x4b0] sm:$0xff]
        %v954 = vld [vmem:[%s713 + $0x4b8] sm:$0xf]
        %v955 = vld [vmem:[%s713 + $0x4bc] sm:$0xff]
        %v956 = vld [vmem:[%s713 + $0x4c4] sm:$0xf]
        %v957 = vld [vmem:[%s713 + $0x4c8] sm:$0xff]
        %v958 = vld [vmem:[%s713 + $0x4d0] sm:$0xf]
        %v959 = vld [vmem:[%s713 + $0x4d4] sm:$0xff]
        %v960 = vld [vmem:[%s713 + $0x4dc] sm:$0xf]
        %v961 = vld [vmem:[%s713 + $0x4e0] sm:$0xff]
        %v962 = vld [vmem:[%s713 + $0x4e8] sm:$0xf]
        %v963 = vld [vmem:[%s713 + $0x4ec] sm:$0xff]
        %v964 = vld [vmem:[%s713 + $0x4f4] sm:$0xf]
        %v965 = vld [vmem:[%s713 + $0x4f8] sm:$0xff]
        %v966 = vld [vmem:[%s713 + $0x500] sm:$0xf]
        %v967 = vld [vmem:[%s713 + $0x504] sm:$0xff]
        %v968 = vld [vmem:[%s713 + $0x50c] sm:$0xf]
        %v969 = vld [vmem:[%s713 + $0x510] sm:$0xff]
        %v970 = vld [vmem:[%s713 + $0x518] sm:$0xf]
        %v971 = vld [vmem:[%s713 + $0x51c] sm:$0xff]
        %v972 = vld [vmem:[%s713 + $0x524] sm:$0xf]
        %v973 = vld [vmem:[%s713 + $0x528] sm:$0xff]
        %v974 = vld [vmem:[%s713 + $0x530] sm:$0xf]
        %v975 = vld [vmem:[%s713 + $0x534] sm:$0xff]
        %v976 = vld [vmem:[%s713 + $0x53c] sm:$0xf]
        %v977 = vld [vmem:[%s713 + $0x540] sm:$0xff]
        %v978 = vld [vmem:[%s713 + $0x548] sm:$0xf]
        %v979 = vld [vmem:[%s713 + $0x54c] sm:$0xff]
        %v980 = vld [vmem:[%s713 + $0x554] sm:$0xf]
        %v981 = vld [vmem:[%s713 + $0x558] sm:$0xff]
        %v982 = vld [vmem:[%s713 + $0x560] sm:$0xf]
        %v983 = vld [vmem:[%s713 + $0x564] sm:$0xff]
        %v984 = vld [vmem:[%s713 + $0x56c] sm:$0xf]
        %v985 = vld [vmem:[%s713 + $0x570] sm:$0xff]
        %v986 = vld [vmem:[%s713 + $0x578] sm:$0xf]
        %v987 = vld [vmem:[%s713 + $0x57c] sm:$0xff]
        %v988 = vld [vmem:[%s713 + $0x584] sm:$0xf]
        %v989 = vld [vmem:[%s713 + $0x588] sm:$0xff]
        %v990 = vld [vmem:[%s713 + $0x590] sm:$0xf]
        %v991 = vld [vmem:[%s713 + $0x594] sm:$0xff]
        %v992 = vld [vmem:[%s713 + $0x59c] sm:$0xf]
        %v993 = vld [vmem:[%s713 + $0x5a0] sm:$0xff]
        %v994 = vld [vmem:[%s713 + $0x5a8] sm:$0xf]
        %v995 = vld [vmem:[%s713 + $0x5ac] sm:$0xff]
        %v996 = vld [vmem:[%s713 + $0x5b4] sm:$0xf]
        %v997 = vld [vmem:[%s713 + $0x5b8] sm:$0xff]
        %v998 = vld [vmem:[%s713 + $0x5c0] sm:$0xf]
        %v999 = vld [vmem:[%s713 + $0x5c4] sm:$0xff]
        %v1000 = vld [vmem:[%s713 + $0x5cc] sm:$0xf]
        %v1001 = vld [vmem:[%s713 + $0x5d0] sm:$0xff]
        %v1002 = vld [vmem:[%s713 + $0x5d8] sm:$0xf]
        %v1003 = vld [vmem:[%s713 + $0x5dc] sm:$0xff]
        %v1004 = vld [vmem:[%s713 + $0x5e4] sm:$0xf]
        %v1005 = vld [vmem:[%s713 + $0x5e8] sm:$0xff]
        %v1006 = vld [vmem:[%s713 + $0x5f0] sm:$0xf]
        %v1007 = vld [vmem:[%s713 + $0x5f4] sm:$0xff]
        %v1008 = vld [vmem:[%s713 + $0x5fc] sm:$0xf]
        %v1009 = vld [vmem:[%s1] sm:$0xf]
        %v1010 = vld [vmem:[%s1 + $0x4] sm:$0xf]
        %v1011 = vld [vmem:[%s1 + $0x8] sm:$0xf]
        %v1012 = vld [vmem:[%s1 + $0xc] sm:$0xf]
        %v1013 = vld [vmem:[%s1 + $0x10] sm:$0xf]
        %v1014 = vld [vmem:[%s1 + $0x14] sm:$0xf]
        %v1015 = vld [vmem:[%s1 + $0x18] sm:$0xf]
        %v1016 = vld [vmem:[%s1 + $0x1c] sm:$0xf]
        %v1017 = vld [vmem:[%s1 + $0x20] sm:$0xf]
        %v1018 = vld [vmem:[%s1 + $0x24] sm:$0xf]
        %v1019 = vld [vmem:[%s1 + $0x28] sm:$0xf]
        %v1020 = vld [vmem:[%s1 + $0x2c] sm:$0xf]
        %v1021 = vld [vmem:[%s1 + $0x30] sm:$0xf]
        %v1022 = vld [vmem:[%s1 + $0x34] sm:$0xf]
        %v1023 = vld [vmem:[%s1 + $0x38] sm:$0xf]
        %v1024 = vld [vmem:[%s1 + $0x3c] sm:$0xf]
        %v1025 = vld [vmem:[%s1 + $0x40] sm:$0xf]
        %v1026 = vld [vmem:[%s1 + $0x44] sm:$0xf]
        %v1027 = vld [vmem:[%s1 + $0x48] sm:$0xf]
        %v1028 = vld [vmem:[%s1 + $0x4c] sm:$0xf]
        %v1029 = vld [vmem:[%s1 + $0x50] sm:$0xf]
        %v1030 = vld [vmem:[%s1 + $0x54] sm:$0xf]
        %v1031 = vld [vmem:[%s1 + $0x58] sm:$0xf]
        %v1032 = vld [vmem:[%s1 + $0x5c] sm:$0xf]
        %v1033 = vld [vmem:[%s1 + $0x60] sm:$0xf]
        %v1034 = vld [vmem:[%s1 + $0x64] sm:$0xf]
        %v1035 = vld [vmem:[%s1 + $0x68] sm:$0xf]
        %v1036 = vld [vmem:[%s1 + $0x6c] sm:$0xf]
        %v1037 = vld [vmem:[%s1 + $0x70] sm:$0xf]
        %v1038 = vld [vmem:[%s1 + $0x74] sm:$0xf]
        %v1039 = vld [vmem:[%s1 + $0x78] sm:$0xf]
        %v1040 = vld [vmem:[%s1 + $0x7c] sm:$0xf]
        %v1041 = vld [vmem:[%s1 + $0x80] sm:$0xf]
        %v1042 = vld [vmem:[%s1 + $0x84] sm:$0xf]
        %v1043 = vld [vmem:[%s1 + $0x88] sm:$0xf]
        %v1044 = vld [vmem:[%s1 + $0x8c] sm:$0xf]
        %v1045 = vld [vmem:[%s1 + $0x90] sm:$0xf]
        %v1046 = vld [vmem:[%s1 + $0x94] sm:$0xf]
        %v1047 = vld [vmem:[%s1 + $0x98] sm:$0xf]
        %v1048 = vld [vmem:[%s1 + $0x9c] sm:$0xf]
        %v1049 = vld [vmem:[%s1 + $0xa0] sm:$0xf]
        %v1050 = vld [vmem:[%s1 + $0xa4] sm:$0xf]
        %v1051 = vld [vmem:[%s1 + $0xa8] sm:$0xf]
        %v1052 = vld [vmem:[%s1 + $0xac] sm:$0xf]
        %v1053 = vld [vmem:[%s1 + $0xb0] sm:$0xf]
        %v1054 = vld [vmem:[%s1 + $0xb4] sm:$0xf]
        %v1055 = vld [vmem:[%s1 + $0xb8] sm:$0xf]
        %v1056 = vld [vmem:[%s1 + $0xbc] sm:$0xf]
        %v1313 = vunpack.c.l.b16 %v753
        %v1314 = vunpack.c.h.b16 %v753
        %v1315 = vunpack.c.l.b16 %v754
        %v1316 = vunpack.c.l.b16 %v755
        %v1317 = vunpack.c.h.b16 %v755
        %v1318 = vunpack.c.l.b16 %v756
        %v1319 = vunpack.c.l.b16 %v757
        %v1320 = vunpack.c.h.b16 %v757
        %v1321 = vunpack.c.l.b16 %v758
        %v1322 = vunpack.c.l.b16 %v759
        %v1323 = vunpack.c.h.b16 %v759
        %v1324 = vunpack.c.l.b16 %v760
        %v1325 = vunpack.c.l.b16 %v761
        %v1326 = vunpack.c.h.b16 %v761
        %v1327 = vunpack.c.l.b16 %v762
        %v1328 = vunpack.c.l.b16 %v763
        %v1329 = vunpack.c.h.b16 %v763
        %v1330 = vunpack.c.l.b16 %v764
        %v1331 = vunpack.c.l.b16 %v765
        %v1332 = vunpack.c.h.b16 %v765
        %v1333 = vunpack.c.l.b16 %v766
        %v1334 = vunpack.c.l.b16 %v767
        %v1335 = vunpack.c.h.b16 %v767
        %v1336 = vunpack.c.l.b16 %v768
        %v1337 = vunpack.c.l.b16 %v769
        %v1338 = vunpack.c.h.b16 %v769
        %v1339 = vunpack.c.l.b16 %v770
        %v1340 = vunpack.c.l.b16 %v771
        %v1341 = vunpack.c.h.b16 %v771
        %v1342 = vunpack.c.l.b16 %v772
        %v1343 = vunpack.c.l.b16 %v773
        %v1344 = vunpack.c.h.b16 %v773
        %v1345 = vunpack.c.l.b16 %v774
        %v1346 = vunpack.c.l.b16 %v775
        %v1347 = vunpack.c.h.b16 %v775
        %v1348 = vunpack.c.l.b16 %v776
        %v1349 = vunpack.c.l.b16 %v777
        %v1350 = vunpack.c.h.b16 %v777
        %v1351 = vunpack.c.l.b16 %v778
        %v1352 = vunpack.c.l.b16 %v779
        %v1353 = vunpack.c.h.b16 %v779
        %v1354 = vunpack.c.l.b16 %v780
        %v1355 = vunpack.c.l.b16 %v781
        %v1356 = vunpack.c.h.b16 %v781
        %v1357 = vunpack.c.l.b16 %v782
        %v1358 = vunpack.c.l.b16 %v783
        %v1359 = vunpack.c.h.b16 %v783
        %v1360 = vunpack.c.l.b16 %v784
        %v1361 = vunpack.c.l.b16 %v785
        %v1362 = vunpack.c.h.b16 %v785
        %v1363 = vunpack.c.l.b16 %v786
        %v1364 = vunpack.c.l.b16 %v787
        %v1365 = vunpack.c.h.b16 %v787
        %v1366 = vunpack.c.l.b16 %v788
        %v1367 = vunpack.c.l.b16 %v789
        %v1368 = vunpack.c.h.b16 %v789
        %v1369 = vunpack.c.l.b16 %v790
        %v1370 = vunpack.c.l.b16 %v791
        %v1371 = vunpack.c.h.b16 %v791
        %v1372 = vunpack.c.l.b16 %v792
        %v1373 = vunpack.c.l.b16 %v793
        %v1374 = vunpack.c.h.b16 %v793
        %v1375 = vunpack.c.l.b16 %v794
        %v1376 = vunpack.c.l.b16 %v795
        %v1377 = vunpack.c.h.b16 %v795
        %v1378 = vunpack.c.l.b16 %v796
        %v1379 = vunpack.c.l.b16 %v797
        %v1380 = vunpack.c.h.b16 %v797
        %v1381 = vunpack.c.l.b16 %v798
        %v1382 = vunpack.c.l.b16 %v799
        %v1383 = vunpack.c.h.b16 %v799
        %v1384 = vunpack.c.l.b16 %v800
        %v1385 = vunpack.c.l.b16 %v801
        %v1386 = vunpack.c.h.b16 %v801
        %v1387 = vunpack.c.l.b16 %v802
        %v1388 = vunpack.c.l.b16 %v803
        %v1389 = vunpack.c.h.b16 %v803
        %v1390 = vunpack.c.l.b16 %v804
        %v1391 = vunpack.c.l.b16 %v805
        %v1392 = vunpack.c.h.b16 %v805
        %v1393 = vunpack.c.l.b16 %v806
        %v1394 = vunpack.c.l.b16 %v807
        %v1395 = vunpack.c.h.b16 %v807
        %v1396 = vunpack.c.l.b16 %v808
        %v1397 = vunpack.c.l.b16 %v809
        %v1398 = vunpack.c.h.b16 %v809
        %v1399 = vunpack.c.l.b16 %v810
        %v1400 = vunpack.c.l.b16 %v811
        %v1401 = vunpack.c.h.b16 %v811
        %v1402 = vunpack.c.l.b16 %v812
        %v1403 = vunpack.c.l.b16 %v813
        %v1404 = vunpack.c.h.b16 %v813
        %v1405 = vunpack.c.l.b16 %v814
        %v1406 = vunpack.c.l.b16 %v815
        %v1407 = vunpack.c.h.b16 %v815
        %v1408 = vunpack.c.l.b16 %v816
        %v1409 = vunpack.c.l.b16 %v817
        %v1410 = vunpack.c.h.b16 %v817
        %v1411 = vunpack.c.l.b16 %v818
        %v1412 = vunpack.c.l.b16 %v819
        %v1413 = vunpack.c.h.b16 %v819
        %v1414 = vunpack.c.l.b16 %v820
        %v1415 = vunpack.c.l.b16 %v821
        %v1416 = vunpack.c.h.b16 %v821
        %v1417 = vunpack.c.l.b16 %v822
        %v1418 = vunpack.c.l.b16 %v823
        %v1419 = vunpack.c.h.b16 %v823
        %v1420 = vunpack.c.l.b16 %v824
        %v1421 = vunpack.c.l.b16 %v825
        %v1422 = vunpack.c.h.b16 %v825
        %v1423 = vunpack.c.l.b16 %v826
        %v1424 = vunpack.c.l.b16 %v827
        %v1425 = vunpack.c.h.b16 %v827
        %v1426 = vunpack.c.l.b16 %v828
        %v1427 = vunpack.c.l.b16 %v829
        %v1428 = vunpack.c.h.b16 %v829
        %v1429 = vunpack.c.l.b16 %v830
        %v1430 = vunpack.c.l.b16 %v831
        %v1431 = vunpack.c.h.b16 %v831
        %v1432 = vunpack.c.l.b16 %v832
        %v1433 = vunpack.c.l.b16 %v833
        %v1434 = vunpack.c.h.b16 %v833
        %v1435 = vunpack.c.l.b16 %v834
        %v1436 = vunpack.c.l.b16 %v835
        %v1437 = vunpack.c.h.b16 %v835
        %v1438 = vunpack.c.l.b16 %v836
        %v1439 = vunpack.c.l.b16 %v837
        %v1440 = vunpack.c.h.b16 %v837
        %v1441 = vunpack.c.l.b16 %v838
        %v1442 = vunpack.c.l.b16 %v839
        %v1443 = vunpack.c.h.b16 %v839
        %v1444 = vunpack.c.l.b16 %v840
        %v1445 = vunpack.c.l.b16 %v841
        %v1446 = vunpack.c.h.b16 %v841
        %v1447 = vunpack.c.l.b16 %v842
        %v1448 = vunpack.c.l.b16 %v843
        %v1449 = vunpack.c.h.b16 %v843
        %v1450 = vunpack.c.l.b16 %v844
        %v1451 = vunpack.c.l.b16 %v845
        %v1452 = vunpack.c.h.b16 %v845
        %v1453 = vunpack.c.l.b16 %v846
        %v1454 = vunpack.c.l.b16 %v847
        %v1455 = vunpack.c.h.b16 %v847
        %v1456 = vunpack.c.l.b16 %v848
        %v1457 = vunpack.c.l.b16 %v849
        %v1458 = vunpack.c.h.b16 %v849
        %v1459 = vunpack.c.l.b16 %v850
        %v1460 = vunpack.c.l.b16 %v851
        %v1461 = vunpack.c.h.b16 %v851
        %v1462 = vunpack.c.l.b16 %v852
        %v1463 = vunpack.c.l.b16 %v853
        %v1464 = vunpack.c.h.b16 %v853
        %v1465 = vunpack.c.l.b16 %v854
        %v1466 = vunpack.c.l.b16 %v855
        %v1467 = vunpack.c.h.b16 %v855
        %v1468 = vunpack.c.l.b16 %v856
        %v1469 = vunpack.c.l.b16 %v857
        %v1470 = vunpack.c.h.b16 %v857
        %v1471 = vunpack.c.l.b16 %v858
        %v1472 = vunpack.c.l.b16 %v859
        %v1473 = vunpack.c.h.b16 %v859
        %v1474 = vunpack.c.l.b16 %v860
        %v1475 = vunpack.c.l.b16 %v861
        %v1476 = vunpack.c.h.b16 %v861
        %v1477 = vunpack.c.l.b16 %v862
        %v1478 = vunpack.c.l.b16 %v863
        %v1479 = vunpack.c.h.b16 %v863
        %v1480 = vunpack.c.l.b16 %v864
        %v1481 = vunpack.c.l.b16 %v865
        %v1482 = vunpack.c.h.b16 %v865
        %v1483 = vunpack.c.l.b16 %v866
        %v1484 = vunpack.c.l.b16 %v867
        %v1485 = vunpack.c.h.b16 %v867
        %v1486 = vunpack.c.l.b16 %v868
        %v1487 = vunpack.c.l.b16 %v869
        %v1488 = vunpack.c.h.b16 %v869
        %v1489 = vunpack.c.l.b16 %v870
        %v1490 = vunpack.c.l.b16 %v871
        %v1491 = vunpack.c.h.b16 %v871
        %v1492 = vunpack.c.l.b16 %v872
        %v1493 = vunpack.c.l.b16 %v873
        %v1494 = vunpack.c.h.b16 %v873
        %v1495 = vunpack.c.l.b16 %v874
        %v1496 = vunpack.c.l.b16 %v875
        %v1497 = vunpack.c.h.b16 %v875
        %v1498 = vunpack.c.l.b16 %v876
        %v1499 = vunpack.c.l.b16 %v877
        %v1500 = vunpack.c.h.b16 %v877
        %v1501 = vunpack.c.l.b16 %v878
        %v1502 = vunpack.c.l.b16 %v879
        %v1503 = vunpack.c.h.b16 %v879
        %v1504 = vunpack.c.l.b16 %v880
        %v1505 = vunpack.c.l.b16 %v881
        %v1506 = vunpack.c.h.b16 %v881
        %v1507 = vunpack.c.l.b16 %v882
        %v1508 = vunpack.c.l.b16 %v883
        %v1509 = vunpack.c.h.b16 %v883
        %v1510 = vunpack.c.l.b16 %v884
        %v1511 = vunpack.c.l.b16 %v885
        %v1512 = vunpack.c.h.b16 %v885
        %v1513 = vunpack.c.l.b16 %v886
        %v1514 = vunpack.c.l.b16 %v887
        %v1515 = vunpack.c.h.b16 %v887
        %v1516 = vunpack.c.l.b16 %v888
        %v1517 = vunpack.c.l.b16 %v889
        %v1518 = vunpack.c.h.b16 %v889
        %v1519 = vunpack.c.l.b16 %v890
        %v1520 = vunpack.c.l.b16 %v891
        %v1521 = vunpack.c.h.b16 %v891
        %v1522 = vunpack.c.l.b16 %v892
        %v1523 = vunpack.c.l.b16 %v893
        %v1524 = vunpack.c.h.b16 %v893
        %v1525 = vunpack.c.l.b16 %v894
        %v1526 = vunpack.c.l.b16 %v895
        %v1527 = vunpack.c.h.b16 %v895
        %v1528 = vunpack.c.l.b16 %v896
        %v1529 = vunpack.c.l.b16 %v897
        %v1530 = vunpack.c.h.b16 %v897
        %v1531 = vunpack.c.l.b16 %v898
        %v1532 = vunpack.c.l.b16 %v899
        %v1533 = vunpack.c.h.b16 %v899
        %v1534 = vunpack.c.l.b16 %v900
        %v1535 = vunpack.c.l.b16 %v901
        %v1536 = vunpack.c.h.b16 %v901
        %v1537 = vunpack.c.l.b16 %v902
        %v1538 = vunpack.c.l.b16 %v903
        %v1539 = vunpack.c.h.b16 %v903
        %v1540 = vunpack.c.l.b16 %v904
        %v1541 = vunpack.c.l.b16 %v905
        %v1542 = vunpack.c.h.b16 %v905
        %v1543 = vunpack.c.l.b16 %v906
        %v1544 = vunpack.c.l.b16 %v907
        %v1545 = vunpack.c.h.b16 %v907
        %v1546 = vunpack.c.l.b16 %v908
        %v1547 = vunpack.c.l.b16 %v909
        %v1548 = vunpack.c.h.b16 %v909
        %v1549 = vunpack.c.l.b16 %v910
        %v1550 = vunpack.c.l.b16 %v911
        %v1551 = vunpack.c.h.b16 %v911
        %v1552 = vunpack.c.l.b16 %v912
        %v1553 = vunpack.c.l.b16 %v913
        %v1554 = vunpack.c.h.b16 %v913
        %v1555 = vunpack.c.l.b16 %v914
        %v1556 = vunpack.c.l.b16 %v915
        %v1557 = vunpack.c.h.b16 %v915
        %v1558 = vunpack.c.l.b16 %v916
        %v1559 = vunpack.c.l.b16 %v917
        %v1560 = vunpack.c.h.b16 %v917
        %v1561 = vunpack.c.l.b16 %v918
        %v1562 = vunpack.c.l.b16 %v919
        %v1563 = vunpack.c.h.b16 %v919
        %v1564 = vunpack.c.l.b16 %v920
        %v1565 = vunpack.c.l.b16 %v921
        %v1566 = vunpack.c.h.b16 %v921
        %v1567 = vunpack.c.l.b16 %v922
        %v1568 = vunpack.c.l.b16 %v923
        %v1569 = vunpack.c.h.b16 %v923
        %v1570 = vunpack.c.l.b16 %v924
        %v1571 = vunpack.c.l.b16 %v925
        %v1572 = vunpack.c.h.b16 %v925
        %v1573 = vunpack.c.l.b16 %v926
        %v1574 = vunpack.c.l.b16 %v927
        %v1575 = vunpack.c.h.b16 %v927
        %v1576 = vunpack.c.l.b16 %v928
        %v1577 = vunpack.c.l.b16 %v929
        %v1578 = vunpack.c.h.b16 %v929
        %v1579 = vunpack.c.l.b16 %v930
        %v1580 = vunpack.c.l.b16 %v931
        %v1581 = vunpack.c.h.b16 %v931
        %v1582 = vunpack.c.l.b16 %v932
        %v1583 = vunpack.c.l.b16 %v933
        %v1584 = vunpack.c.h.b16 %v933
        %v1585 = vunpack.c.l.b16 %v934
        %v1586 = vunpack.c.l.b16 %v935
        %v1587 = vunpack.c.h.b16 %v935
        %v1588 = vunpack.c.l.b16 %v936
        %v1589 = vunpack.c.l.b16 %v937
        %v1590 = vunpack.c.h.b16 %v937
        %v1591 = vunpack.c.l.b16 %v938
        %v1592 = vunpack.c.l.b16 %v939
        %v1593 = vunpack.c.h.b16 %v939
        %v1594 = vunpack.c.l.b16 %v940
        %v1595 = vunpack.c.l.b16 %v941
        %v1596 = vunpack.c.h.b16 %v941
        %v1597 = vunpack.c.l.b16 %v942
        %v1598 = vunpack.c.l.b16 %v943
        %v1599 = vunpack.c.h.b16 %v943
        %v1600 = vunpack.c.l.b16 %v944
        %v1601 = vunpack.c.l.b16 %v945
        %v1602 = vunpack.c.h.b16 %v945
        %v1603 = vunpack.c.l.b16 %v946
        %v1604 = vunpack.c.l.b16 %v947
        %v1605 = vunpack.c.h.b16 %v947
        %v1606 = vunpack.c.l.b16 %v948
        %v1607 = vunpack.c.l.b16 %v949
        %v1608 = vunpack.c.h.b16 %v949
        %v1609 = vunpack.c.l.b16 %v950
        %v1610 = vunpack.c.l.b16 %v951
        %v1611 = vunpack.c.h.b16 %v951
        %v1612 = vunpack.c.l.b16 %v952
        %v1613 = vunpack.c.l.b16 %v953
        %v1614 = vunpack.c.h.b16 %v953
        %v1615 = vunpack.c.l.b16 %v954
        %v1616 = vunpack.c.l.b16 %v955
        %v1617 = vunpack.c.h.b16 %v955
        %v1618 = vunpack.c.l.b16 %v956
        %v1619 = vunpack.c.l.b16 %v957
        %v1620 = vunpack.c.h.b16 %v957
        %v1621 = vunpack.c.l.b16 %v958
        %v1622 = vunpack.c.l.b16 %v959
        %v1623 = vunpack.c.h.b16 %v959
        %v1624 = vunpack.c.l.b16 %v960
        %v1625 = vunpack.c.l.b16 %v961
        %v1626 = vunpack.c.h.b16 %v961
        %v1627 = vunpack.c.l.b16 %v962
        %v1628 = vunpack.c.l.b16 %v963
        %v1629 = vunpack.c.h.b16 %v963
        %v1630 = vunpack.c.l.b16 %v964
        %v1631 = vunpack.c.l.b16 %v965
        %v1632 = vunpack.c.h.b16 %v965
        %v1633 = vunpack.c.l.b16 %v966
        %v1634 = vunpack.c.l.b16 %v967
        %v1635 = vunpack.c.h.b16 %v967
        %v1636 = vunpack.c.l.b16 %v968
        %v1637 = vunpack.c.l.b16 %v969
        %v1638 = vunpack.c.h.b16 %v969
        %v1639 = vunpack.c.l.b16 %v970
        %v1640 = vunpack.c.l.b16 %v971
        %v1641 = vunpack.c.h.b16 %v971
        %v1642 = vunpack.c.l.b16 %v972
        %v1643 = vunpack.c.l.b16 %v973
        %v1644 = vunpack.c.h.b16 %v973
        %v1645 = vunpack.c.l.b16 %v974
        %v1646 = vunpack.c.l.b16 %v975
        %v1647 = vunpack.c.h.b16 %v975
        %v1648 = vunpack.c.l.b16 %v976
        %v1649 = vunpack.c.l.b16 %v977
        %v1650 = vunpack.c.h.b16 %v977
        %v1651 = vunpack.c.l.b16 %v978
        %v1652 = vunpack.c.l.b16 %v979
        %v1653 = vunpack.c.h.b16 %v979
        %v1654 = vunpack.c.l.b16 %v980
        %v1655 = vunpack.c.l.b16 %v981
        %v1656 = vunpack.c.h.b16 %v981
        %v1657 = vunpack.c.l.b16 %v982
        %v1658 = vunpack.c.l.b16 %v983
        %v1659 = vunpack.c.h.b16 %v983
        %v1660 = vunpack.c.l.b16 %v984
        %v1661 = vunpack.c.l.b16 %v985
        %v1662 = vunpack.c.h.b16 %v985
        %v1663 = vunpack.c.l.b16 %v986
        %v1664 = vunpack.c.l.b16 %v987
        %v1665 = vunpack.c.h.b16 %v987
        %v1666 = vunpack.c.l.b16 %v988
        %v1667 = vunpack.c.l.b16 %v989
        %v1668 = vunpack.c.h.b16 %v989
        %v1669 = vunpack.c.l.b16 %v990
        %v1670 = vunpack.c.l.b16 %v991
        %v1671 = vunpack.c.h.b16 %v991
        %v1672 = vunpack.c.l.b16 %v992
        %v1673 = vunpack.c.l.b16 %v993
        %v1674 = vunpack.c.h.b16 %v993
        %v1675 = vunpack.c.l.b16 %v994
        %v1676 = vunpack.c.l.b16 %v995
        %v1677 = vunpack.c.h.b16 %v995
        %v1678 = vunpack.c.l.b16 %v996
        %v1679 = vunpack.c.l.b16 %v997
        %v1680 = vunpack.c.h.b16 %v997
        %v1681 = vunpack.c.l.b16 %v998
        %v1682 = vunpack.c.l.b16 %v999
        %v1683 = vunpack.c.h.b16 %v999
        %v1684 = vunpack.c.l.b16 %v1000
        %v1685 = vunpack.c.l.b16 %v1001
        %v1686 = vunpack.c.h.b16 %v1001
        %v1687 = vunpack.c.l.b16 %v1002
        %v1688 = vunpack.c.l.b16 %v1003
        %v1689 = vunpack.c.h.b16 %v1003
        %v1690 = vunpack.c.l.b16 %v1004
        %v1691 = vunpack.c.l.b16 %v1005
        %v1692 = vunpack.c.h.b16 %v1005
        %v1693 = vunpack.c.l.b16 %v1006
        %v1694 = vunpack.c.l.b16 %v1007
        %v1695 = vunpack.c.h.b16 %v1007
        %v1696 = vunpack.c.l.b16 %v1008
        %v1697 = vpack.c.b16 %v1316, %v1313
        %v1698 = vpack.c.b16 %v1317, %v1314
        %v1699 = vpack.c.b16 %v1318, %v1315
        %v1700 = vpack.c.b16 %v1322, %v1319
        %v1701 = vpack.c.b16 %v1323, %v1320
        %v1702 = vpack.c.b16 %v1324, %v1321
        %v1703 = vpack.c.b16 %v1328, %v1325
        %v1704 = vpack.c.b16 %v1329, %v1326
        %v1705 = vpack.c.b16 %v1330, %v1327
        %v1706 = vpack.c.b16 %v1334, %v1331
        %v1707 = vpack.c.b16 %v1335, %v1332
        %v1708 = vpack.c.b16 %v1336, %v1333
        %v1709 = vpack.c.b16 %v1340, %v1337
        %v1710 = vpack.c.b16 %v1341, %v1338
        %v1711 = vpack.c.b16 %v1342, %v1339
        %v1712 = vpack.c.b16 %v1346, %v1343
        %v1713 = vpack.c.b16 %v1347, %v1344
        %v1714 = vpack.c.b16 %v1348, %v1345
        %v1715 = vpack.c.b16 %v1352, %v1349
        %v1716 = vpack.c.b16 %v1353, %v1350
        %v1717 = vpack.c.b16 %v1354, %v1351
        %v1718 = vpack.c.b16 %v1358, %v1355
        %v1719 = vpack.c.b16 %v1359, %v1356
        %v1720 = vpack.c.b16 %v1360, %v1357
        %v1721 = vpack.c.b16 %v1364, %v1361
        %v1722 = vpack.c.b16 %v1365, %v1362
        %v1723 = vpack.c.b16 %v1366, %v1363
        %v1724 = vpack.c.b16 %v1370, %v1367
        %v1725 = vpack.c.b16 %v1371, %v1368
        %v1726 = vpack.c.b16 %v1372, %v1369
        %v1727 = vpack.c.b16 %v1376, %v1373
        %v1728 = vpack.c.b16 %v1377, %v1374
        %v1729 = vpack.c.b16 %v1378, %v1375
        %v1730 = vpack.c.b16 %v1382, %v1379
        %v1731 = vpack.c.b16 %v1383, %v1380
        %v1732 = vpack.c.b16 %v1384, %v1381
        %v1733 = vpack.c.b16 %v1388, %v1385
        %v1734 = vpack.c.b16 %v1389, %v1386
        %v1735 = vpack.c.b16 %v1390, %v1387
        %v1736 = vpack.c.b16 %v1394, %v1391
        %v1737 = vpack.c.b16 %v1395, %v1392
        %v1738 = vpack.c.b16 %v1396, %v1393
        %v1739 = vpack.c.b16 %v1400, %v1397
        %v1740 = vpack.c.b16 %v1401, %v1398
        %v1741 = vpack.c.b16 %v1402, %v1399
        %v1742 = vpack.c.b16 %v1406, %v1403
        %v1743 = vpack.c.b16 %v1407, %v1404
        %v1744 = vpack.c.b16 %v1408, %v1405
        %v1745 = vpack.c.b16 %v1412, %v1409
        %v1746 = vpack.c.b16 %v1413, %v1410
        %v1747 = vpack.c.b16 %v1414, %v1411
        %v1748 = vpack.c.b16 %v1418, %v1415
        %v1749 = vpack.c.b16 %v1419, %v1416
        %v1750 = vpack.c.b16 %v1420, %v1417
        %v1751 = vpack.c.b16 %v1424, %v1421
        %v1752 = vpack.c.b16 %v1425, %v1422
        %v1753 = vpack.c.b16 %v1426, %v1423
        %v1754 = vpack.c.b16 %v1430, %v1427
        %v1755 = vpack.c.b16 %v1431, %v1428
        %v1756 = vpack.c.b16 %v1432, %v1429
        %v1757 = vpack.c.b16 %v1436, %v1433
        %v1758 = vpack.c.b16 %v1437, %v1434
        %v1759 = vpack.c.b16 %v1438, %v1435
        %v1760 = vpack.c.b16 %v1442, %v1439
        %v1761 = vpack.c.b16 %v1443, %v1440
        %v1762 = vpack.c.b16 %v1444, %v1441
        %v1763 = vpack.c.b16 %v1448, %v1445
        %v1764 = vpack.c.b16 %v1449, %v1446
        %v1765 = vpack.c.b16 %v1450, %v1447
        %v1766 = vpack.c.b16 %v1454, %v1451
        %v1767 = vpack.c.b16 %v1455, %v1452
        %v1768 = vpack.c.b16 %v1456, %v1453
        %v1769 = vpack.c.b16 %v1460, %v1457
        %v1770 = vpack.c.b16 %v1461, %v1458
        %v1771 = vpack.c.b16 %v1462, %v1459
        %v1772 = vpack.c.b16 %v1466, %v1463
        %v1773 = vpack.c.b16 %v1467, %v1464
        %v1774 = vpack.c.b16 %v1468, %v1465
        %v1775 = vpack.c.b16 %v1472, %v1469
        %v1776 = vpack.c.b16 %v1473, %v1470
        %v1777 = vpack.c.b16 %v1474, %v1471
        %v1778 = vpack.c.b16 %v1478, %v1475
        %v1779 = vpack.c.b16 %v1479, %v1476
        %v1780 = vpack.c.b16 %v1480, %v1477
        %v1781 = vpack.c.b16 %v1484, %v1481
        %v1782 = vpack.c.b16 %v1485, %v1482
        %v1783 = vpack.c.b16 %v1486, %v1483
        %v1784 = vpack.c.b16 %v1490, %v1487
        %v1785 = vpack.c.b16 %v1491, %v1488
        %v1786 = vpack.c.b16 %v1492, %v1489
        %v1787 = vpack.c.b16 %v1496, %v1493
        %v1788 = vpack.c.b16 %v1497, %v1494
        %v1789 = vpack.c.b16 %v1498, %v1495
        %v1790 = vpack.c.b16 %v1502, %v1499
        %v1791 = vpack.c.b16 %v1503, %v1500
        %v1792 = vpack.c.b16 %v1504, %v1501
        %v1793 = vpack.c.b16 %v1508, %v1505
        %v1794 = vpack.c.b16 %v1509, %v1506
        %v1795 = vpack.c.b16 %v1510, %v1507
        %v1796 = vpack.c.b16 %v1514, %v1511
        %v1797 = vpack.c.b16 %v1515, %v1512
        %v1798 = vpack.c.b16 %v1516, %v1513
        %v1799 = vpack.c.b16 %v1520, %v1517
        %v1800 = vpack.c.b16 %v1521, %v1518
        %v1801 = vpack.c.b16 %v1522, %v1519
        %v1802 = vpack.c.b16 %v1526, %v1523
        %v1803 = vpack.c.b16 %v1527, %v1524
        %v1804 = vpack.c.b16 %v1528, %v1525
        %v1805 = vpack.c.b16 %v1532, %v1529
        %v1806 = vpack.c.b16 %v1533, %v1530
        %v1807 = vpack.c.b16 %v1534, %v1531
        %v1808 = vpack.c.b16 %v1538, %v1535
        %v1809 = vpack.c.b16 %v1539, %v1536
        %v1810 = vpack.c.b16 %v1540, %v1537
        %v1811 = vpack.c.b16 %v1544, %v1541
        %v1812 = vpack.c.b16 %v1545, %v1542
        %v1813 = vpack.c.b16 %v1546, %v1543
        %v1814 = vpack.c.b16 %v1550, %v1547
        %v1815 = vpack.c.b16 %v1551, %v1548
        %v1816 = vpack.c.b16 %v1552, %v1549
        %v1817 = vpack.c.b16 %v1556, %v1553
        %v1818 = vpack.c.b16 %v1557, %v1554
        %v1819 = vpack.c.b16 %v1558, %v1555
        %v1820 = vpack.c.b16 %v1562, %v1559
        %v1821 = vpack.c.b16 %v1563, %v1560
        %v1822 = vpack.c.b16 %v1564, %v1561
        %v1823 = vpack.c.b16 %v1568, %v1565
        %v1824 = vpack.c.b16 %v1569, %v1566
        %v1825 = vpack.c.b16 %v1570, %v1567
        %v1826 = vpack.c.b16 %v1574, %v1571
        %v1827 = vpack.c.b16 %v1575, %v1572
        %v1828 = vpack.c.b16 %v1576, %v1573
        %v1829 = vpack.c.b16 %v1580, %v1577
        %v1830 = vpack.c.b16 %v1581, %v1578
        %v1831 = vpack.c.b16 %v1582, %v1579
        %v1832 = vpack.c.b16 %v1586, %v1583
        %v1833 = vpack.c.b16 %v1587, %v1584
        %v1834 = vpack.c.b16 %v1588, %v1585
        %v1835 = vpack.c.b16 %v1592, %v1589
        %v1836 = vpack.c.b16 %v1593, %v1590
        %v1837 = vpack.c.b16 %v1594, %v1591
        %v1838 = vpack.c.b16 %v1598, %v1595
        %v1839 = vpack.c.b16 %v1599, %v1596
        %v1840 = vpack.c.b16 %v1600, %v1597
        %v1841 = vpack.c.b16 %v1604, %v1601
        %v1842 = vpack.c.b16 %v1605, %v1602
        %v1843 = vpack.c.b16 %v1606, %v1603
        %v1844 = vpack.c.b16 %v1610, %v1607
        %v1845 = vpack.c.b16 %v1611, %v1608
        %v1846 = vpack.c.b16 %v1612, %v1609
        %v1847 = vpack.c.b16 %v1616, %v1613
        %v1848 = vpack.c.b16 %v1617, %v1614
        %v1849 = vpack.c.b16 %v1618, %v1615
        %v1850 = vpack.c.b16 %v1622, %v1619
        %v1851 = vpack.c.b16 %v1623, %v1620
        %v1852 = vpack.c.b16 %v1624, %v1621
        %v1853 = vpack.c.b16 %v1628, %v1625
        %v1854 = vpack.c.b16 %v1629, %v1626
        %v1855 = vpack.c.b16 %v1630, %v1627
        %v1856 = vpack.c.b16 %v1634, %v1631
        %v1857 = vpack.c.b16 %v1635, %v1632
        %v1858 = vpack.c.b16 %v1636, %v1633
        %v1859 = vpack.c.b16 %v1640, %v1637
        %v1860 = vpack.c.b16 %v1641, %v1638
        %v1861 = vpack.c.b16 %v1642, %v1639
        %v1862 = vpack.c.b16 %v1646, %v1643
        %v1863 = vpack.c.b16 %v1647, %v1644
        %v1864 = vpack.c.b16 %v1648, %v1645
        %v1865 = vpack.c.b16 %v1652, %v1649
        %v1866 = vpack.c.b16 %v1653, %v1650
        %v1867 = vpack.c.b16 %v1654, %v1651
        %v1868 = vpack.c.b16 %v1658, %v1655
        %v1869 = vpack.c.b16 %v1659, %v1656
        %v1870 = vpack.c.b16 %v1660, %v1657
        %v1871 = vpack.c.b16 %v1664, %v1661
        %v1872 = vpack.c.b16 %v1665, %v1662
        %v1873 = vpack.c.b16 %v1666, %v1663
        %v1874 = vpack.c.b16 %v1670, %v1667
        %v1875 = vpack.c.b16 %v1671, %v1668
        %v1876 = vpack.c.b16 %v1672, %v1669
        %v1877 = vpack.c.b16 %v1676, %v1673
        %v1878 = vpack.c.b16 %v1677, %v1674
        %v1879 = vpack.c.b16 %v1678, %v1675
        %v1880 = vpack.c.b16 %v1682, %v1679
        %v1881 = vpack.c.b16 %v1683, %v1680
        %v1882 = vpack.c.b16 %v1684, %v1681
        %v1883 = vpack.c.b16 %v1688, %v1685
        %v1884 = vpack.c.b16 %v1689, %v1686
        %v1885 = vpack.c.b16 %v1690, %v1687
        %v1886 = vpack.c.b16 %v1694, %v1691
        %v1887 = vpack.c.b16 %v1695, %v1692
        %v1888 = vpack.c.b16 %v1696, %v1693
        %v2129 = vunpack.c.l.b16 %v1009
        %v2130 = vunpack.c.l.b16 %v1010
        %v2131 = vunpack.c.l.b16 %v1011
        %v2132 = vunpack.c.l.b16 %v1012
        %v2133 = vunpack.c.l.b16 %v1013
        %v2134 = vunpack.c.l.b16 %v1014
        %v2135 = vunpack.c.l.b16 %v1015
        %v2136 = vunpack.c.l.b16 %v1016
        %v2137 = vunpack.c.l.b16 %v1017
        %v2138 = vunpack.c.l.b16 %v1018
        %v2139 = vunpack.c.l.b16 %v1019
        %v2140 = vunpack.c.l.b16 %v1020
        %v2141 = vunpack.c.l.b16 %v1021
        %v2142 = vunpack.c.l.b16 %v1022
        %v2143 = vunpack.c.l.b16 %v1023
        %v2144 = vunpack.c.l.b16 %v1024
        %v2145 = vunpack.c.l.b16 %v1025
        %v2146 = vunpack.c.l.b16 %v1026
        %v2147 = vunpack.c.l.b16 %v1027
        %v2148 = vunpack.c.l.b16 %v1028
        %v2149 = vunpack.c.l.b16 %v1029
        %v2150 = vunpack.c.l.b16 %v1030
        %v2151 = vunpack.c.l.b16 %v1031
        %v2152 = vunpack.c.l.b16 %v1032
        %v2153 = vunpack.c.l.b16 %v1033
        %v2154 = vunpack.c.l.b16 %v1034
        %v2155 = vunpack.c.l.b16 %v1035
        %v2156 = vunpack.c.l.b16 %v1036
        %v2157 = vunpack.c.l.b16 %v1037
        %v2158 = vunpack.c.l.b16 %v1038
        %v2159 = vunpack.c.l.b16 %v1039
        %v2160 = vunpack.c.l.b16 %v1040
        %v2161 = vunpack.c.l.b16 %v1041
        %v2162 = vunpack.c.l.b16 %v1042
        %v2163 = vunpack.c.l.b16 %v1043
        %v2164 = vunpack.c.l.b16 %v1044
        %v2165 = vunpack.c.l.b16 %v1045
        %v2166 = vunpack.c.l.b16 %v1046
        %v2167 = vunpack.c.l.b16 %v1047
        %v2168 = vunpack.c.l.b16 %v1048
        %v2169 = vunpack.c.l.b16 %v1049
        %v2170 = vunpack.c.l.b16 %v1050
        %v2171 = vunpack.c.l.b16 %v1051
        %v2172 = vunpack.c.l.b16 %v1052
        %v2173 = vunpack.c.l.b16 %v1053
        %v2174 = vunpack.c.l.b16 %v1054
        %v2175 = vunpack.c.l.b16 %v1055
        %v2176 = vunpack.c.l.b16 %v1056
        %v2177 = vpack.c.b16 %v2130, %v2129
        %v2178 = vpack.c.b16 %v2132, %v2131
        %v2179 = vpack.c.b16 %v2134, %v2133
        %v2180 = vpack.c.b16 %v2136, %v2135
        %v2181 = vpack.c.b16 %v2138, %v2137
        %v2182 = vpack.c.b16 %v2140, %v2139
        %v2183 = vpack.c.b16 %v2142, %v2141
        %v2184 = vpack.c.b16 %v2144, %v2143
        %v2185 = vpack.c.b16 %v2146, %v2145
        %v2186 = vpack.c.b16 %v2148, %v2147
        %v2187 = vpack.c.b16 %v2150, %v2149
        %v2188 = vpack.c.b16 %v2152, %v2151
        %v2189 = vpack.c.b16 %v2154, %v2153
        %v2190 = vpack.c.b16 %v2156, %v2155
        %v2191 = vpack.c.b16 %v2158, %v2157
        %v2192 = vpack.c.b16 %v2160, %v2159
        %v2193 = vpack.c.b16 %v2162, %v2161
        %v2194 = vpack.c.b16 %v2164, %v2163
        %v2195 = vpack.c.b16 %v2166, %v2165
        %v2196 = vpack.c.b16 %v2168, %v2167
        %v2197 = vpack.c.b16 %v2170, %v2169
        %v2198 = vpack.c.b16 %v2172, %v2171
        %v2199 = vpack.c.b16 %v2174, %v2173
        %v2200 = vpack.c.b16 %v2176, %v2175
        %2225 = vmatprep.subr.bf16.mxu0 0
        %2226 = vmatpush1.bf16.msra.mxu0 %v2177
        %2227 = vmatprep.subr.bf16.mxu0 0
        %2228 = vmatpush1.bf16.msra.mxu0 %v2178
        %2229 = vmatprep.subr.bf16.mxu0 0
        %2230 = vmatpush1.bf16.msra.mxu0 %v2179
        %2231 = vmatprep.subr.bf16.mxu0 0
        %2232 = vmatpush1.bf16.msra.mxu0 %v2180
        %2233 = vmatprep.subr.bf16.mxu0 0
        %2234 = vmatpush1.bf16.msra.mxu0 %v2181
        %2235 = vmatprep.subr.bf16.mxu0 0
        %2236 = vmatpush1.bf16.msra.mxu0 %v2182
        %2237 = vmatprep.subr.bf16.mxu0 0
        %2238 = vmatpush1.bf16.msra.mxu0 %v2183
        %2239 = vmatprep.subr.bf16.mxu0 0
        %2240 = vmatpush1.bf16.msra.mxu0 %v2184
        %2241 = vmatprep.subr.bf16.mxu0 0
        %2242 = vmatpush1.bf16.msra.mxu0 %v2185
        %2243 = vmatprep.subr.bf16.mxu0 0
        %2244 = vmatpush1.bf16.msra.mxu0 %v2186
        %2245 = vmatprep.subr.bf16.mxu0 0
        %2246 = vmatpush1.bf16.msra.mxu0 %v2187
        %2247 = vmatprep.subr.bf16.mxu0 0
        %2248 = vmatpush1.bf16.msra.mxu0 %v2188
        %2249 = vmatprep.subr.bf16.mxu0 0
        %2250 = vmatpush1.bf16.msra.mxu0 %v2189
        %2251 = vmatprep.subr.bf16.mxu0 0
        %2252 = vmatpush1.bf16.msra.mxu0 %v2190
        %2253 = vmatprep.subr.bf16.mxu0 0
        %2254 = vmatpush1.bf16.msra.mxu0 %v2191
        %2255 = vmatprep.subr.bf16.mxu0 0
        %2256 = vmatpush1.bf16.msra.mxu0 %v2192
        %2257 = vmatprep.mubr.bf16.mxu0 %v1698
        %2258 = vmatmul.mubr.bf16.gmra.mrb[0].mxu0 %v1697
        %v2259 = vpop.f32.mrb[0].mxu0
        %v2260 = vadd.f32 0.0, %v2259
        %v2261 = vpop.f32.mrb[0].mxu0
        %v2262 = vpop.f32.mrb[0].mxu0
        %v2263 = vadd.f32 0.0, %v2262
        %v2264 = vpop.f32.mrb[0].mxu0
        %2265 = vmatprep.mubr.bf16.mxu0 %v1701
        %2266 = vmatmul.mubr.bf16.gmra.mrb[0].mxu0 %v1700
        %v2267 = vpop.f32.mrb[0].mxu0
        %v2268 = vadd.f32 0.0, %v2267
        %v2269 = vpop.f32.mrb[0].mxu0
        %v2270 = vpop.f32.mrb[0].mxu0
        %v2271 = vadd.f32 0.0, %v2270
        %v2272 = vpop.f32.mrb[0].mxu0
        %2273 = vmatprep.mubr.bf16.mxu0 %v1704
        %2274 = vmatmul.mubr.bf16.gmra.mrb[0].mxu0 %v1703
        %v2275 = vpop.f32.mrb[0].mxu0
        %v2276 = vadd.f32 0.0, %v2275
        %v2277 = vpop.f32.mrb[0].mxu0
        %v2278 = vpop.f32.mrb[0].mxu0
        %v2279 = vadd.f32 0.0, %v2278
        %v2280 = vpop.f32.mrb[0].mxu0
        %2281 = vmatprep.mubr.bf16.mxu0 %v1707
        %2282 = vmatmul.mubr.bf16.gmra.mrb[0].mxu0 %v1706
        %v2283 = vpop.f32.mrb[0].mxu0
        %v2284 = vadd.f32 0.0, %v2283
        %v2285 = vpop.f32.mrb[0].mxu0
        %v2286 = vpop.f32.mrb[0].mxu0
        %v2287 = vadd.f32 0.0, %v2286
        %v2288 = vpop.f32.mrb[0].mxu0
        %2289 = vmatprep.mubr.bf16.mxu0 %v1710
        %2290 = vmatmul.mubr.bf16.gmra.mrb[0].mxu0 %v1709
        %v2291 = vpop.f32.mrb[0].mxu0
        %v2292 = vadd.f32 0.0, %v2291
        %v2293 = vpop.f32.mrb[0].mxu0
        %v2294 = vpop.f32.mrb[0].mxu0
        %v2295 = vadd.f32 0.0, %v2294
        %v2296 = vpop.f32.mrb[0].mxu0
        %2297 = vmatprep.mubr.bf16.mxu0 %v1713
        %2298 = vmatmul.mubr.bf16.gmra.mrb[0].mxu0 %v1712
        %v2299 = vpop.f32.mrb[0].mxu0
        %v2300 = vadd.f32 0.0, %v2299
        %v2301 = vpop.f32.mrb[0].mxu0
        %v2302 = vpop.f32.mrb[0].mxu0
        %v2303 = vadd.f32 0.0, %v2302
        %v2304 = vpop.f32.mrb[0].mxu0
        %2305 = vmatprep.mubr.bf16.mxu0 %v1716
        %2306 = vmatmul.mubr.bf16.gmra.mrb[0].mxu0 %v1715
        %v2307 = vpop.f32.mrb[0].mxu0
        %v2308 = vadd.f32 0.0, %v2307
        %v2309 = vpop.f32.mrb[0].mxu0
        %v2310 = vpop.f32.mrb[0].mxu0
        %v2311 = vadd.f32 0.0, %v2310
        %v2312 = vpop.f32.mrb[0].mxu0
        %2313 = vmatprep.mubr.bf16.mxu0 %v1719
        %2314 = vmatmul.mubr.bf16.gmra.mrb[0].mxu0 %v1718
        %v2315 = vpop.f32.mrb[0].mxu0
        %v2316 = vadd.f32 0.0, %v2315
        %v2317 = vpop.f32.mrb[0].mxu0
        %v2318 = vpop.f32.mrb[0].mxu0
        %v2319 = vadd.f32 0.0, %v2318
        %v2320 = vpop.f32.mrb[0].mxu0
        %2321 = vmatprep.mubr.bf16.mxu0 %v1722
        %2322 = vmatmul.mubr.bf16.gmra.mrb[0].mxu0 %v1721
        %v2323 = vpop.f32.mrb[0].mxu0
        %v2324 = vadd.f32 0.0, %v2323
        %v2325 = vpop.f32.mrb[0].mxu0
        %v2326 = vpop.f32.mrb[0].mxu0
        %v2327 = vadd.f32 0.0, %v2326
        %v2328 = vpop.f32.mrb[0].mxu0
        %2329 = vmatprep.mubr.bf16.mxu0 %v1725
        %2330 = vmatmul.mubr.bf16.gmra.mrb[0].mxu0 %v1724
        %v2331 = vpop.f32.mrb[0].mxu0
        %v2332 = vadd.f32 0.0, %v2331
        %v2333 = vpop.f32.mrb[0].mxu0
        %v2334 = vpop.f32.mrb[0].mxu0
        %v2335 = vadd.f32 0.0, %v2334
        %v2336 = vpop.f32.mrb[0].mxu0
        %2337 = vmatprep.mubr.bf16.mxu0 %v1728
        %2338 = vmatmul.mubr.bf16.gmra.mrb[0].mxu0 %v1727
        %v2339 = vpop.f32.mrb[0].mxu0
        %v2340 = vadd.f32 0.0, %v2339
        %v2341 = vpop.f32.mrb[0].mxu0
        %v2342 = vpop.f32.mrb[0].mxu0
        %v2343 = vadd.f32 0.0, %v2342
        %v2344 = vpop.f32.mrb[0].mxu0
        %2345 = vmatprep.mubr.bf16.mxu0 %v1731
        %2346 = vmatmul.mubr.bf16.gmra.mrb[0].mxu0 %v1730
        %v2347 = vpop.f32.mrb[0].mxu0
        %v2348 = vadd.f32 0.0, %v2347
        %v2349 = vpop.f32.mrb[0].mxu0
        %v2350 = vpop.f32.mrb[0].mxu0
        %v2351 = vadd.f32 0.0, %v2350
        %v2352 = vpop.f32.mrb[0].mxu0
        %2353 = vmatprep.mubr.bf16.mxu0 %v1734
        %2354 = vmatmul.mubr.bf16.gmra.mrb[0].mxu0 %v1733
        %v2355 = vpop.f32.mrb[0].mxu0
        %v2356 = vadd.f32 0.0, %v2355
        %v2357 = vpop.f32.mrb[0].mxu0
        %v2358 = vpop.f32.mrb[0].mxu0
        %v2359 = vadd.f32 0.0, %v2358
        %v2360 = vpop.f32.mrb[0].mxu0
        %2361 = vmatprep.mubr.bf16.mxu0 %v1737
        %2362 = vmatmul.mubr.bf16.gmra.mrb[0].mxu0 %v1736
        %v2363 = vpop.f32.mrb[0].mxu0
        %v2364 = vadd.f32 0.0, %v2363
        %v2365 = vpop.f32.mrb[0].mxu0
        %v2366 = vpop.f32.mrb[0].mxu0
        %v2367 = vadd.f32 0.0, %v2366
        %v2368 = vpop.f32.mrb[0].mxu0
        %2369 = vmatprep.mubr.bf16.mxu0 %v1740
        %2370 = vmatmul.mubr.bf16.gmra.mrb[0].mxu0 %v1739
        %v2371 = vpop.f32.mrb[0].mxu0
        %v2372 = vadd.f32 0.0, %v2371
        %v2373 = vpop.f32.mrb[0].mxu0
        %v2374 = vpop.f32.mrb[0].mxu0
        %v2375 = vadd.f32 0.0, %v2374
        %v2376 = vpop.f32.mrb[0].mxu0
        %2377 = vmatprep.mubr.bf16.mxu0 %v1743
        %2378 = vmatmul.mubr.bf16.gmra.mrb[0].mxu0 %v1742
        %v2379 = vpop.f32.mrb[0].mxu0
        %v2380 = vadd.f32 0.0, %v2379
        %v2381 = vpop.f32.mrb[0].mxu0
        %v2382 = vpop.f32.mrb[0].mxu0
        %v2383 = vadd.f32 0.0, %v2382
        %v2384 = vpop.f32.mrb[0].mxu0
        %2385 = vmatprep.mubr.bf16.mxu0 %v1746
        %2386 = vmatmul.mubr.bf16.gmra.mrb[0].mxu0 %v1745
        %v2387 = vpop.f32.mrb[0].mxu0
        %v2388 = vadd.f32 0.0, %v2387
        %v2389 = vpop.f32.mrb[0].mxu0
        %v2390 = vpop.f32.mrb[0].mxu0
        %v2391 = vadd.f32 0.0, %v2390
        %v2392 = vpop.f32.mrb[0].mxu0
        %2393 = vmatprep.mubr.bf16.mxu0 %v1749
        %2394 = vmatmul.mubr.bf16.gmra.mrb[0].mxu0 %v1748
        %v2395 = vpop.f32.mrb[0].mxu0
        %v2396 = vadd.f32 0.0, %v2395
        %v2397 = vpop.f32.mrb[0].mxu0
        %v2398 = vpop.f32.mrb[0].mxu0
        %v2399 = vadd.f32 0.0, %v2398
        %v2400 = vpop.f32.mrb[0].mxu0
        %2401 = vmatprep.mubr.bf16.mxu0 %v1752
        %2402 = vmatmul.mubr.bf16.gmra.mrb[0].mxu0 %v1751
        %v2403 = vpop.f32.mrb[0].mxu0
        %v2404 = vadd.f32 0.0, %v2403
        %v2405 = vpop.f32.mrb[0].mxu0
        %v2406 = vpop.f32.mrb[0].mxu0
        %v2407 = vadd.f32 0.0, %v2406
        %v2408 = vpop.f32.mrb[0].mxu0
        %2409 = vmatprep.mubr.bf16.mxu0 %v1755
        %2410 = vmatmul.mubr.bf16.gmra.mrb[0].mxu0 %v1754
        %v2411 = vpop.f32.mrb[0].mxu0
        %v2412 = vadd.f32 0.0, %v2411
        %v2413 = vpop.f32.mrb[0].mxu0
        %v2414 = vpop.f32.mrb[0].mxu0
        %v2415 = vadd.f32 0.0, %v2414
        %v2416 = vpop.f32.mrb[0].mxu0
        %2417 = vmatprep.mubr.bf16.mxu0 %v1758
        %2418 = vmatmul.mubr.bf16.gmra.mrb[0].mxu0 %v1757
        %v2419 = vpop.f32.mrb[0].mxu0
        %v2420 = vadd.f32 0.0, %v2419
        %v2421 = vpop.f32.mrb[0].mxu0
        %v2422 = vpop.f32.mrb[0].mxu0
        %v2423 = vadd.f32 0.0, %v2422
        %v2424 = vpop.f32.mrb[0].mxu0
        %2425 = vmatprep.mubr.bf16.mxu0 %v1761
        %2426 = vmatmul.mubr.bf16.gmra.mrb[0].mxu0 %v1760
        %v2427 = vpop.f32.mrb[0].mxu0
        %v2428 = vadd.f32 0.0, %v2427
        %v2429 = vpop.f32.mrb[0].mxu0
        %v2430 = vpop.f32.mrb[0].mxu0
        %v2431 = vadd.f32 0.0, %v2430
        %v2432 = vpop.f32.mrb[0].mxu0
        %2433 = vmatprep.mubr.bf16.mxu0 %v1764
        %2434 = vmatmul.mubr.bf16.gmra.mrb[0].mxu0 %v1763
        %v2435 = vpop.f32.mrb[0].mxu0
        %v2436 = vadd.f32 0.0, %v2435
        %v2437 = vpop.f32.mrb[0].mxu0
        %v2438 = vpop.f32.mrb[0].mxu0
        %v2439 = vadd.f32 0.0, %v2438
        %v2440 = vpop.f32.mrb[0].mxu0
        %2441 = vmatprep.mubr.bf16.mxu0 %v1767
        %2442 = vmatmul.mubr.bf16.gmra.mrb[0].mxu0 %v1766
        %v2443 = vpop.f32.mrb[0].mxu0
        %v2444 = vadd.f32 0.0, %v2443
        %v2445 = vpop.f32.mrb[0].mxu0
        %v2446 = vpop.f32.mrb[0].mxu0
        %v2447 = vadd.f32 0.0, %v2446
        %v2448 = vpop.f32.mrb[0].mxu0
        %2449 = vmatprep.mubr.bf16.mxu0 %v1770
        %2450 = vmatmul.mubr.bf16.gmra.mrb[0].mxu0 %v1769
        %v2451 = vpop.f32.mrb[0].mxu0
        %v2452 = vadd.f32 0.0, %v2451
        %v2453 = vpop.f32.mrb[0].mxu0
        %v2454 = vpop.f32.mrb[0].mxu0
        %v2455 = vadd.f32 0.0, %v2454
        %v2456 = vpop.f32.mrb[0].mxu0
        %2457 = vmatprep.mubr.bf16.mxu0 %v1773
        %2458 = vmatmul.mubr.bf16.gmra.mrb[0].mxu0 %v1772
        %v2459 = vpop.f32.mrb[0].mxu0
        %v2460 = vadd.f32 0.0, %v2459
        %v2461 = vpop.f32.mrb[0].mxu0
        %v2462 = vpop.f32.mrb[0].mxu0
        %v2463 = vadd.f32 0.0, %v2462
        %v2464 = vpop.f32.mrb[0].mxu0
        %2465 = vmatprep.mubr.bf16.mxu0 %v1776
        %2466 = vmatmul.mubr.bf16.gmra.mrb[0].mxu0 %v1775
        %v2467 = vpop.f32.mrb[0].mxu0
        %v2468 = vadd.f32 0.0, %v2467
        %v2469 = vpop.f32.mrb[0].mxu0
        %v2470 = vpop.f32.mrb[0].mxu0
        %v2471 = vadd.f32 0.0, %v2470
        %v2472 = vpop.f32.mrb[0].mxu0
        %2473 = vmatprep.mubr.bf16.mxu0 %v1779
        %2474 = vmatmul.mubr.bf16.gmra.mrb[0].mxu0 %v1778
        %v2475 = vpop.f32.mrb[0].mxu0
        %v2476 = vadd.f32 0.0, %v2475
        %v2477 = vpop.f32.mrb[0].mxu0
        %v2478 = vpop.f32.mrb[0].mxu0
        %v2479 = vadd.f32 0.0, %v2478
        %v2480 = vpop.f32.mrb[0].mxu0
        %2481 = vmatprep.mubr.bf16.mxu0 %v1782
        %2482 = vmatmul.mubr.bf16.gmra.mrb[0].mxu0 %v1781
        %v2483 = vpop.f32.mrb[0].mxu0
        %v2484 = vadd.f32 0.0, %v2483
        %v2485 = vpop.f32.mrb[0].mxu0
        %v2486 = vpop.f32.mrb[0].mxu0
        %v2487 = vadd.f32 0.0, %v2486
        %v2488 = vpop.f32.mrb[0].mxu0
        %2489 = vmatprep.mubr.bf16.mxu0 %v1785
        %2490 = vmatmul.mubr.bf16.gmra.mrb[0].mxu0 %v1784
        %v2491 = vpop.f32.mrb[0].mxu0
        %v2492 = vadd.f32 0.0, %v2491
        %v2493 = vpop.f32.mrb[0].mxu0
        %v2494 = vpop.f32.mrb[0].mxu0
        %v2495 = vadd.f32 0.0, %v2494
        %v2496 = vpop.f32.mrb[0].mxu0
        %2497 = vmatprep.mubr.bf16.mxu0 %v1788
        %2498 = vmatmul.mubr.bf16.gmra.mrb[0].mxu0 %v1787
        %v2499 = vpop.f32.mrb[0].mxu0
        %v2500 = vadd.f32 0.0, %v2499
        %v2501 = vpop.f32.mrb[0].mxu0
        %v2502 = vpop.f32.mrb[0].mxu0
        %v2503 = vadd.f32 0.0, %v2502
        %v2504 = vpop.f32.mrb[0].mxu0
        %2505 = vmatprep.mubr.bf16.mxu0 %v1791
        %2506 = vmatmul.mubr.bf16.gmra.mrb[0].mxu0 %v1790
        %v2507 = vpop.f32.mrb[0].mxu0
        %v2508 = vadd.f32 0.0, %v2507
        %v2509 = vpop.f32.mrb[0].mxu0
        %v2510 = vpop.f32.mrb[0].mxu0
        %v2511 = vadd.f32 0.0, %v2510
        %v2512 = vpop.f32.mrb[0].mxu0
        %2513 = vmatprep.mubr.bf16.mxu0 %v1794
        %2514 = vmatmul.mubr.bf16.gmra.mrb[0].mxu0 %v1793
        %v2515 = vpop.f32.mrb[0].mxu0
        %v2516 = vadd.f32 0.0, %v2515
        %v2517 = vpop.f32.mrb[0].mxu0
        %v2518 = vpop.f32.mrb[0].mxu0
        %v2519 = vadd.f32 0.0, %v2518
        %v2520 = vpop.f32.mrb[0].mxu0
        %2521 = vmatprep.mubr.bf16.mxu0 %v1797
        %2522 = vmatmul.mubr.bf16.gmra.mrb[0].mxu0 %v1796
        %v2523 = vpop.f32.mrb[0].mxu0
        %v2524 = vadd.f32 0.0, %v2523
        %v2525 = vpop.f32.mrb[0].mxu0
        %v2526 = vpop.f32.mrb[0].mxu0
        %v2527 = vadd.f32 0.0, %v2526
        %v2528 = vpop.f32.mrb[0].mxu0
        %2529 = vmatprep.mubr.bf16.mxu0 %v1800
        %2530 = vmatmul.mubr.bf16.gmra.mrb[0].mxu0 %v1799
        %v2531 = vpop.f32.mrb[0].mxu0
        %v2532 = vadd.f32 0.0, %v2531
        %v2533 = vpop.f32.mrb[0].mxu0
        %v2534 = vpop.f32.mrb[0].mxu0
        %v2535 = vadd.f32 0.0, %v2534
        %v2536 = vpop.f32.mrb[0].mxu0
        %2537 = vmatprep.mubr.bf16.mxu0 %v1803
        %2538 = vmatmul.mubr.bf16.gmra.mrb[0].mxu0 %v1802
        %v2539 = vpop.f32.mrb[0].mxu0
        %v2540 = vadd.f32 0.0, %v2539
        %v2541 = vpop.f32.mrb[0].mxu0
        %v2542 = vpop.f32.mrb[0].mxu0
        %v2543 = vadd.f32 0.0, %v2542
        %v2544 = vpop.f32.mrb[0].mxu0
        %2545 = vmatprep.mubr.bf16.mxu0 %v1806
        %2546 = vmatmul.mubr.bf16.gmra.mrb[0].mxu0 %v1805
        %v2547 = vpop.f32.mrb[0].mxu0
        %v2548 = vadd.f32 0.0, %v2547
        %v2549 = vpop.f32.mrb[0].mxu0
        %v2550 = vpop.f32.mrb[0].mxu0
        %v2551 = vadd.f32 0.0, %v2550
        %v2552 = vpop.f32.mrb[0].mxu0
        %2553 = vmatprep.mubr.bf16.mxu0 %v1809
        %2554 = vmatmul.mubr.bf16.gmra.mrb[0].mxu0 %v1808
        %v2555 = vpop.f32.mrb[0].mxu0
        %v2556 = vadd.f32 0.0, %v2555
        %v2557 = vpop.f32.mrb[0].mxu0
        %v2558 = vpop.f32.mrb[0].mxu0
        %v2559 = vadd.f32 0.0, %v2558
        %v2560 = vpop.f32.mrb[0].mxu0
        %2561 = vmatprep.mubr.bf16.mxu0 %v1812
        %2562 = vmatmul.mubr.bf16.gmra.mrb[0].mxu0 %v1811
        %v2563 = vpop.f32.mrb[0].mxu0
        %v2564 = vadd.f32 0.0, %v2563
        %v2565 = vpop.f32.mrb[0].mxu0
        %v2566 = vpop.f32.mrb[0].mxu0
        %v2567 = vadd.f32 0.0, %v2566
        %v2568 = vpop.f32.mrb[0].mxu0
        %2569 = vmatprep.mubr.bf16.mxu0 %v1815
        %2570 = vmatmul.mubr.bf16.gmra.mrb[0].mxu0 %v1814
        %v2571 = vpop.f32.mrb[0].mxu0
        %v2572 = vadd.f32 0.0, %v2571
        %v2573 = vpop.f32.mrb[0].mxu0
        %v2574 = vpop.f32.mrb[0].mxu0
        %v2575 = vadd.f32 0.0, %v2574
        %v2576 = vpop.f32.mrb[0].mxu0
        %2577 = vmatprep.mubr.bf16.mxu0 %v1818
        %2578 = vmatmul.mubr.bf16.gmra.mrb[0].mxu0 %v1817
        %v2579 = vpop.f32.mrb[0].mxu0
        %v2580 = vadd.f32 0.0, %v2579
        %v2581 = vpop.f32.mrb[0].mxu0
        %v2582 = vpop.f32.mrb[0].mxu0
        %v2583 = vadd.f32 0.0, %v2582
        %v2584 = vpop.f32.mrb[0].mxu0
        %2585 = vmatprep.mubr.bf16.mxu0 %v1821
        %2586 = vmatmul.mubr.bf16.gmra.mrb[0].mxu0 %v1820
        %v2587 = vpop.f32.mrb[0].mxu0
        %v2588 = vadd.f32 0.0, %v2587
        %v2589 = vpop.f32.mrb[0].mxu0
        %v2590 = vpop.f32.mrb[0].mxu0
        %v2591 = vadd.f32 0.0, %v2590
        %v2592 = vpop.f32.mrb[0].mxu0
        %2593 = vmatprep.mubr.bf16.mxu0 %v1824
        %2594 = vmatmul.mubr.bf16.gmra.mrb[0].mxu0 %v1823
        %v2595 = vpop.f32.mrb[0].mxu0
        %v2596 = vadd.f32 0.0, %v2595
        %v2597 = vpop.f32.mrb[0].mxu0
        %v2598 = vpop.f32.mrb[0].mxu0
        %v2599 = vadd.f32 0.0, %v2598
        %v2600 = vpop.f32.mrb[0].mxu0
        %2601 = vmatprep.mubr.bf16.mxu0 %v1827
        %2602 = vmatmul.mubr.bf16.gmra.mrb[0].mxu0 %v1826
        %v2603 = vpop.f32.mrb[0].mxu0
        %v2604 = vadd.f32 0.0, %v2603
        %v2605 = vpop.f32.mrb[0].mxu0
        %v2606 = vpop.f32.mrb[0].mxu0
        %v2607 = vadd.f32 0.0, %v2606
        %v2608 = vpop.f32.mrb[0].mxu0
        %2609 = vmatprep.mubr.bf16.mxu0 %v1830
        %2610 = vmatmul.mubr.bf16.gmra.mrb[0].mxu0 %v1829
        %v2611 = vpop.f32.mrb[0].mxu0
        %v2612 = vadd.f32 0.0, %v2611
        %v2613 = vpop.f32.mrb[0].mxu0
        %v2614 = vpop.f32.mrb[0].mxu0
        %v2615 = vadd.f32 0.0, %v2614
        %v2616 = vpop.f32.mrb[0].mxu0
        %2617 = vmatprep.mubr.bf16.mxu0 %v1833
        %2618 = vmatmul.mubr.bf16.gmra.mrb[0].mxu0 %v1832
        %v2619 = vpop.f32.mrb[0].mxu0
        %v2620 = vadd.f32 0.0, %v2619
        %v2621 = vpop.f32.mrb[0].mxu0
        %v2622 = vpop.f32.mrb[0].mxu0
        %v2623 = vadd.f32 0.0, %v2622
        %v2624 = vpop.f32.mrb[0].mxu0
        %2625 = vmatprep.mubr.bf16.mxu0 %v1836
        %2626 = vmatmul.mubr.bf16.gmra.mrb[0].mxu0 %v1835
        %v2627 = vpop.f32.mrb[0].mxu0
        %v2628 = vadd.f32 0.0, %v2627
        %v2629 = vpop.f32.mrb[0].mxu0
        %v2630 = vpop.f32.mrb[0].mxu0
        %v2631 = vadd.f32 0.0, %v2630
        %v2632 = vpop.f32.mrb[0].mxu0
        %2633 = vmatprep.mubr.bf16.mxu0 %v1839
        %2634 = vmatmul.mubr.bf16.gmra.mrb[0].mxu0 %v1838
        %v2635 = vpop.f32.mrb[0].mxu0
        %v2636 = vadd.f32 0.0, %v2635
        %v2637 = vpop.f32.mrb[0].mxu0
        %v2638 = vpop.f32.mrb[0].mxu0
        %v2639 = vadd.f32 0.0, %v2638
        %v2640 = vpop.f32.mrb[0].mxu0
        %2641 = vmatprep.mubr.bf16.mxu0 %v1842
        %2642 = vmatmul.mubr.bf16.gmra.mrb[0].mxu0 %v1841
        %v2643 = vpop.f32.mrb[0].mxu0
        %v2644 = vadd.f32 0.0, %v2643
        %v2645 = vpop.f32.mrb[0].mxu0
        %v2646 = vpop.f32.mrb[0].mxu0
        %v2647 = vadd.f32 0.0, %v2646
        %v2648 = vpop.f32.mrb[0].mxu0
        %2649 = vmatprep.mubr.bf16.mxu0 %v1845
        %2650 = vmatmul.mubr.bf16.gmra.mrb[0].mxu0 %v1844
        %v2651 = vpop.f32.mrb[0].mxu0
        %v2652 = vadd.f32 0.0, %v2651
        %v2653 = vpop.f32.mrb[0].mxu0
        %v2654 = vpop.f32.mrb[0].mxu0
        %v2655 = vadd.f32 0.0, %v2654
        %v2656 = vpop.f32.mrb[0].mxu0
        %2657 = vmatprep.mubr.bf16.mxu0 %v1848
        %2658 = vmatmul.mubr.bf16.gmra.mrb[0].mxu0 %v1847
        %v2659 = vpop.f32.mrb[0].mxu0
        %v2660 = vadd.f32 0.0, %v2659
        %v2661 = vpop.f32.mrb[0].mxu0
        %v2662 = vpop.f32.mrb[0].mxu0
        %v2663 = vadd.f32 0.0, %v2662
        %v2664 = vpop.f32.mrb[0].mxu0
        %2665 = vmatprep.mubr.bf16.mxu0 %v1851
        %2666 = vmatmul.mubr.bf16.gmra.mrb[0].mxu0 %v1850
        %v2667 = vpop.f32.mrb[0].mxu0
        %v2668 = vadd.f32 0.0, %v2667
        %v2669 = vpop.f32.mrb[0].mxu0
        %v2670 = vpop.f32.mrb[0].mxu0
        %v2671 = vadd.f32 0.0, %v2670
        %v2672 = vpop.f32.mrb[0].mxu0
        %2673 = vmatprep.mubr.bf16.mxu0 %v1854
        %2674 = vmatmul.mubr.bf16.gmra.mrb[0].mxu0 %v1853
        %v2675 = vpop.f32.mrb[0].mxu0
        %v2676 = vadd.f32 0.0, %v2675
        %v2677 = vpop.f32.mrb[0].mxu0
        %v2678 = vpop.f32.mrb[0].mxu0
        %v2679 = vadd.f32 0.0, %v2678
        %v2680 = vpop.f32.mrb[0].mxu0
        %2681 = vmatprep.mubr.bf16.mxu0 %v1857
        %2682 = vmatmul.mubr.bf16.gmra.mrb[0].mxu0 %v1856
        %v2683 = vpop.f32.mrb[0].mxu0
        %v2684 = vadd.f32 0.0, %v2683
        %v2685 = vpop.f32.mrb[0].mxu0
        %v2686 = vpop.f32.mrb[0].mxu0
        %v2687 = vadd.f32 0.0, %v2686
        %v2688 = vpop.f32.mrb[0].mxu0
        %2689 = vmatprep.mubr.bf16.mxu0 %v1860
        %2690 = vmatmul.mubr.bf16.gmra.mrb[0].mxu0 %v1859
        %v2691 = vpop.f32.mrb[0].mxu0
        %v2692 = vadd.f32 0.0, %v2691
        %v2693 = vpop.f32.mrb[0].mxu0
        %v2694 = vpop.f32.mrb[0].mxu0
        %v2695 = vadd.f32 0.0, %v2694
        %v2696 = vpop.f32.mrb[0].mxu0
        %2697 = vmatprep.mubr.bf16.mxu0 %v1863
        %2698 = vmatmul.mubr.bf16.gmra.mrb[0].mxu0 %v1862
        %v2699 = vpop.f32.mrb[0].mxu0
        %v2700 = vadd.f32 0.0, %v2699
        %v2701 = vpop.f32.mrb[0].mxu0
        %v2702 = vpop.f32.mrb[0].mxu0
        %v2703 = vadd.f32 0.0, %v2702
        %v2704 = vpop.f32.mrb[0].mxu0
        %2705 = vmatprep.mubr.bf16.mxu0 %v1866
        %2706 = vmatmul.mubr.bf16.gmra.mrb[0].mxu0 %v1865
        %v2707 = vpop.f32.mrb[0].mxu0
        %v2708 = vadd.f32 0.0, %v2707
        %v2709 = vpop.f32.mrb[0].mxu0
        %v2710 = vpop.f32.mrb[0].mxu0
        %v2711 = vadd.f32 0.0, %v2710
        %v2712 = vpop.f32.mrb[0].mxu0
        %2713 = vmatprep.mubr.bf16.mxu0 %v1869
        %2714 = vmatmul.mubr.bf16.gmra.mrb[0].mxu0 %v1868
        %v2715 = vpop.f32.mrb[0].mxu0
        %v2716 = vadd.f32 0.0, %v2715
        %v2717 = vpop.f32.mrb[0].mxu0
        %v2718 = vpop.f32.mrb[0].mxu0
        %v2719 = vadd.f32 0.0, %v2718
        %v2720 = vpop.f32.mrb[0].mxu0
        %2721 = vmatprep.mubr.bf16.mxu0 %v1872
        %2722 = vmatmul.mubr.bf16.gmra.mrb[0].mxu0 %v1871
        %v2723 = vpop.f32.mrb[0].mxu0
        %v2724 = vadd.f32 0.0, %v2723
        %v2725 = vpop.f32.mrb[0].mxu0
        %v2726 = vpop.f32.mrb[0].mxu0
        %v2727 = vadd.f32 0.0, %v2726
        %v2728 = vpop.f32.mrb[0].mxu0
        %2729 = vmatprep.mubr.bf16.mxu0 %v1875
        %2730 = vmatmul.mubr.bf16.gmra.mrb[0].mxu0 %v1874
        %v2731 = vpop.f32.mrb[0].mxu0
        %v2732 = vadd.f32 0.0, %v2731
        %v2733 = vpop.f32.mrb[0].mxu0
        %v2734 = vpop.f32.mrb[0].mxu0
        %v2735 = vadd.f32 0.0, %v2734
        %v2736 = vpop.f32.mrb[0].mxu0
        %2737 = vmatprep.mubr.bf16.mxu0 %v1878
        %2738 = vmatmul.mubr.bf16.gmra.mrb[0].mxu0 %v1877
        %v2739 = vpop.f32.mrb[0].mxu0
        %v2740 = vadd.f32 0.0, %v2739
        %v2741 = vpop.f32.mrb[0].mxu0
        %v2742 = vpop.f32.mrb[0].mxu0
        %v2743 = vadd.f32 0.0, %v2742
        %v2744 = vpop.f32.mrb[0].mxu0
        %2745 = vmatprep.mubr.bf16.mxu0 %v1881
        %2746 = vmatmul.mubr.bf16.gmra.mrb[0].mxu0 %v1880
        %v2747 = vpop.f32.mrb[0].mxu0
        %v2748 = vadd.f32 0.0, %v2747
        %v2749 = vpop.f32.mrb[0].mxu0
        %v2750 = vpop.f32.mrb[0].mxu0
        %v2751 = vadd.f32 0.0, %v2750
        %v2752 = vpop.f32.mrb[0].mxu0
        %2753 = vmatprep.mubr.bf16.mxu0 %v1884
        %2754 = vmatmul.mubr.bf16.gmra.mrb[0].mxu0 %v1883
        %v2755 = vpop.f32.mrb[0].mxu0
        %v2756 = vadd.f32 0.0, %v2755
        %v2757 = vpop.f32.mrb[0].mxu0
        %v2758 = vpop.f32.mrb[0].mxu0
        %v2759 = vadd.f32 0.0, %v2758
        %v2760 = vpop.f32.mrb[0].mxu0
        %2761 = vmatprep.mubr.bf16.mxu0 %v1887
        %2762 = vmatmul.mubr.bf16.gmra.mrb[0].mxu0 %v1886
        %v2763 = vpop.f32.mrb[0].mxu0
        %v2764 = vadd.f32 0.0, %v2763
        %v2765 = vpop.f32.mrb[0].mxu0
        %v2766 = vpop.f32.mrb[0].mxu0
        %v2767 = vadd.f32 0.0, %v2766
        %v2768 = vpop.f32.mrb[0].mxu0
        %2769 = vdwg.mxu0
        %2770 = vmatprep.subr.bf16.mxu0 0
        %2771 = vmatpush1.bf16.msra.mxu0 %v2193
        %2772 = vmatprep.subr.bf16.mxu0 0
        %2773 = vmatpush1.bf16.msra.mxu0 %v2194
        %2774 = vmatprep.subr.bf16.mxu0 0
        %2775 = vmatpush1.bf16.msra.mxu0 %v2195
        %2776 = vmatprep.subr.bf16.mxu0 0
        %2777 = vmatpush1.bf16.msra.mxu0 %v2196
        %2778 = vmatprep.subr.bf16.mxu0 0
        %2779 = vmatpush1.bf16.msra.mxu0 %v2197
        %2780 = vmatprep.subr.bf16.mxu0 0
        %2781 = vmatpush1.bf16.msra.mxu0 %v2198
        %2782 = vmatprep.subr.bf16.mxu0 0
        %2783 = vmatpush1.bf16.msra.mxu0 %v2199
        %2784 = vmatprep.subr.bf16.mxu0 0
        %2785 = vmatpush1.bf16.msra.mxu0 %v2200
        %2786 = vmatprep.subr.bf16.mxu0 0
        %2787 = vmatpush1.bf16.msra.mxu0 0
        %2788 = vmatprep.subr.bf16.mxu0 0
        %2789 = vmatpush1.bf16.msra.mxu0 0
        %2790 = vmatprep.subr.bf16.mxu0 0
        %2791 = vmatpush1.bf16.msra.mxu0 0
        %2792 = vmatprep.subr.bf16.mxu0 0
        %2793 = vmatpush1.bf16.msra.mxu0 0
        %2794 = vmatprep.subr.bf16.mxu0 0
        %2795 = vmatpush1.bf16.msra.mxu0 0
        %2796 = vmatprep.subr.bf16.mxu0 0
        %2797 = vmatpush1.bf16.msra.mxu0 0
        %2798 = vmatprep.subr.bf16.mxu0 0
        %2799 = vmatpush1.bf16.msra.mxu0 0
        %2800 = vmatprep.subr.bf16.mxu0 0
        %2801 = vmatpush1.bf16.msra.mxu0 0
        %2802 = vmatprep.mubr.bf16.mxu0 0
        %2803 = vmatmul.mubr.bf16.gmra.mrb[0].mxu0 %v1699
        %v2804 = vpop.f32.mrb[0].mxu0
        %v2805 = vadd.f32 %v2260, %v2804
        %v2806 = vpop.f32.mrb[0].mxu0
        %v2807 = vpop.f32.mrb[0].mxu0
        %v2808 = vadd.f32 %v2263, %v2807
        %v2809 = vpop.f32.mrb[0].mxu0
        %2810 = vmatprep.mubr.bf16.mxu0 0
        %2811 = vmatmul.mubr.bf16.gmra.mrb[0].mxu0 %v1702
        %v2812 = vpop.f32.mrb[0].mxu0
        %v2813 = vadd.f32 %v2268, %v2812
        %v2814 = vpop.f32.mrb[0].mxu0
        %v2815 = vpop.f32.mrb[0].mxu0
        %v2816 = vadd.f32 %v2271, %v2815
        %v2817 = vpop.f32.mrb[0].mxu0
        %2818 = vmatprep.mubr.bf16.mxu0 0
        %2819 = vmatmul.mubr.bf16.gmra.mrb[0].mxu0 %v1705
        %v2820 = vpop.f32.mrb[0].mxu0
        %v2821 = vadd.f32 %v2276, %v2820
        %v2822 = vpop.f32.mrb[0].mxu0
        %v2823 = vpop.f32.mrb[0].mxu0
        %v2824 = vadd.f32 %v2279, %v2823
        %v2825 = vpop.f32.mrb[0].mxu0
        %2826 = vmatprep.mubr.bf16.mxu0 0
        %2827 = vmatmul.mubr.bf16.gmra.mrb[0].mxu0 %v1708
        %v2828 = vpop.f32.mrb[0].mxu0
        %v2829 = vadd.f32 %v2284, %v2828
        %v2830 = vpop.f32.mrb[0].mxu0
        %v2831 = vpop.f32.mrb[0].mxu0
        %v2832 = vadd.f32 %v2287, %v2831
        %v2833 = vpop.f32.mrb[0].mxu0
        %2834 = vmatprep.mubr.bf16.mxu0 0
        %2835 = vmatmul.mubr.bf16.gmra.mrb[0].mxu0 %v1711
        %v2836 = vpop.f32.mrb[0].mxu0
        %v2837 = vadd.f32 %v2292, %v2836
        %v2838 = vpop.f32.mrb[0].mxu0
        %v2839 = vpop.f32.mrb[0].mxu0
        %v2840 = vadd.f32 %v2295, %v2839
        %v2841 = vpop.f32.mrb[0].mxu0
        %2842 = vmatprep.mubr.bf16.mxu0 0
        %2843 = vmatmul.mubr.bf16.gmra.mrb[0].mxu0 %v1714
        %v2844 = vpop.f32.mrb[0].mxu0
        %v2845 = vadd.f32 %v2300, %v2844
        %v2846 = vpop.f32.mrb[0].mxu0
        %v2847 = vpop.f32.mrb[0].mxu0
        %v2848 = vadd.f32 %v2303, %v2847
        %v2849 = vpop.f32.mrb[0].mxu0
        %2850 = vmatprep.mubr.bf16.mxu0 0
        %2851 = vmatmul.mubr.bf16.gmra.mrb[0].mxu0 %v1717
        %v2852 = vpop.f32.mrb[0].mxu0
        %v2853 = vadd.f32 %v2308, %v2852
        %v2854 = vpop.f32.mrb[0].mxu0
        %v2855 = vpop.f32.mrb[0].mxu0
        %v2856 = vadd.f32 %v2311, %v2855
        %v2857 = vpop.f32.mrb[0].mxu0
        %2858 = vmatprep.mubr.bf16.mxu0 0
        %2859 = vmatmul.mubr.bf16.gmra.mrb[0].mxu0 %v1720
        %v2860 = vpop.f32.mrb[0].mxu0
        %v2861 = vadd.f32 %v2316, %v2860
        %v2862 = vpop.f32.mrb[0].mxu0
        %v2863 = vpop.f32.mrb[0].mxu0
        %v2864 = vadd.f32 %v2319, %v2863
        %v2865 = vpop.f32.mrb[0].mxu0
        %2866 = vmatprep.mubr.bf16.mxu0 0
        %2867 = vmatmul.mubr.bf16.gmra.mrb[0].mxu0 %v1723
        %v2868 = vpop.f32.mrb[0].mxu0
        %v2869 = vadd.f32 %v2324, %v2868
        %v2870 = vpop.f32.mrb[0].mxu0
        %v2871 = vpop.f32.mrb[0].mxu0
        %v2872 = vadd.f32 %v2327, %v2871
        %v2873 = vpop.f32.mrb[0].mxu0
        %2874 = vmatprep.mubr.bf16.mxu0 0
        %2875 = vmatmul.mubr.bf16.gmra.mrb[0].mxu0 %v1726
        %v2876 = vpop.f32.mrb[0].mxu0
        %v2877 = vadd.f32 %v2332, %v2876
        %v2878 = vpop.f32.mrb[0].mxu0
        %v2879 = vpop.f32.mrb[0].mxu0
        %v2880 = vadd.f32 %v2335, %v2879
        %v2881 = vpop.f32.mrb[0].mxu0
        %2882 = vmatprep.mubr.bf16.mxu0 0
        %2883 = vmatmul.mubr.bf16.gmra.mrb[0].mxu0 %v1729
        %v2884 = vpop.f32.mrb[0].mxu0
        %v2885 = vadd.f32 %v2340, %v2884
        %v2886 = vpop.f32.mrb[0].mxu0
        %v2887 = vpop.f32.mrb[0].mxu0
        %v2888 = vadd.f32 %v2343, %v2887
        %v2889 = vpop.f32.mrb[0].mxu0
        %2890 = vmatprep.mubr.bf16.mxu0 0
        %2891 = vmatmul.mubr.bf16.gmra.mrb[0].mxu0 %v1732
        %v2892 = vpop.f32.mrb[0].mxu0
        %v2893 = vadd.f32 %v2348, %v2892
        %v2894 = vpop.f32.mrb[0].mxu0
        %v2895 = vpop.f32.mrb[0].mxu0
        %v2896 = vadd.f32 %v2351, %v2895
        %v2897 = vpop.f32.mrb[0].mxu0
        %2898 = vmatprep.mubr.bf16.mxu0 0
        %2899 = vmatmul.mubr.bf16.gmra.mrb[0].mxu0 %v1735
        %v2900 = vpop.f32.mrb[0].mxu0
        %v2901 = vadd.f32 %v2356, %v2900
        %v2902 = vpop.f32.mrb[0].mxu0
        %v2903 = vpop.f32.mrb[0].mxu0
        %v2904 = vadd.f32 %v2359, %v2903
        %v2905 = vpop.f32.mrb[0].mxu0
        %2906 = vmatprep.mubr.bf16.mxu0 0
        %2907 = vmatmul.mubr.bf16.gmra.mrb[0].mxu0 %v1738
        %v2908 = vpop.f32.mrb[0].mxu0
        %v2909 = vadd.f32 %v2364, %v2908
        %v2910 = vpop.f32.mrb[0].mxu0
        %v2911 = vpop.f32.mrb[0].mxu0
        %v2912 = vadd.f32 %v2367, %v2911
        %v2913 = vpop.f32.mrb[0].mxu0
        %2914 = vmatprep.mubr.bf16.mxu0 0
        %2915 = vmatmul.mubr.bf16.gmra.mrb[0].mxu0 %v1741
        %v2916 = vpop.f32.mrb[0].mxu0
        %v2917 = vadd.f32 %v2372, %v2916
        %v2918 = vpop.f32.mrb[0].mxu0
        %v2919 = vpop.f32.mrb[0].mxu0
        %v2920 = vadd.f32 %v2375, %v2919
        %v2921 = vpop.f32.mrb[0].mxu0
        %2922 = vmatprep.mubr.bf16.mxu0 0
        %2923 = vmatmul.mubr.bf16.gmra.mrb[0].mxu0 %v1744
        %v2924 = vpop.f32.mrb[0].mxu0
        %v2925 = vadd.f32 %v2380, %v2924
        %v2926 = vpop.f32.mrb[0].mxu0
        %v2927 = vpop.f32.mrb[0].mxu0
        %v2928 = vadd.f32 %v2383, %v2927
        %v2929 = vpop.f32.mrb[0].mxu0
        %2930 = vmatprep.mubr.bf16.mxu0 0
        %2931 = vmatmul.mubr.bf16.gmra.mrb[0].mxu0 %v1747
        %v2932 = vpop.f32.mrb[0].mxu0
        %v2933 = vadd.f32 %v2388, %v2932
        %v2934 = vpop.f32.mrb[0].mxu0
        %v2935 = vpop.f32.mrb[0].mxu0
        %v2936 = vadd.f32 %v2391, %v2935
        %v2937 = vpop.f32.mrb[0].mxu0
        %2938 = vmatprep.mubr.bf16.mxu0 0
        %2939 = vmatmul.mubr.bf16.gmra.mrb[0].mxu0 %v1750
        %v2940 = vpop.f32.mrb[0].mxu0
        %v2941 = vadd.f32 %v2396, %v2940
        %v2942 = vpop.f32.mrb[0].mxu0
        %v2943 = vpop.f32.mrb[0].mxu0
        %v2944 = vadd.f32 %v2399, %v2943
        %v2945 = vpop.f32.mrb[0].mxu0
        %2946 = vmatprep.mubr.bf16.mxu0 0
        %2947 = vmatmul.mubr.bf16.gmra.mrb[0].mxu0 %v1753
        %v2948 = vpop.f32.mrb[0].mxu0
        %v2949 = vadd.f32 %v2404, %v2948
        %v2950 = vpop.f32.mrb[0].mxu0
        %v2951 = vpop.f32.mrb[0].mxu0
        %v2952 = vadd.f32 %v2407, %v2951
        %v2953 = vpop.f32.mrb[0].mxu0
        %2954 = vmatprep.mubr.bf16.mxu0 0
        %2955 = vmatmul.mubr.bf16.gmra.mrb[0].mxu0 %v1756
        %v2956 = vpop.f32.mrb[0].mxu0
        %v2957 = vadd.f32 %v2412, %v2956
        %v2958 = vpop.f32.mrb[0].mxu0
        %v2959 = vpop.f32.mrb[0].mxu0
        %v2960 = vadd.f32 %v2415, %v2959
        %v2961 = vpop.f32.mrb[0].mxu0
        %2962 = vmatprep.mubr.bf16.mxu0 0
        %2963 = vmatmul.mubr.bf16.gmra.mrb[0].mxu0 %v1759
        %v2964 = vpop.f32.mrb[0].mxu0
        %v2965 = vadd.f32 %v2420, %v2964
        %v2966 = vpop.f32.mrb[0].mxu0
        %v2967 = vpop.f32.mrb[0].mxu0
        %v2968 = vadd.f32 %v2423, %v2967
        %v2969 = vpop.f32.mrb[0].mxu0
        %2970 = vmatprep.mubr.bf16.mxu0 0
        %2971 = vmatmul.mubr.bf16.gmra.mrb[0].mxu0 %v1762
        %v2972 = vpop.f32.mrb[0].mxu0
        %v2973 = vadd.f32 %v2428, %v2972
        %v2974 = vpop.f32.mrb[0].mxu0
        %v2975 = vpop.f32.mrb[0].mxu0
        %v2976 = vadd.f32 %v2431, %v2975
        %v2977 = vpop.f32.mrb[0].mxu0
        %2978 = vmatprep.mubr.bf16.mxu0 0
        %2979 = vmatmul.mubr.bf16.gmra.mrb[0].mxu0 %v1765
        %v2980 = vpop.f32.mrb[0].mxu0
        %v2981 = vadd.f32 %v2436, %v2980
        %v2982 = vpop.f32.mrb[0].mxu0
        %v2983 = vpop.f32.mrb[0].mxu0
        %v2984 = vadd.f32 %v2439, %v2983
        %v2985 = vpop.f32.mrb[0].mxu0
        %2986 = vmatprep.mubr.bf16.mxu0 0
        %2987 = vmatmul.mubr.bf16.gmra.mrb[0].mxu0 %v1768
        %v2988 = vpop.f32.mrb[0].mxu0
        %v2989 = vadd.f32 %v2444, %v2988
        %v2990 = vpop.f32.mrb[0].mxu0
        %v2991 = vpop.f32.mrb[0].mxu0
        %v2992 = vadd.f32 %v2447, %v2991
        %v2993 = vpop.f32.mrb[0].mxu0
        %2994 = vmatprep.mubr.bf16.mxu0 0
        %2995 = vmatmul.mubr.bf16.gmra.mrb[0].mxu0 %v1771
        %v2996 = vpop.f32.mrb[0].mxu0
        %v2997 = vadd.f32 %v2452, %v2996
        %v2998 = vpop.f32.mrb[0].mxu0
        %v2999 = vpop.f32.mrb[0].mxu0
        %v3000 = vadd.f32 %v2455, %v2999
        %v3001 = vpop.f32.mrb[0].mxu0
        %3002 = vmatprep.mubr.bf16.mxu0 0
        %3003 = vmatmul.mubr.bf16.gmra.mrb[0].mxu0 %v1774
        %v3004 = vpop.f32.mrb[0].mxu0
        %v3005 = vadd.f32 %v2460, %v3004
        %v3006 = vpop.f32.mrb[0].mxu0
        %v3007 = vpop.f32.mrb[0].mxu0
        %v3008 = vadd.f32 %v2463, %v3007
        %v3009 = vpop.f32.mrb[0].mxu0
        %3010 = vmatprep.mubr.bf16.mxu0 0
        %3011 = vmatmul.mubr.bf16.gmra.mrb[0].mxu0 %v1777
        %v3012 = vpop.f32.mrb[0].mxu0
        %v3013 = vadd.f32 %v2468, %v3012
        %v3014 = vpop.f32.mrb[0].mxu0
        %v3015 = vpop.f32.mrb[0].mxu0
        %v3016 = vadd.f32 %v2471, %v3015
        %v3017 = vpop.f32.mrb[0].mxu0
        %3018 = vmatprep.mubr.bf16.mxu0 0
        %3019 = vmatmul.mubr.bf16.gmra.mrb[0].mxu0 %v1780
        %v3020 = vpop.f32.mrb[0].mxu0
        %v3021 = vadd.f32 %v2476, %v3020
        %v3022 = vpop.f32.mrb[0].mxu0
        %v3023 = vpop.f32.mrb[0].mxu0
        %v3024 = vadd.f32 %v2479, %v3023
        %v3025 = vpop.f32.mrb[0].mxu0
        %3026 = vmatprep.mubr.bf16.mxu0 0
        %3027 = vmatmul.mubr.bf16.gmra.mrb[0].mxu0 %v1783
        %v3028 = vpop.f32.mrb[0].mxu0
        %v3029 = vadd.f32 %v2484, %v3028
        %v3030 = vpop.f32.mrb[0].mxu0
        %v3031 = vpop.f32.mrb[0].mxu0
        %v3032 = vadd.f32 %v2487, %v3031
        %v3033 = vpop.f32.mrb[0].mxu0
        %3034 = vmatprep.mubr.bf16.mxu0 0
        %3035 = vmatmul.mubr.bf16.gmra.mrb[0].mxu0 %v1786
        %v3036 = vpop.f32.mrb[0].mxu0
        %v3037 = vadd.f32 %v2492, %v3036
        %v3038 = vpop.f32.mrb[0].mxu0
        %v3039 = vpop.f32.mrb[0].mxu0
        %v3040 = vadd.f32 %v2495, %v3039
        %v3041 = vpop.f32.mrb[0].mxu0
        %3042 = vmatprep.mubr.bf16.mxu0 0
        %3043 = vmatmul.mubr.bf16.gmra.mrb[0].mxu0 %v1789
        %v3044 = vpop.f32.mrb[0].mxu0
        %v3045 = vadd.f32 %v2500, %v3044
        %v3046 = vpop.f32.mrb[0].mxu0
        %v3047 = vpop.f32.mrb[0].mxu0
        %v3048 = vadd.f32 %v2503, %v3047
        %v3049 = vpop.f32.mrb[0].mxu0
        %3050 = vmatprep.mubr.bf16.mxu0 0
        %3051 = vmatmul.mubr.bf16.gmra.mrb[0].mxu0 %v1792
        %v3052 = vpop.f32.mrb[0].mxu0
        %v3053 = vadd.f32 %v2508, %v3052
        %v3054 = vpop.f32.mrb[0].mxu0
        %v3055 = vpop.f32.mrb[0].mxu0
        %v3056 = vadd.f32 %v2511, %v3055
        %v3057 = vpop.f32.mrb[0].mxu0
        %3058 = vmatprep.mubr.bf16.mxu0 0
        %3059 = vmatmul.mubr.bf16.gmra.mrb[0].mxu0 %v1795
        %v3060 = vpop.f32.mrb[0].mxu0
        %v3061 = vadd.f32 %v2516, %v3060
        %v3062 = vpop.f32.mrb[0].mxu0
        %v3063 = vpop.f32.mrb[0].mxu0
        %v3064 = vadd.f32 %v2519, %v3063
        %v3065 = vpop.f32.mrb[0].mxu0
        %3066 = vmatprep.mubr.bf16.mxu0 0
        %3067 = vmatmul.mubr.bf16.gmra.mrb[0].mxu0 %v1798
        %v3068 = vpop.f32.mrb[0].mxu0
        %v3069 = vadd.f32 %v2524, %v3068
        %v3070 = vpop.f32.mrb[0].mxu0
        %v3071 = vpop.f32.mrb[0].mxu0
        %v3072 = vadd.f32 %v2527, %v3071
        %v3073 = vpop.f32.mrb[0].mxu0
        %3074 = vmatprep.mubr.bf16.mxu0 0
        %3075 = vmatmul.mubr.bf16.gmra.mrb[0].mxu0 %v1801
        %v3076 = vpop.f32.mrb[0].mxu0
        %v3077 = vadd.f32 %v2532, %v3076
        %v3078 = vpop.f32.mrb[0].mxu0
        %v3079 = vpop.f32.mrb[0].mxu0
        %v3080 = vadd.f32 %v2535, %v3079
        %v3081 = vpop.f32.mrb[0].mxu0
        %3082 = vmatprep.mubr.bf16.mxu0 0
        %3083 = vmatmul.mubr.bf16.gmra.mrb[0].mxu0 %v1804
        %v3084 = vpop.f32.mrb[0].mxu0
        %v3085 = vadd.f32 %v2540, %v3084
        %v3086 = vpop.f32.mrb[0].mxu0
        %v3087 = vpop.f32.mrb[0].mxu0
        %v3088 = vadd.f32 %v2543, %v3087
        %v3089 = vpop.f32.mrb[0].mxu0
        %3090 = vmatprep.mubr.bf16.mxu0 0
        %3091 = vmatmul.mubr.bf16.gmra.mrb[0].mxu0 %v1807
        %v3092 = vpop.f32.mrb[0].mxu0
        %v3093 = vadd.f32 %v2548, %v3092
        %v3094 = vpop.f32.mrb[0].mxu0
        %v3095 = vpop.f32.mrb[0].mxu0
        %v3096 = vadd.f32 %v2551, %v3095
        %v3097 = vpop.f32.mrb[0].mxu0
        %3098 = vmatprep.mubr.bf16.mxu0 0
        %3099 = vmatmul.mubr.bf16.gmra.mrb[0].mxu0 %v1810
        %v3100 = vpop.f32.mrb[0].mxu0
        %v3101 = vadd.f32 %v2556, %v3100
        %v3102 = vpop.f32.mrb[0].mxu0
        %v3103 = vpop.f32.mrb[0].mxu0
        %v3104 = vadd.f32 %v2559, %v3103
        %v3105 = vpop.f32.mrb[0].mxu0
        %3106 = vmatprep.mubr.bf16.mxu0 0
        %3107 = vmatmul.mubr.bf16.gmra.mrb[0].mxu0 %v1813
        %v3108 = vpop.f32.mrb[0].mxu0
        %v3109 = vadd.f32 %v2564, %v3108
        %v3110 = vpop.f32.mrb[0].mxu0
        %v3111 = vpop.f32.mrb[0].mxu0
        %v3112 = vadd.f32 %v2567, %v3111
        %v3113 = vpop.f32.mrb[0].mxu0
        %3114 = vmatprep.mubr.bf16.mxu0 0
        %3115 = vmatmul.mubr.bf16.gmra.mrb[0].mxu0 %v1816
        %v3116 = vpop.f32.mrb[0].mxu0
        %v3117 = vadd.f32 %v2572, %v3116
        %v3118 = vpop.f32.mrb[0].mxu0
        %v3119 = vpop.f32.mrb[0].mxu0
        %v3120 = vadd.f32 %v2575, %v3119
        %v3121 = vpop.f32.mrb[0].mxu0
        %3122 = vmatprep.mubr.bf16.mxu0 0
        %3123 = vmatmul.mubr.bf16.gmra.mrb[0].mxu0 %v1819
        %v3124 = vpop.f32.mrb[0].mxu0
        %v3125 = vadd.f32 %v2580, %v3124
        %v3126 = vpop.f32.mrb[0].mxu0
        %v3127 = vpop.f32.mrb[0].mxu0
        %v3128 = vadd.f32 %v2583, %v3127
        %v3129 = vpop.f32.mrb[0].mxu0
        %3130 = vmatprep.mubr.bf16.mxu0 0
        %3131 = vmatmul.mubr.bf16.gmra.mrb[0].mxu0 %v1822
        %v3132 = vpop.f32.mrb[0].mxu0
        %v3133 = vadd.f32 %v2588, %v3132
        %v3134 = vpop.f32.mrb[0].mxu0
        %v3135 = vpop.f32.mrb[0].mxu0
        %v3136 = vadd.f32 %v2591, %v3135
        %v3137 = vpop.f32.mrb[0].mxu0
        %3138 = vmatprep.mubr.bf16.mxu0 0
        %3139 = vmatmul.mubr.bf16.gmra.mrb[0].mxu0 %v1825
        %v3140 = vpop.f32.mrb[0].mxu0
        %v3141 = vadd.f32 %v2596, %v3140
        %v3142 = vpop.f32.mrb[0].mxu0
        %v3143 = vpop.f32.mrb[0].mxu0
        %v3144 = vadd.f32 %v2599, %v3143
        %v3145 = vpop.f32.mrb[0].mxu0
        %3146 = vmatprep.mubr.bf16.mxu0 0
        %3147 = vmatmul.mubr.bf16.gmra.mrb[0].mxu0 %v1828
        %v3148 = vpop.f32.mrb[0].mxu0
        %v3149 = vadd.f32 %v2604, %v3148
        %v3150 = vpop.f32.mrb[0].mxu0
        %v3151 = vpop.f32.mrb[0].mxu0
        %v3152 = vadd.f32 %v2607, %v3151
        %v3153 = vpop.f32.mrb[0].mxu0
        %3154 = vmatprep.mubr.bf16.mxu0 0
        %3155 = vmatmul.mubr.bf16.gmra.mrb[0].mxu0 %v1831
        %v3156 = vpop.f32.mrb[0].mxu0
        %v3157 = vadd.f32 %v2612, %v3156
        %v3158 = vpop.f32.mrb[0].mxu0
        %v3159 = vpop.f32.mrb[0].mxu0
        %v3160 = vadd.f32 %v2615, %v3159
        %v3161 = vpop.f32.mrb[0].mxu0
        %3162 = vmatprep.mubr.bf16.mxu0 0
        %3163 = vmatmul.mubr.bf16.gmra.mrb[0].mxu0 %v1834
        %v3164 = vpop.f32.mrb[0].mxu0
        %v3165 = vadd.f32 %v2620, %v3164
        %v3166 = vpop.f32.mrb[0].mxu0
        %v3167 = vpop.f32.mrb[0].mxu0
        %v3168 = vadd.f32 %v2623, %v3167
        %v3169 = vpop.f32.mrb[0].mxu0
        %3170 = vmatprep.mubr.bf16.mxu0 0
        %3171 = vmatmul.mubr.bf16.gmra.mrb[0].mxu0 %v1837
        %v3172 = vpop.f32.mrb[0].mxu0
        %v3173 = vadd.f32 %v2628, %v3172
        %v3174 = vpop.f32.mrb[0].mxu0
        %v3175 = vpop.f32.mrb[0].mxu0
        %v3176 = vadd.f32 %v2631, %v3175
        %v3177 = vpop.f32.mrb[0].mxu0
        %3178 = vmatprep.mubr.bf16.mxu0 0
        %3179 = vmatmul.mubr.bf16.gmra.mrb[0].mxu0 %v1840
        %v3180 = vpop.f32.mrb[0].mxu0
        %v3181 = vadd.f32 %v2636, %v3180
        %v3182 = vpop.f32.mrb[0].mxu0
        %v3183 = vpop.f32.mrb[0].mxu0
        %v3184 = vadd.f32 %v2639, %v3183
        %v3185 = vpop.f32.mrb[0].mxu0
        %3186 = vmatprep.mubr.bf16.mxu0 0
        %3187 = vmatmul.mubr.bf16.gmra.mrb[0].mxu0 %v1843
        %v3188 = vpop.f32.mrb[0].mxu0
        %v3189 = vadd.f32 %v2644, %v3188
        %v3190 = vpop.f32.mrb[0].mxu0
        %v3191 = vpop.f32.mrb[0].mxu0
        %v3192 = vadd.f32 %v2647, %v3191
        %v3193 = vpop.f32.mrb[0].mxu0
        %3194 = vmatprep.mubr.bf16.mxu0 0
        %3195 = vmatmul.mubr.bf16.gmra.mrb[0].mxu0 %v1846
        %v3196 = vpop.f32.mrb[0].mxu0
        %v3197 = vadd.f32 %v2652, %v3196
        %v3198 = vpop.f32.mrb[0].mxu0
        %v3199 = vpop.f32.mrb[0].mxu0
        %v3200 = vadd.f32 %v2655, %v3199
        %v3201 = vpop.f32.mrb[0].mxu0
        %3202 = vmatprep.mubr.bf16.mxu0 0
        %3203 = vmatmul.mubr.bf16.gmra.mrb[0].mxu0 %v1849
        %v3204 = vpop.f32.mrb[0].mxu0
        %v3205 = vadd.f32 %v2660, %v3204
        %v3206 = vpop.f32.mrb[0].mxu0
        %v3207 = vpop.f32.mrb[0].mxu0
        %v3208 = vadd.f32 %v2663, %v3207
        %v3209 = vpop.f32.mrb[0].mxu0
        %3210 = vmatprep.mubr.bf16.mxu0 0
        %3211 = vmatmul.mubr.bf16.gmra.mrb[0].mxu0 %v1852
        %v3212 = vpop.f32.mrb[0].mxu0
        %v3213 = vadd.f32 %v2668, %v3212
        %v3214 = vpop.f32.mrb[0].mxu0
        %v3215 = vpop.f32.mrb[0].mxu0
        %v3216 = vadd.f32 %v2671, %v3215
        %v3217 = vpop.f32.mrb[0].mxu0
        %3218 = vmatprep.mubr.bf16.mxu0 0
        %3219 = vmatmul.mubr.bf16.gmra.mrb[0].mxu0 %v1855
        %v3220 = vpop.f32.mrb[0].mxu0
        %v3221 = vadd.f32 %v2676, %v3220
        %v3222 = vpop.f32.mrb[0].mxu0
        %v3223 = vpop.f32.mrb[0].mxu0
        %v3224 = vadd.f32 %v2679, %v3223
        %v3225 = vpop.f32.mrb[0].mxu0
        %3226 = vmatprep.mubr.bf16.mxu0 0
        %3227 = vmatmul.mubr.bf16.gmra.mrb[0].mxu0 %v1858
        %v3228 = vpop.f32.mrb[0].mxu0
        %v3229 = vadd.f32 %v2684, %v3228
        %v3230 = vpop.f32.mrb[0].mxu0
        %v3231 = vpop.f32.mrb[0].mxu0
        %v3232 = vadd.f32 %v2687, %v3231
        %v3233 = vpop.f32.mrb[0].mxu0
        %3234 = vmatprep.mubr.bf16.mxu0 0
        %3235 = vmatmul.mubr.bf16.gmra.mrb[0].mxu0 %v1861
        %v3236 = vpop.f32.mrb[0].mxu0
        %v3237 = vadd.f32 %v2692, %v3236
        %v3238 = vpop.f32.mrb[0].mxu0
        %v3239 = vpop.f32.mrb[0].mxu0
        %v3240 = vadd.f32 %v2695, %v3239
        %v3241 = vpop.f32.mrb[0].mxu0
        %3242 = vmatprep.mubr.bf16.mxu0 0
        %3243 = vmatmul.mubr.bf16.gmra.mrb[0].mxu0 %v1864
        %v3244 = vpop.f32.mrb[0].mxu0
        %v3245 = vadd.f32 %v2700, %v3244
        %v3246 = vpop.f32.mrb[0].mxu0
        %v3247 = vpop.f32.mrb[0].mxu0
        %v3248 = vadd.f32 %v2703, %v3247
        %v3249 = vpop.f32.mrb[0].mxu0
        %3250 = vmatprep.mubr.bf16.mxu0 0
        %3251 = vmatmul.mubr.bf16.gmra.mrb[0].mxu0 %v1867
        %v3252 = vpop.f32.mrb[0].mxu0
        %v3253 = vadd.f32 %v2708, %v3252
        %v3254 = vpop.f32.mrb[0].mxu0
        %v3255 = vpop.f32.mrb[0].mxu0
        %v3256 = vadd.f32 %v2711, %v3255
        %v3257 = vpop.f32.mrb[0].mxu0
        %3258 = vmatprep.mubr.bf16.mxu0 0
        %3259 = vmatmul.mubr.bf16.gmra.mrb[0].mxu0 %v1870
        %v3260 = vpop.f32.mrb[0].mxu0
        %v3261 = vadd.f32 %v2716, %v3260
        %v3262 = vpop.f32.mrb[0].mxu0
        %v3263 = vpop.f32.mrb[0].mxu0
        %v3264 = vadd.f32 %v2719, %v3263
        %v3265 = vpop.f32.mrb[0].mxu0
        %3266 = vmatprep.mubr.bf16.mxu0 0
        %3267 = vmatmul.mubr.bf16.gmra.mrb[0].mxu0 %v1873
        %v3268 = vpop.f32.mrb[0].mxu0
        %v3269 = vadd.f32 %v2724, %v3268
        %v3270 = vpop.f32.mrb[0].mxu0
        %v3271 = vpop.f32.mrb[0].mxu0
        %v3272 = vadd.f32 %v2727, %v3271
        %v3273 = vpop.f32.mrb[0].mxu0
        %3274 = vmatprep.mubr.bf16.mxu0 0
        %3275 = vmatmul.mubr.bf16.gmra.mrb[0].mxu0 %v1876
        %v3276 = vpop.f32.mrb[0].mxu0
        %v3277 = vadd.f32 %v2732, %v3276
        %v3278 = vpop.f32.mrb[0].mxu0
        %v3279 = vpop.f32.mrb[0].mxu0
        %v3280 = vadd.f32 %v2735, %v3279
        %v3281 = vpop.f32.mrb[0].mxu0
        %3282 = vmatprep.mubr.bf16.mxu0 0
        %3283 = vmatmul.mubr.bf16.gmra.mrb[0].mxu0 %v1879
        %v3284 = vpop.f32.mrb[0].mxu0
        %v3285 = vadd.f32 %v2740, %v3284
        %v3286 = vpop.f32.mrb[0].mxu0
        %v3287 = vpop.f32.mrb[0].mxu0
        %v3288 = vadd.f32 %v2743, %v3287
        %v3289 = vpop.f32.mrb[0].mxu0
        %3290 = vmatprep.mubr.bf16.mxu0 0
        %3291 = vmatmul.mubr.bf16.gmra.mrb[0].mxu0 %v1882
        %v3292 = vpop.f32.mrb[0].mxu0
        %v3293 = vadd.f32 %v2748, %v3292
        %v3294 = vpop.f32.mrb[0].mxu0
        %v3295 = vpop.f32.mrb[0].mxu0
        %v3296 = vadd.f32 %v2751, %v3295
        %v3297 = vpop.f32.mrb[0].mxu0
        %3298 = vmatprep.mubr.bf16.mxu0 0
        %3299 = vmatmul.mubr.bf16.gmra.mrb[0].mxu0 %v1885
        %v3300 = vpop.f32.mrb[0].mxu0
        %v3301 = vadd.f32 %v2756, %v3300
        %v3302 = vpop.f32.mrb[0].mxu0
        %v3303 = vpop.f32.mrb[0].mxu0
        %v3304 = vadd.f32 %v2759, %v3303
        %v3305 = vpop.f32.mrb[0].mxu0
        %3306 = vmatprep.mubr.bf16.mxu0 0
        %3307 = vmatmul.mubr.bf16.gmra.mrb[0].mxu0 %v1888
        %v3308 = vpop.f32.mrb[0].mxu0
        %v3309 = vadd.f32 %v2764, %v3308
        %v3310 = vpop.f32.mrb[0].mxu0
        %v3311 = vpop.f32.mrb[0].mxu0
        %v3312 = vadd.f32 %v2767, %v3311
        %v3313 = vpop.f32.mrb[0].mxu0
        %3314 = vdwg.mxu0
        %v3315 = vld [vmem:[%s2] sm:$0x3]
        %v3316 = vld [vmem:[%s2 + $0x2] sm:$0x3]
        %v3317 = vlaneseq
        %v3318 = vshrl.u32 %v3317, 7
        %v3319 = vsub.s32 0, %v3318
        %v3320 = vrot.slane %v3315, %v3319
        %v3321 = vlaneseq
        %v3322 = vshrl.u32 %v3321, 7
        %v3323 = vsub.s32 0, %v3322
        %v3324 = vrot.slane %v3316, %v3323
        %v3325 = vmul.f32 %v2805, %v3320
        %v3326 = vmul.f32 %v2808, %v3320
        %v3327 = vmul.f32 %v2813, %v3320
        %v3328 = vmul.f32 %v2816, %v3320
        %v3329 = vmul.f32 %v2821, %v3320
        %v3330 = vmul.f32 %v2824, %v3320
        %v3331 = vmul.f32 %v2829, %v3320
        %v3332 = vmul.f32 %v2832, %v3320
        %v3333 = vmul.f32 %v2837, %v3320
        %v3334 = vmul.f32 %v2840, %v3320
        %v3335 = vmul.f32 %v2845, %v3320
        %v3336 = vmul.f32 %v2848, %v3320
        %v3337 = vmul.f32 %v2853, %v3320
        %v3338 = vmul.f32 %v2856, %v3320
        %v3339 = vmul.f32 %v2861, %v3320
        %v3340 = vmul.f32 %v2864, %v3320
        %v3341 = vmul.f32 %v2869, %v3320
        %v3342 = vmul.f32 %v2872, %v3320
        %v3343 = vmul.f32 %v2877, %v3320
        %v3344 = vmul.f32 %v2880, %v3320
        %v3345 = vmul.f32 %v2885, %v3320
        %v3346 = vmul.f32 %v2888, %v3320
        %v3347 = vmul.f32 %v2893, %v3320
        %v3348 = vmul.f32 %v2896, %v3320
        %v3349 = vmul.f32 %v2901, %v3320
        %v3350 = vmul.f32 %v2904, %v3320
        %v3351 = vmul.f32 %v2909, %v3320
        %v3352 = vmul.f32 %v2912, %v3320
        %v3353 = vmul.f32 %v2917, %v3320
        %v3354 = vmul.f32 %v2920, %v3320
        %v3355 = vmul.f32 %v2925, %v3320
        %v3356 = vmul.f32 %v2928, %v3320
        %v3357 = vmul.f32 %v2933, %v3320
        %v3358 = vmul.f32 %v2936, %v3320
        %v3359 = vmul.f32 %v2941, %v3320
        %v3360 = vmul.f32 %v2944, %v3320
        %v3361 = vmul.f32 %v2949, %v3320
        %v3362 = vmul.f32 %v2952, %v3320
        %v3363 = vmul.f32 %v2957, %v3320
        %v3364 = vmul.f32 %v2960, %v3320
        %v3365 = vmul.f32 %v2965, %v3320
        %v3366 = vmul.f32 %v2968, %v3320
        %v3367 = vmul.f32 %v2973, %v3320
        %v3368 = vmul.f32 %v2976, %v3320
        %v3369 = vmul.f32 %v2981, %v3320
        %v3370 = vmul.f32 %v2984, %v3320
        %v3371 = vmul.f32 %v2989, %v3320
        %v3372 = vmul.f32 %v2992, %v3320
        %v3373 = vmul.f32 %v2997, %v3320
        %v3374 = vmul.f32 %v3000, %v3320
        %v3375 = vmul.f32 %v3005, %v3320
        %v3376 = vmul.f32 %v3008, %v3320
        %v3377 = vmul.f32 %v3013, %v3320
        %v3378 = vmul.f32 %v3016, %v3320
        %v3379 = vmul.f32 %v3021, %v3320
        %v3380 = vmul.f32 %v3024, %v3320
        %v3381 = vmul.f32 %v3029, %v3320
        %v3382 = vmul.f32 %v3032, %v3320
        %v3383 = vmul.f32 %v3037, %v3320
        %v3384 = vmul.f32 %v3040, %v3320
        %v3385 = vmul.f32 %v3045, %v3320
        %v3386 = vmul.f32 %v3048, %v3320
        %v3387 = vmul.f32 %v3053, %v3320
        %v3388 = vmul.f32 %v3056, %v3320
        %v3389 = vmul.f32 %v3061, %v3324
        %v3390 = vmul.f32 %v3064, %v3324
        %v3391 = vmul.f32 %v3069, %v3324
        %v3392 = vmul.f32 %v3072, %v3324
        %v3393 = vmul.f32 %v3077, %v3324
        %v3394 = vmul.f32 %v3080, %v3324
        %v3395 = vmul.f32 %v3085, %v3324
        %v3396 = vmul.f32 %v3088, %v3324
        %v3397 = vmul.f32 %v3093, %v3324
        %v3398 = vmul.f32 %v3096, %v3324
        %v3399 = vmul.f32 %v3101, %v3324
        %v3400 = vmul.f32 %v3104, %v3324
        %v3401 = vmul.f32 %v3109, %v3324
        %v3402 = vmul.f32 %v3112, %v3324
        %v3403 = vmul.f32 %v3117, %v3324
        %v3404 = vmul.f32 %v3120, %v3324
        %v3405 = vmul.f32 %v3125, %v3324
        %v3406 = vmul.f32 %v3128, %v3324
        %v3407 = vmul.f32 %v3133, %v3324
        %v3408 = vmul.f32 %v3136, %v3324
        %v3409 = vmul.f32 %v3141, %v3324
        %v3410 = vmul.f32 %v3144, %v3324
        %v3411 = vmul.f32 %v3149, %v3324
        %v3412 = vmul.f32 %v3152, %v3324
        %v3413 = vmul.f32 %v3157, %v3324
        %v3414 = vmul.f32 %v3160, %v3324
        %v3415 = vmul.f32 %v3165, %v3324
        %v3416 = vmul.f32 %v3168, %v3324
        %v3417 = vmul.f32 %v3173, %v3324
        %v3418 = vmul.f32 %v3176, %v3324
        %v3419 = vmul.f32 %v3181, %v3324
        %v3420 = vmul.f32 %v3184, %v3324
        %v3421 = vmul.f32 %v3189, %v3324
        %v3422 = vmul.f32 %v3192, %v3324
        %v3423 = vmul.f32 %v3197, %v3324
        %v3424 = vmul.f32 %v3200, %v3324
        %v3425 = vmul.f32 %v3205, %v3324
        %v3426 = vmul.f32 %v3208, %v3324
        %v3427 = vmul.f32 %v3213, %v3324
        %v3428 = vmul.f32 %v3216, %v3324
        %v3429 = vmul.f32 %v3221, %v3324
        %v3430 = vmul.f32 %v3224, %v3324
        %v3431 = vmul.f32 %v3229, %v3324
        %v3432 = vmul.f32 %v3232, %v3324
        %v3433 = vmul.f32 %v3237, %v3324
        %v3434 = vmul.f32 %v3240, %v3324
        %v3435 = vmul.f32 %v3245, %v3324
        %v3436 = vmul.f32 %v3248, %v3324
        %v3437 = vmul.f32 %v3253, %v3324
        %v3438 = vmul.f32 %v3256, %v3324
        %v3439 = vmul.f32 %v3261, %v3324
        %v3440 = vmul.f32 %v3264, %v3324
        %v3441 = vmul.f32 %v3269, %v3324
        %v3442 = vmul.f32 %v3272, %v3324
        %v3443 = vmul.f32 %v3277, %v3324
        %v3444 = vmul.f32 %v3280, %v3324
        %v3445 = vmul.f32 %v3285, %v3324
        %v3446 = vmul.f32 %v3288, %v3324
        %v3447 = vmul.f32 %v3293, %v3324
        %v3448 = vmul.f32 %v3296, %v3324
        %v3449 = vmul.f32 %v3301, %v3324
        %v3450 = vmul.f32 %v3304, %v3324
        %v3451 = vmul.f32 %v3309, %v3324
        %v3452 = vmul.f32 %v3312, %v3324
        %v3453 = vlaneseq
        %v3454 = vshrl.u32 %v3453, 7
        %v3455 = vsub.s32 1, %v3454
        %v3456 = vrot.slane %v3315, %v3455
        %v3457 = vlaneseq
        %v3458 = vshrl.u32 %v3457, 7
        %v3459 = vsub.s32 1, %v3458
        %v3460 = vrot.slane %v3316, %v3459
        %v3461 = vadd.f32 %v3325, %v3456
        %v3462 = vadd.f32 %v3326, %v3456
        %v3463 = vadd.f32 %v3327, %v3456
        %v3464 = vadd.f32 %v3328, %v3456
        %v3465 = vadd.f32 %v3329, %v3456
        %v3466 = vadd.f32 %v3330, %v3456
        %v3467 = vadd.f32 %v3331, %v3456
        %v3468 = vadd.f32 %v3332, %v3456
        %v3469 = vadd.f32 %v3333, %v3456
        %v3470 = vadd.f32 %v3334, %v3456
        %v3471 = vadd.f32 %v3335, %v3456
        %v3472 = vadd.f32 %v3336, %v3456
        %v3473 = vadd.f32 %v3337, %v3456
        %v3474 = vadd.f32 %v3338, %v3456
        %v3475 = vadd.f32 %v3339, %v3456
        %v3476 = vadd.f32 %v3340, %v3456
        %v3477 = vadd.f32 %v3341, %v3456
        %v3478 = vadd.f32 %v3342, %v3456
        %v3479 = vadd.f32 %v3343, %v3456
        %v3480 = vadd.f32 %v3344, %v3456
        %v3481 = vadd.f32 %v3345, %v3456
        %v3482 = vadd.f32 %v3346, %v3456
        %v3483 = vadd.f32 %v3347, %v3456
        %v3484 = vadd.f32 %v3348, %v3456
        %v3485 = vadd.f32 %v3349, %v3456
        %v3486 = vadd.f32 %v3350, %v3456
        %v3487 = vadd.f32 %v3351, %v3456
        %v3488 = vadd.f32 %v3352, %v3456
        %v3489 = vadd.f32 %v3353, %v3456
        %v3490 = vadd.f32 %v3354, %v3456
        %v3491 = vadd.f32 %v3355, %v3456
        %v3492 = vadd.f32 %v3356, %v3456
        %v3493 = vadd.f32 %v3357, %v3456
        %v3494 = vadd.f32 %v3358, %v3456
        %v3495 = vadd.f32 %v3359, %v3456
        %v3496 = vadd.f32 %v3360, %v3456
        %v3497 = vadd.f32 %v3361, %v3456
        %v3498 = vadd.f32 %v3362, %v3456
        %v3499 = vadd.f32 %v3363, %v3456
        %v3500 = vadd.f32 %v3364, %v3456
        %v3501 = vadd.f32 %v3365, %v3456
        %v3502 = vadd.f32 %v3366, %v3456
        %v3503 = vadd.f32 %v3367, %v3456
        %v3504 = vadd.f32 %v3368, %v3456
        %v3505 = vadd.f32 %v3369, %v3456
        %v3506 = vadd.f32 %v3370, %v3456
        %v3507 = vadd.f32 %v3371, %v3456
        %v3508 = vadd.f32 %v3372, %v3456
        %v3509 = vadd.f32 %v3373, %v3456
        %v3510 = vadd.f32 %v3374, %v3456
        %v3511 = vadd.f32 %v3375, %v3456
        %v3512 = vadd.f32 %v3376, %v3456
        %v3513 = vadd.f32 %v3377, %v3456
        %v3514 = vadd.f32 %v3378, %v3456
        %v3515 = vadd.f32 %v3379, %v3456
        %v3516 = vadd.f32 %v3380, %v3456
        %v3517 = vadd.f32 %v3381, %v3456
        %v3518 = vadd.f32 %v3382, %v3456
        %v3519 = vadd.f32 %v3383, %v3456
        %v3520 = vadd.f32 %v3384, %v3456
        %v3521 = vadd.f32 %v3385, %v3456
        %v3522 = vadd.f32 %v3386, %v3456
        %v3523 = vadd.f32 %v3387, %v3456
        %v3524 = vadd.f32 %v3388, %v3456
        %v3525 = vadd.f32 %v3389, %v3460
        %v3526 = vadd.f32 %v3390, %v3460
        %v3527 = vadd.f32 %v3391, %v3460
        %v3528 = vadd.f32 %v3392, %v3460
        %v3529 = vadd.f32 %v3393, %v3460
        %v3530 = vadd.f32 %v3394, %v3460
        %v3531 = vadd.f32 %v3395, %v3460
        %v3532 = vadd.f32 %v3396, %v3460
        %v3533 = vadd.f32 %v3397, %v3460
        %v3534 = vadd.f32 %v3398, %v3460
        %v3535 = vadd.f32 %v3399, %v3460
        %v3536 = vadd.f32 %v3400, %v3460
        %v3537 = vadd.f32 %v3401, %v3460
        %v3538 = vadd.f32 %v3402, %v3460
        %v3539 = vadd.f32 %v3403, %v3460
        %v3540 = vadd.f32 %v3404, %v3460
        %v3541 = vadd.f32 %v3405, %v3460
        %v3542 = vadd.f32 %v3406, %v3460
        %v3543 = vadd.f32 %v3407, %v3460
        %v3544 = vadd.f32 %v3408, %v3460
        %v3545 = vadd.f32 %v3409, %v3460
        %v3546 = vadd.f32 %v3410, %v3460
        %v3547 = vadd.f32 %v3411, %v3460
        %v3548 = vadd.f32 %v3412, %v3460
        %v3549 = vadd.f32 %v3413, %v3460
        %v3550 = vadd.f32 %v3414, %v3460
        %v3551 = vadd.f32 %v3415, %v3460
        %v3552 = vadd.f32 %v3416, %v3460
        %v3553 = vadd.f32 %v3417, %v3460
        %v3554 = vadd.f32 %v3418, %v3460
        %v3555 = vadd.f32 %v3419, %v3460
        %v3556 = vadd.f32 %v3420, %v3460
        %v3557 = vadd.f32 %v3421, %v3460
        %v3558 = vadd.f32 %v3422, %v3460
        %v3559 = vadd.f32 %v3423, %v3460
        %v3560 = vadd.f32 %v3424, %v3460
        %v3561 = vadd.f32 %v3425, %v3460
        %v3562 = vadd.f32 %v3426, %v3460
        %v3563 = vadd.f32 %v3427, %v3460
        %v3564 = vadd.f32 %v3428, %v3460
        %v3565 = vadd.f32 %v3429, %v3460
        %v3566 = vadd.f32 %v3430, %v3460
        %v3567 = vadd.f32 %v3431, %v3460
        %v3568 = vadd.f32 %v3432, %v3460
        %v3569 = vadd.f32 %v3433, %v3460
        %v3570 = vadd.f32 %v3434, %v3460
        %v3571 = vadd.f32 %v3435, %v3460
        %v3572 = vadd.f32 %v3436, %v3460
        %v3573 = vadd.f32 %v3437, %v3460
        %v3574 = vadd.f32 %v3438, %v3460
        %v3575 = vadd.f32 %v3439, %v3460
        %v3576 = vadd.f32 %v3440, %v3460
        %v3577 = vadd.f32 %v3441, %v3460
        %v3578 = vadd.f32 %v3442, %v3460
        %v3579 = vadd.f32 %v3443, %v3460
        %v3580 = vadd.f32 %v3444, %v3460
        %v3581 = vadd.f32 %v3445, %v3460
        %v3582 = vadd.f32 %v3446, %v3460
        %v3583 = vadd.f32 %v3447, %v3460
        %v3584 = vadd.f32 %v3448, %v3460
        %v3585 = vadd.f32 %v3449, %v3460
        %v3586 = vadd.f32 %v3450, %v3460
        %v3587 = vadd.f32 %v3451, %v3460
        %v3588 = vadd.f32 %v3452, %v3460
        %v3589 = vmax.f32 %v3461, 0.0
        %v3590 = vmax.f32 %v3462, 0.0
        %v3591 = vmax.f32 %v3463, 0.0
        %v3592 = vmax.f32 %v3464, 0.0
        %v3593 = vmax.f32 %v3465, 0.0
        %v3594 = vmax.f32 %v3466, 0.0
        %v3595 = vmax.f32 %v3467, 0.0
        %v3596 = vmax.f32 %v3468, 0.0
        %v3597 = vmax.f32 %v3469, 0.0
        %v3598 = vmax.f32 %v3470, 0.0
        %v3599 = vmax.f32 %v3471, 0.0
        %v3600 = vmax.f32 %v3472, 0.0
        %v3601 = vmax.f32 %v3473, 0.0
        %v3602 = vmax.f32 %v3474, 0.0
        %v3603 = vmax.f32 %v3475, 0.0
        %v3604 = vmax.f32 %v3476, 0.0
        %v3605 = vmax.f32 %v3477, 0.0
        %v3606 = vmax.f32 %v3478, 0.0
        %v3607 = vmax.f32 %v3479, 0.0
        %v3608 = vmax.f32 %v3480, 0.0
        %v3609 = vmax.f32 %v3481, 0.0
        %v3610 = vmax.f32 %v3482, 0.0
        %v3611 = vmax.f32 %v3483, 0.0
        %v3612 = vmax.f32 %v3484, 0.0
        %v3613 = vmax.f32 %v3485, 0.0
        %v3614 = vmax.f32 %v3486, 0.0
        %v3615 = vmax.f32 %v3487, 0.0
        %v3616 = vmax.f32 %v3488, 0.0
        %v3617 = vmax.f32 %v3489, 0.0
        %v3618 = vmax.f32 %v3490, 0.0
        %v3619 = vmax.f32 %v3491, 0.0
        %v3620 = vmax.f32 %v3492, 0.0
        %v3621 = vmax.f32 %v3493, 0.0
        %v3622 = vmax.f32 %v3494, 0.0
        %v3623 = vmax.f32 %v3495, 0.0
        %v3624 = vmax.f32 %v3496, 0.0
        %v3625 = vmax.f32 %v3497, 0.0
        %v3626 = vmax.f32 %v3498, 0.0
        %v3627 = vmax.f32 %v3499, 0.0
        %v3628 = vmax.f32 %v3500, 0.0
        %v3629 = vmax.f32 %v3501, 0.0
        %v3630 = vmax.f32 %v3502, 0.0
        %v3631 = vmax.f32 %v3503, 0.0
        %v3632 = vmax.f32 %v3504, 0.0
        %v3633 = vmax.f32 %v3505, 0.0
        %v3634 = vmax.f32 %v3506, 0.0
        %v3635 = vmax.f32 %v3507, 0.0
        %v3636 = vmax.f32 %v3508, 0.0
        %v3637 = vmax.f32 %v3509, 0.0
        %v3638 = vmax.f32 %v3510, 0.0
        %v3639 = vmax.f32 %v3511, 0.0
        %v3640 = vmax.f32 %v3512, 0.0
        %v3641 = vmax.f32 %v3513, 0.0
        %v3642 = vmax.f32 %v3514, 0.0
        %v3643 = vmax.f32 %v3515, 0.0
        %v3644 = vmax.f32 %v3516, 0.0
        %v3645 = vmax.f32 %v3517, 0.0
        %v3646 = vmax.f32 %v3518, 0.0
        %v3647 = vmax.f32 %v3519, 0.0
        %v3648 = vmax.f32 %v3520, 0.0
        %v3649 = vmax.f32 %v3521, 0.0
        %v3650 = vmax.f32 %v3522, 0.0
        %v3651 = vmax.f32 %v3523, 0.0
        %v3652 = vmax.f32 %v3524, 0.0
        %v3653 = vmax.f32 %v3525, 0.0
        %v3654 = vmax.f32 %v3526, 0.0
        %v3655 = vmax.f32 %v3527, 0.0
        %v3656 = vmax.f32 %v3528, 0.0
        %v3657 = vmax.f32 %v3529, 0.0
        %v3658 = vmax.f32 %v3530, 0.0
        %v3659 = vmax.f32 %v3531, 0.0
        %v3660 = vmax.f32 %v3532, 0.0
        %v3661 = vmax.f32 %v3533, 0.0
        %v3662 = vmax.f32 %v3534, 0.0
        %v3663 = vmax.f32 %v3535, 0.0
        %v3664 = vmax.f32 %v3536, 0.0
        %v3665 = vmax.f32 %v3537, 0.0
        %v3666 = vmax.f32 %v3538, 0.0
        %v3667 = vmax.f32 %v3539, 0.0
        %v3668 = vmax.f32 %v3540, 0.0
        %v3669 = vmax.f32 %v3541, 0.0
        %v3670 = vmax.f32 %v3542, 0.0
        %v3671 = vmax.f32 %v3543, 0.0
        %v3672 = vmax.f32 %v3544, 0.0
        %v3673 = vmax.f32 %v3545, 0.0
        %v3674 = vmax.f32 %v3546, 0.0
        %v3675 = vmax.f32 %v3547, 0.0
        %v3676 = vmax.f32 %v3548, 0.0
        %v3677 = vmax.f32 %v3549, 0.0
        %v3678 = vmax.f32 %v3550, 0.0
        %v3679 = vmax.f32 %v3551, 0.0
        %v3680 = vmax.f32 %v3552, 0.0
        %v3681 = vmax.f32 %v3553, 0.0
        %v3682 = vmax.f32 %v3554, 0.0
        %v3683 = vmax.f32 %v3555, 0.0
        %v3684 = vmax.f32 %v3556, 0.0
        %v3685 = vmax.f32 %v3557, 0.0
        %v3686 = vmax.f32 %v3558, 0.0
        %v3687 = vmax.f32 %v3559, 0.0
        %v3688 = vmax.f32 %v3560, 0.0
        %v3689 = vmax.f32 %v3561, 0.0
        %v3690 = vmax.f32 %v3562, 0.0
        %v3691 = vmax.f32 %v3563, 0.0
        %v3692 = vmax.f32 %v3564, 0.0
        %v3693 = vmax.f32 %v3565, 0.0
        %v3694 = vmax.f32 %v3566, 0.0
        %v3695 = vmax.f32 %v3567, 0.0
        %v3696 = vmax.f32 %v3568, 0.0
        %v3697 = vmax.f32 %v3569, 0.0
        %v3698 = vmax.f32 %v3570, 0.0
        %v3699 = vmax.f32 %v3571, 0.0
        %v3700 = vmax.f32 %v3572, 0.0
        %v3701 = vmax.f32 %v3573, 0.0
        %v3702 = vmax.f32 %v3574, 0.0
        %v3703 = vmax.f32 %v3575, 0.0
        %v3704 = vmax.f32 %v3576, 0.0
        %v3705 = vmax.f32 %v3577, 0.0
        %v3706 = vmax.f32 %v3578, 0.0
        %v3707 = vmax.f32 %v3579, 0.0
        %v3708 = vmax.f32 %v3580, 0.0
        %v3709 = vmax.f32 %v3581, 0.0
        %v3710 = vmax.f32 %v3582, 0.0
        %v3711 = vmax.f32 %v3583, 0.0
        %v3712 = vmax.f32 %v3584, 0.0
        %v3713 = vmax.f32 %v3585, 0.0
        %v3714 = vmax.f32 %v3586, 0.0
        %v3715 = vmax.f32 %v3587, 0.0
        %v3716 = vmax.f32 %v3588, 0.0
        %v3717 = vmul.f32 %v3589, %v3589
        %v3718 = vmul.f32 %v3590, %v3590
        %v3719 = vmul.f32 %v3591, %v3591
        %v3720 = vmul.f32 %v3592, %v3592
        %v3721 = vmul.f32 %v3593, %v3593
        %v3722 = vmul.f32 %v3594, %v3594
        %v3723 = vmul.f32 %v3595, %v3595
        %v3724 = vmul.f32 %v3596, %v3596
        %v3725 = vmul.f32 %v3597, %v3597
        %v3726 = vmul.f32 %v3598, %v3598
        %v3727 = vmul.f32 %v3599, %v3599
        %v3728 = vmul.f32 %v3600, %v3600
        %v3729 = vmul.f32 %v3601, %v3601
        %v3730 = vmul.f32 %v3602, %v3602
        %v3731 = vmul.f32 %v3603, %v3603
        %v3732 = vmul.f32 %v3604, %v3604
        %v3733 = vmul.f32 %v3605, %v3605
        %v3734 = vmul.f32 %v3606, %v3606
        %v3735 = vmul.f32 %v3607, %v3607
        %v3736 = vmul.f32 %v3608, %v3608
        %v3737 = vmul.f32 %v3609, %v3609
        %v3738 = vmul.f32 %v3610, %v3610
        %v3739 = vmul.f32 %v3611, %v3611
        %v3740 = vmul.f32 %v3612, %v3612
        %v3741 = vmul.f32 %v3613, %v3613
        %v3742 = vmul.f32 %v3614, %v3614
        %v3743 = vmul.f32 %v3615, %v3615
        %v3744 = vmul.f32 %v3616, %v3616
        %v3745 = vmul.f32 %v3617, %v3617
        %v3746 = vmul.f32 %v3618, %v3618
        %v3747 = vmul.f32 %v3619, %v3619
        %v3748 = vmul.f32 %v3620, %v3620
        %v3749 = vmul.f32 %v3621, %v3621
        %v3750 = vmul.f32 %v3622, %v3622
        %v3751 = vmul.f32 %v3623, %v3623
        %v3752 = vmul.f32 %v3624, %v3624
        %v3753 = vmul.f32 %v3625, %v3625
        %v3754 = vmul.f32 %v3626, %v3626
        %v3755 = vmul.f32 %v3627, %v3627
        %v3756 = vmul.f32 %v3628, %v3628
        %v3757 = vmul.f32 %v3629, %v3629
        %v3758 = vmul.f32 %v3630, %v3630
        %v3759 = vmul.f32 %v3631, %v3631
        %v3760 = vmul.f32 %v3632, %v3632
        %v3761 = vmul.f32 %v3633, %v3633
        %v3762 = vmul.f32 %v3634, %v3634
        %v3763 = vmul.f32 %v3635, %v3635
        %v3764 = vmul.f32 %v3636, %v3636
        %v3765 = vmul.f32 %v3637, %v3637
        %v3766 = vmul.f32 %v3638, %v3638
        %v3767 = vmul.f32 %v3639, %v3639
        %v3768 = vmul.f32 %v3640, %v3640
        %v3769 = vmul.f32 %v3641, %v3641
        %v3770 = vmul.f32 %v3642, %v3642
        %v3771 = vmul.f32 %v3643, %v3643
        %v3772 = vmul.f32 %v3644, %v3644
        %v3773 = vmul.f32 %v3645, %v3645
        %v3774 = vmul.f32 %v3646, %v3646
        %v3775 = vmul.f32 %v3647, %v3647
        %v3776 = vmul.f32 %v3648, %v3648
        %v3777 = vmul.f32 %v3649, %v3649
        %v3778 = vmul.f32 %v3650, %v3650
        %v3779 = vmul.f32 %v3651, %v3651
        %v3780 = vmul.f32 %v3652, %v3652
        %v3781 = vmul.f32 %v3653, %v3653
        %v3782 = vmul.f32 %v3654, %v3654
        %v3783 = vmul.f32 %v3655, %v3655
        %v3784 = vmul.f32 %v3656, %v3656
        %v3785 = vmul.f32 %v3657, %v3657
        %v3786 = vmul.f32 %v3658, %v3658
        %v3787 = vmul.f32 %v3659, %v3659
        %v3788 = vmul.f32 %v3660, %v3660
        %v3789 = vmul.f32 %v3661, %v3661
        %v3790 = vmul.f32 %v3662, %v3662
        %v3791 = vmul.f32 %v3663, %v3663
        %v3792 = vmul.f32 %v3664, %v3664
        %v3793 = vmul.f32 %v3665, %v3665
        %v3794 = vmul.f32 %v3666, %v3666
        %v3795 = vmul.f32 %v3667, %v3667
        %v3796 = vmul.f32 %v3668, %v3668
        %v3797 = vmul.f32 %v3669, %v3669
        %v3798 = vmul.f32 %v3670, %v3670
        %v3799 = vmul.f32 %v3671, %v3671
        %v3800 = vmul.f32 %v3672, %v3672
        %v3801 = vmul.f32 %v3673, %v3673
        %v3802 = vmul.f32 %v3674, %v3674
        %v3803 = vmul.f32 %v3675, %v3675
        %v3804 = vmul.f32 %v3676, %v3676
        %v3805 = vmul.f32 %v3677, %v3677
        %v3806 = vmul.f32 %v3678, %v3678
        %v3807 = vmul.f32 %v3679, %v3679
        %v3808 = vmul.f32 %v3680, %v3680
        %v3809 = vmul.f32 %v3681, %v3681
        %v3810 = vmul.f32 %v3682, %v3682
        %v3811 = vmul.f32 %v3683, %v3683
        %v3812 = vmul.f32 %v3684, %v3684
        %v3813 = vmul.f32 %v3685, %v3685
        %v3814 = vmul.f32 %v3686, %v3686
        %v3815 = vmul.f32 %v3687, %v3687
        %v3816 = vmul.f32 %v3688, %v3688
        %v3817 = vmul.f32 %v3689, %v3689
        %v3818 = vmul.f32 %v3690, %v3690
        %v3819 = vmul.f32 %v3691, %v3691
        %v3820 = vmul.f32 %v3692, %v3692
        %v3821 = vmul.f32 %v3693, %v3693
        %v3822 = vmul.f32 %v3694, %v3694
        %v3823 = vmul.f32 %v3695, %v3695
        %v3824 = vmul.f32 %v3696, %v3696
        %v3825 = vmul.f32 %v3697, %v3697
        %v3826 = vmul.f32 %v3698, %v3698
        %v3827 = vmul.f32 %v3699, %v3699
        %v3828 = vmul.f32 %v3700, %v3700
        %v3829 = vmul.f32 %v3701, %v3701
        %v3830 = vmul.f32 %v3702, %v3702
        %v3831 = vmul.f32 %v3703, %v3703
        %v3832 = vmul.f32 %v3704, %v3704
        %v3833 = vmul.f32 %v3705, %v3705
        %v3834 = vmul.f32 %v3706, %v3706
        %v3835 = vmul.f32 %v3707, %v3707
        %v3836 = vmul.f32 %v3708, %v3708
        %v3837 = vmul.f32 %v3709, %v3709
        %v3838 = vmul.f32 %v3710, %v3710
        %v3839 = vmul.f32 %v3711, %v3711
        %v3840 = vmul.f32 %v3712, %v3712
        %v3841 = vmul.f32 %v3713, %v3713
        %v3842 = vmul.f32 %v3714, %v3714
        %v3843 = vmul.f32 %v3715, %v3715
        %v3844 = vmul.f32 %v3716, %v3716
        %3845 = vadd.xlane.f32.xlu0 %v3717
        %v3846 = vpop.xlane.xlu0 %3845
        %3847 = vadd.xlane.f32.xlu0 %v3718
        %v3848 = vpop.xlane.xlu0 %3847
        %3849 = vadd.xlane.f32.xlu0 %v3719
        %v3850 = vpop.xlane.xlu0 %3849
        %3851 = vadd.xlane.f32.xlu0 %v3720
        %v3852 = vpop.xlane.xlu0 %3851
        %3853 = vadd.xlane.f32.xlu0 %v3721
        %v3854 = vpop.xlane.xlu0 %3853
        %3855 = vadd.xlane.f32.xlu0 %v3722
        %v3856 = vpop.xlane.xlu0 %3855
        %3857 = vadd.xlane.f32.xlu0 %v3723
        %v3858 = vpop.xlane.xlu0 %3857
        %3859 = vadd.xlane.f32.xlu0 %v3724
        %v3860 = vpop.xlane.xlu0 %3859
        %3861 = vadd.xlane.f32.xlu0 %v3725
        %v3862 = vpop.xlane.xlu0 %3861
        %3863 = vadd.xlane.f32.xlu0 %v3726
        %v3864 = vpop.xlane.xlu0 %3863
        %3865 = vadd.xlane.f32.xlu0 %v3727
        %v3866 = vpop.xlane.xlu0 %3865
        %3867 = vadd.xlane.f32.xlu0 %v3728
        %v3868 = vpop.xlane.xlu0 %3867
        %3869 = vadd.xlane.f32.xlu0 %v3729
        %v3870 = vpop.xlane.xlu0 %3869
        %3871 = vadd.xlane.f32.xlu0 %v3730
        %v3872 = vpop.xlane.xlu0 %3871
        %3873 = vadd.xlane.f32.xlu0 %v3731
        %v3874 = vpop.xlane.xlu0 %3873
        %3875 = vadd.xlane.f32.xlu0 %v3732
        %v3876 = vpop.xlane.xlu0 %3875
        %3877 = vadd.xlane.f32.xlu0 %v3733
        %v3878 = vpop.xlane.xlu0 %3877
        %3879 = vadd.xlane.f32.xlu0 %v3734
        %v3880 = vpop.xlane.xlu0 %3879
        %3881 = vadd.xlane.f32.xlu0 %v3735
        %v3882 = vpop.xlane.xlu0 %3881
        %3883 = vadd.xlane.f32.xlu0 %v3736
        %v3884 = vpop.xlane.xlu0 %3883
        %3885 = vadd.xlane.f32.xlu0 %v3737
        %v3886 = vpop.xlane.xlu0 %3885
        %3887 = vadd.xlane.f32.xlu0 %v3738
        %v3888 = vpop.xlane.xlu0 %3887
        %3889 = vadd.xlane.f32.xlu0 %v3739
        %v3890 = vpop.xlane.xlu0 %3889
        %3891 = vadd.xlane.f32.xlu0 %v3740
        %v3892 = vpop.xlane.xlu0 %3891
        %3893 = vadd.xlane.f32.xlu0 %v3741
        %v3894 = vpop.xlane.xlu0 %3893
        %3895 = vadd.xlane.f32.xlu0 %v3742
        %v3896 = vpop.xlane.xlu0 %3895
        %3897 = vadd.xlane.f32.xlu0 %v3743
        %v3898 = vpop.xlane.xlu0 %3897
        %3899 = vadd.xlane.f32.xlu0 %v3744
        %v3900 = vpop.xlane.xlu0 %3899
        %3901 = vadd.xlane.f32.xlu0 %v3745
        %v3902 = vpop.xlane.xlu0 %3901
        %3903 = vadd.xlane.f32.xlu0 %v3746
        %v3904 = vpop.xlane.xlu0 %3903
        %3905 = vadd.xlane.f32.xlu0 %v3747
        %v3906 = vpop.xlane.xlu0 %3905
        %3907 = vadd.xlane.f32.xlu0 %v3748
        %v3908 = vpop.xlane.xlu0 %3907
        %3909 = vadd.xlane.f32.xlu0 %v3749
        %v3910 = vpop.xlane.xlu0 %3909
        %3911 = vadd.xlane.f32.xlu0 %v3750
        %v3912 = vpop.xlane.xlu0 %3911
        %3913 = vadd.xlane.f32.xlu0 %v3751
        %v3914 = vpop.xlane.xlu0 %3913
        %3915 = vadd.xlane.f32.xlu0 %v3752
        %v3916 = vpop.xlane.xlu0 %3915
        %3917 = vadd.xlane.f32.xlu0 %v3753
        %v3918 = vpop.xlane.xlu0 %3917
        %3919 = vadd.xlane.f32.xlu0 %v3754
        %v3920 = vpop.xlane.xlu0 %3919
        %3921 = vadd.xlane.f32.xlu0 %v3755
        %v3922 = vpop.xlane.xlu0 %3921
        %3923 = vadd.xlane.f32.xlu0 %v3756
        %v3924 = vpop.xlane.xlu0 %3923
        %3925 = vadd.xlane.f32.xlu0 %v3757
        %v3926 = vpop.xlane.xlu0 %3925
        %3927 = vadd.xlane.f32.xlu0 %v3758
        %v3928 = vpop.xlane.xlu0 %3927
        %3929 = vadd.xlane.f32.xlu0 %v3759
        %v3930 = vpop.xlane.xlu0 %3929
        %3931 = vadd.xlane.f32.xlu0 %v3760
        %v3932 = vpop.xlane.xlu0 %3931
        %3933 = vadd.xlane.f32.xlu0 %v3761
        %v3934 = vpop.xlane.xlu0 %3933
        %3935 = vadd.xlane.f32.xlu0 %v3762
        %v3936 = vpop.xlane.xlu0 %3935
        %3937 = vadd.xlane.f32.xlu0 %v3763
        %v3938 = vpop.xlane.xlu0 %3937
        %3939 = vadd.xlane.f32.xlu0 %v3764
        %v3940 = vpop.xlane.xlu0 %3939
        %3941 = vadd.xlane.f32.xlu0 %v3765
        %v3942 = vpop.xlane.xlu0 %3941
        %3943 = vadd.xlane.f32.xlu0 %v3766
        %v3944 = vpop.xlane.xlu0 %3943
        %3945 = vadd.xlane.f32.xlu0 %v3767
        %v3946 = vpop.xlane.xlu0 %3945
        %3947 = vadd.xlane.f32.xlu0 %v3768
        %v3948 = vpop.xlane.xlu0 %3947
        %3949 = vadd.xlane.f32.xlu0 %v3769
        %v3950 = vpop.xlane.xlu0 %3949
        %3951 = vadd.xlane.f32.xlu0 %v3770
        %v3952 = vpop.xlane.xlu0 %3951
        %3953 = vadd.xlane.f32.xlu0 %v3771
        %v3954 = vpop.xlane.xlu0 %3953
        %3955 = vadd.xlane.f32.xlu0 %v3772
        %v3956 = vpop.xlane.xlu0 %3955
        %3957 = vadd.xlane.f32.xlu0 %v3773
        %v3958 = vpop.xlane.xlu0 %3957
        %3959 = vadd.xlane.f32.xlu0 %v3774
        %v3960 = vpop.xlane.xlu0 %3959
        %3961 = vadd.xlane.f32.xlu0 %v3775
        %v3962 = vpop.xlane.xlu0 %3961
        %3963 = vadd.xlane.f32.xlu0 %v3776
        %v3964 = vpop.xlane.xlu0 %3963
        %3965 = vadd.xlane.f32.xlu0 %v3777
        %v3966 = vpop.xlane.xlu0 %3965
        %3967 = vadd.xlane.f32.xlu0 %v3778
        %v3968 = vpop.xlane.xlu0 %3967
        %3969 = vadd.xlane.f32.xlu0 %v3779
        %v3970 = vpop.xlane.xlu0 %3969
        %3971 = vadd.xlane.f32.xlu0 %v3780
        %v3972 = vpop.xlane.xlu0 %3971
        %3973 = vadd.xlane.f32.xlu0 %v3781
        %v3974 = vpop.xlane.xlu0 %3973
        %3975 = vadd.xlane.f32.xlu0 %v3782
        %v3976 = vpop.xlane.xlu0 %3975
        %3977 = vadd.xlane.f32.xlu0 %v3783
        %v3978 = vpop.xlane.xlu0 %3977
        %3979 = vadd.xlane.f32.xlu0 %v3784
        %v3980 = vpop.xlane.xlu0 %3979
        %3981 = vadd.xlane.f32.xlu0 %v3785
        %v3982 = vpop.xlane.xlu0 %3981
        %3983 = vadd.xlane.f32.xlu0 %v3786
        %v3984 = vpop.xlane.xlu0 %3983
        %3985 = vadd.xlane.f32.xlu0 %v3787
        %v3986 = vpop.xlane.xlu0 %3985
        %3987 = vadd.xlane.f32.xlu0 %v3788
        %v3988 = vpop.xlane.xlu0 %3987
        %3989 = vadd.xlane.f32.xlu0 %v3789
        %v3990 = vpop.xlane.xlu0 %3989
        %3991 = vadd.xlane.f32.xlu0 %v3790
        %v3992 = vpop.xlane.xlu0 %3991
        %3993 = vadd.xlane.f32.xlu0 %v3791
        %v3994 = vpop.xlane.xlu0 %3993
        %3995 = vadd.xlane.f32.xlu0 %v3792
        %v3996 = vpop.xlane.xlu0 %3995
        %3997 = vadd.xlane.f32.xlu0 %v3793
        %v3998 = vpop.xlane.xlu0 %3997
        %3999 = vadd.xlane.f32.xlu0 %v3794
        %v4000 = vpop.xlane.xlu0 %3999
        %4001 = vadd.xlane.f32.xlu0 %v3795
        %v4002 = vpop.xlane.xlu0 %4001
        %4003 = vadd.xlane.f32.xlu0 %v3796
        %v4004 = vpop.xlane.xlu0 %4003
        %4005 = vadd.xlane.f32.xlu0 %v3797
        %v4006 = vpop.xlane.xlu0 %4005
        %4007 = vadd.xlane.f32.xlu0 %v3798
        %v4008 = vpop.xlane.xlu0 %4007
        %4009 = vadd.xlane.f32.xlu0 %v3799
        %v4010 = vpop.xlane.xlu0 %4009
        %4011 = vadd.xlane.f32.xlu0 %v3800
        %v4012 = vpop.xlane.xlu0 %4011
        %4013 = vadd.xlane.f32.xlu0 %v3801
        %v4014 = vpop.xlane.xlu0 %4013
        %4015 = vadd.xlane.f32.xlu0 %v3802
        %v4016 = vpop.xlane.xlu0 %4015
        %4017 = vadd.xlane.f32.xlu0 %v3803
        %v4018 = vpop.xlane.xlu0 %4017
        %4019 = vadd.xlane.f32.xlu0 %v3804
        %v4020 = vpop.xlane.xlu0 %4019
        %4021 = vadd.xlane.f32.xlu0 %v3805
        %v4022 = vpop.xlane.xlu0 %4021
        %4023 = vadd.xlane.f32.xlu0 %v3806
        %v4024 = vpop.xlane.xlu0 %4023
        %4025 = vadd.xlane.f32.xlu0 %v3807
        %v4026 = vpop.xlane.xlu0 %4025
        %4027 = vadd.xlane.f32.xlu0 %v3808
        %v4028 = vpop.xlane.xlu0 %4027
        %4029 = vadd.xlane.f32.xlu0 %v3809
        %v4030 = vpop.xlane.xlu0 %4029
        %4031 = vadd.xlane.f32.xlu0 %v3810
        %v4032 = vpop.xlane.xlu0 %4031
        %4033 = vadd.xlane.f32.xlu0 %v3811
        %v4034 = vpop.xlane.xlu0 %4033
        %4035 = vadd.xlane.f32.xlu0 %v3812
        %v4036 = vpop.xlane.xlu0 %4035
        %4037 = vadd.xlane.f32.xlu0 %v3813
        %v4038 = vpop.xlane.xlu0 %4037
        %4039 = vadd.xlane.f32.xlu0 %v3814
        %v4040 = vpop.xlane.xlu0 %4039
        %4041 = vadd.xlane.f32.xlu0 %v3815
        %v4042 = vpop.xlane.xlu0 %4041
        %4043 = vadd.xlane.f32.xlu0 %v3816
        %v4044 = vpop.xlane.xlu0 %4043
        %4045 = vadd.xlane.f32.xlu0 %v3817
        %v4046 = vpop.xlane.xlu0 %4045
        %4047 = vadd.xlane.f32.xlu0 %v3818
        %v4048 = vpop.xlane.xlu0 %4047
        %4049 = vadd.xlane.f32.xlu0 %v3819
        %v4050 = vpop.xlane.xlu0 %4049
        %4051 = vadd.xlane.f32.xlu0 %v3820
        %v4052 = vpop.xlane.xlu0 %4051
        %4053 = vadd.xlane.f32.xlu0 %v3821
        %v4054 = vpop.xlane.xlu0 %4053
        %4055 = vadd.xlane.f32.xlu0 %v3822
        %v4056 = vpop.xlane.xlu0 %4055
        %4057 = vadd.xlane.f32.xlu0 %v3823
        %v4058 = vpop.xlane.xlu0 %4057
        %4059 = vadd.xlane.f32.xlu0 %v3824
        %v4060 = vpop.xlane.xlu0 %4059
        %4061 = vadd.xlane.f32.xlu0 %v3825
        %v4062 = vpop.xlane.xlu0 %4061
        %4063 = vadd.xlane.f32.xlu0 %v3826
        %v4064 = vpop.xlane.xlu0 %4063
        %4065 = vadd.xlane.f32.xlu0 %v3827
        %v4066 = vpop.xlane.xlu0 %4065
        %4067 = vadd.xlane.f32.xlu0 %v3828
        %v4068 = vpop.xlane.xlu0 %4067
        %4069 = vadd.xlane.f32.xlu0 %v3829
        %v4070 = vpop.xlane.xlu0 %4069
        %4071 = vadd.xlane.f32.xlu0 %v3830
        %v4072 = vpop.xlane.xlu0 %4071
        %4073 = vadd.xlane.f32.xlu0 %v3831
        %v4074 = vpop.xlane.xlu0 %4073
        %4075 = vadd.xlane.f32.xlu0 %v3832
        %v4076 = vpop.xlane.xlu0 %4075
        %4077 = vadd.xlane.f32.xlu0 %v3833
        %v4078 = vpop.xlane.xlu0 %4077
        %4079 = vadd.xlane.f32.xlu0 %v3834
        %v4080 = vpop.xlane.xlu0 %4079
        %4081 = vadd.xlane.f32.xlu0 %v3835
        %v4082 = vpop.xlane.xlu0 %4081
        %4083 = vadd.xlane.f32.xlu0 %v3836
        %v4084 = vpop.xlane.xlu0 %4083
        %4085 = vadd.xlane.f32.xlu0 %v3837
        %v4086 = vpop.xlane.xlu0 %4085
        %4087 = vadd.xlane.f32.xlu0 %v3838
        %v4088 = vpop.xlane.xlu0 %4087
        %4089 = vadd.xlane.f32.xlu0 %v3839
        %v4090 = vpop.xlane.xlu0 %4089
        %4091 = vadd.xlane.f32.xlu0 %v3840
        %v4092 = vpop.xlane.xlu0 %4091
        %4093 = vadd.xlane.f32.xlu0 %v3841
        %v4094 = vpop.xlane.xlu0 %4093
        %4095 = vadd.xlane.f32.xlu0 %v3842
        %v4096 = vpop.xlane.xlu0 %4095
        %4097 = vadd.xlane.f32.xlu0 %v3843
        %v4098 = vpop.xlane.xlu0 %4097
        %4099 = vadd.xlane.f32.xlu0 %v3844
        %v4100 = vpop.xlane.xlu0 %4099
        %v4101 = vrsqrt.pop %v3846
        %v4102 = vmul.f32 %v3846, %v4101
        %vm4103 = vcmp.eq.f32.partialorder %v3846, inf
        %v4104 = vsel %vm4103, %v3846, %v4102
        %vm4105 = vcmp.eq.f32.partialorder %v3846, 0.0
        %v4106 = vand.u32 %v3846, 2147483648
        %v4107 = vsel %vm4105, %v4106, %v4104
        %v4108 = vrsqrt.pop %v3848
        %v4109 = vmul.f32 %v3848, %v4108
        %vm4110 = vcmp.eq.f32.partialorder %v3848, inf
        %v4111 = vsel %vm4110, %v3848, %v4109
        %vm4112 = vcmp.eq.f32.partialorder %v3848, 0.0
        %v4113 = vand.u32 %v3848, 2147483648
        %v4114 = vsel %vm4112, %v4113, %v4111
        %v4115 = vrsqrt.pop %v3850
        %v4116 = vmul.f32 %v3850, %v4115
        %vm4117 = vcmp.eq.f32.partialorder %v3850, inf
        %v4118 = vsel %vm4117, %v3850, %v4116
        %vm4119 = vcmp.eq.f32.partialorder %v3850, 0.0
        %v4120 = vand.u32 %v3850, 2147483648
        %v4121 = vsel %vm4119, %v4120, %v4118
        %v4122 = vrsqrt.pop %v3852
        %v4123 = vmul.f32 %v3852, %v4122
        %vm4124 = vcmp.eq.f32.partialorder %v3852, inf
        %v4125 = vsel %vm4124, %v3852, %v4123
        %vm4126 = vcmp.eq.f32.partialorder %v3852, 0.0
        %v4127 = vand.u32 %v3852, 2147483648
        %v4128 = vsel %vm4126, %v4127, %v4125
        %v4129 = vrsqrt.pop %v3854
        %v4130 = vmul.f32 %v3854, %v4129
        %vm4131 = vcmp.eq.f32.partialorder %v3854, inf
        %v4132 = vsel %vm4131, %v3854, %v4130
        %vm4133 = vcmp.eq.f32.partialorder %v3854, 0.0
        %v4134 = vand.u32 %v3854, 2147483648
        %v4135 = vsel %vm4133, %v4134, %v4132
        %v4136 = vrsqrt.pop %v3856
        %v4137 = vmul.f32 %v3856, %v4136
        %vm4138 = vcmp.eq.f32.partialorder %v3856, inf
        %v4139 = vsel %vm4138, %v3856, %v4137
        %vm4140 = vcmp.eq.f32.partialorder %v3856, 0.0
        %v4141 = vand.u32 %v3856, 2147483648
        %v4142 = vsel %vm4140, %v4141, %v4139
        %v4143 = vrsqrt.pop %v3858
        %v4144 = vmul.f32 %v3858, %v4143
        %vm4145 = vcmp.eq.f32.partialorder %v3858, inf
        %v4146 = vsel %vm4145, %v3858, %v4144
        %vm4147 = vcmp.eq.f32.partialorder %v3858, 0.0
        %v4148 = vand.u32 %v3858, 2147483648
        %v4149 = vsel %vm4147, %v4148, %v4146
        %v4150 = vrsqrt.pop %v3860
        %v4151 = vmul.f32 %v3860, %v4150
        %vm4152 = vcmp.eq.f32.partialorder %v3860, inf
        %v4153 = vsel %vm4152, %v3860, %v4151
        %vm4154 = vcmp.eq.f32.partialorder %v3860, 0.0
        %v4155 = vand.u32 %v3860, 2147483648
        %v4156 = vsel %vm4154, %v4155, %v4153
        %v4157 = vrsqrt.pop %v3862
        %v4158 = vmul.f32 %v3862, %v4157
        %vm4159 = vcmp.eq.f32.partialorder %v3862, inf
        %v4160 = vsel %vm4159, %v3862, %v4158
        %vm4161 = vcmp.eq.f32.partialorder %v3862, 0.0
        %v4162 = vand.u32 %v3862, 2147483648
        %v4163 = vsel %vm4161, %v4162, %v4160
        %v4164 = vrsqrt.pop %v3864
        %v4165 = vmul.f32 %v3864, %v4164
        %vm4166 = vcmp.eq.f32.partialorder %v3864, inf
        %v4167 = vsel %vm4166, %v3864, %v4165
        %vm4168 = vcmp.eq.f32.partialorder %v3864, 0.0
        %v4169 = vand.u32 %v3864, 2147483648
        %v4170 = vsel %vm4168, %v4169, %v4167
        %v4171 = vrsqrt.pop %v3866
        %v4172 = vmul.f32 %v3866, %v4171
        %vm4173 = vcmp.eq.f32.partialorder %v3866, inf
        %v4174 = vsel %vm4173, %v3866, %v4172
        %vm4175 = vcmp.eq.f32.partialorder %v3866, 0.0
        %v4176 = vand.u32 %v3866, 2147483648
        %v4177 = vsel %vm4175, %v4176, %v4174
        %v4178 = vrsqrt.pop %v3868
        %v4179 = vmul.f32 %v3868, %v4178
        %vm4180 = vcmp.eq.f32.partialorder %v3868, inf
        %v4181 = vsel %vm4180, %v3868, %v4179
        %vm4182 = vcmp.eq.f32.partialorder %v3868, 0.0
        %v4183 = vand.u32 %v3868, 2147483648
        %v4184 = vsel %vm4182, %v4183, %v4181
        %v4185 = vrsqrt.pop %v3870
        %v4186 = vmul.f32 %v3870, %v4185
        %vm4187 = vcmp.eq.f32.partialorder %v3870, inf
        %v4188 = vsel %vm4187, %v3870, %v4186
        %vm4189 = vcmp.eq.f32.partialorder %v3870, 0.0
        %v4190 = vand.u32 %v3870, 2147483648
        %v4191 = vsel %vm4189, %v4190, %v4188
        %v4192 = vrsqrt.pop %v3872
        %v4193 = vmul.f32 %v3872, %v4192
        %vm4194 = vcmp.eq.f32.partialorder %v3872, inf
        %v4195 = vsel %vm4194, %v3872, %v4193
        %vm4196 = vcmp.eq.f32.partialorder %v3872, 0.0
        %v4197 = vand.u32 %v3872, 2147483648
        %v4198 = vsel %vm4196, %v4197, %v4195
        %v4199 = vrsqrt.pop %v3874
        %v4200 = vmul.f32 %v3874, %v4199
        %vm4201 = vcmp.eq.f32.partialorder %v3874, inf
        %v4202 = vsel %vm4201, %v3874, %v4200
        %vm4203 = vcmp.eq.f32.partialorder %v3874, 0.0
        %v4204 = vand.u32 %v3874, 2147483648
        %v4205 = vsel %vm4203, %v4204, %v4202
        %v4206 = vrsqrt.pop %v3876
        %v4207 = vmul.f32 %v3876, %v4206
        %vm4208 = vcmp.eq.f32.partialorder %v3876, inf
        %v4209 = vsel %vm4208, %v3876, %v4207
        %vm4210 = vcmp.eq.f32.partialorder %v3876, 0.0
        %v4211 = vand.u32 %v3876, 2147483648
        %v4212 = vsel %vm4210, %v4211, %v4209
        %v4213 = vrsqrt.pop %v3878
        %v4214 = vmul.f32 %v3878, %v4213
        %vm4215 = vcmp.eq.f32.partialorder %v3878, inf
        %v4216 = vsel %vm4215, %v3878, %v4214
        %vm4217 = vcmp.eq.f32.partialorder %v3878, 0.0
        %v4218 = vand.u32 %v3878, 2147483648
        %v4219 = vsel %vm4217, %v4218, %v4216
        %v4220 = vrsqrt.pop %v3880
        %v4221 = vmul.f32 %v3880, %v4220
        %vm4222 = vcmp.eq.f32.partialorder %v3880, inf
        %v4223 = vsel %vm4222, %v3880, %v4221
        %vm4224 = vcmp.eq.f32.partialorder %v3880, 0.0
        %v4225 = vand.u32 %v3880, 2147483648
        %v4226 = vsel %vm4224, %v4225, %v4223
        %v4227 = vrsqrt.pop %v3882
        %v4228 = vmul.f32 %v3882, %v4227
        %vm4229 = vcmp.eq.f32.partialorder %v3882, inf
        %v4230 = vsel %vm4229, %v3882, %v4228
        %vm4231 = vcmp.eq.f32.partialorder %v3882, 0.0
        %v4232 = vand.u32 %v3882, 2147483648
        %v4233 = vsel %vm4231, %v4232, %v4230
        %v4234 = vrsqrt.pop %v3884
        %v4235 = vmul.f32 %v3884, %v4234
        %vm4236 = vcmp.eq.f32.partialorder %v3884, inf
        %v4237 = vsel %vm4236, %v3884, %v4235
        %vm4238 = vcmp.eq.f32.partialorder %v3884, 0.0
        %v4239 = vand.u32 %v3884, 2147483648
        %v4240 = vsel %vm4238, %v4239, %v4237
        %v4241 = vrsqrt.pop %v3886
        %v4242 = vmul.f32 %v3886, %v4241
        %vm4243 = vcmp.eq.f32.partialorder %v3886, inf
        %v4244 = vsel %vm4243, %v3886, %v4242
        %vm4245 = vcmp.eq.f32.partialorder %v3886, 0.0
        %v4246 = vand.u32 %v3886, 2147483648
        %v4247 = vsel %vm4245, %v4246, %v4244
        %v4248 = vrsqrt.pop %v3888
        %v4249 = vmul.f32 %v3888, %v4248
        %vm4250 = vcmp.eq.f32.partialorder %v3888, inf
        %v4251 = vsel %vm4250, %v3888, %v4249
        %vm4252 = vcmp.eq.f32.partialorder %v3888, 0.0
        %v4253 = vand.u32 %v3888, 2147483648
        %v4254 = vsel %vm4252, %v4253, %v4251
        %v4255 = vrsqrt.pop %v3890
        %v4256 = vmul.f32 %v3890, %v4255
        %vm4257 = vcmp.eq.f32.partialorder %v3890, inf
        %v4258 = vsel %vm4257, %v3890, %v4256
        %vm4259 = vcmp.eq.f32.partialorder %v3890, 0.0
        %v4260 = vand.u32 %v3890, 2147483648
        %v4261 = vsel %vm4259, %v4260, %v4258
        %v4262 = vrsqrt.pop %v3892
        %v4263 = vmul.f32 %v3892, %v4262
        %vm4264 = vcmp.eq.f32.partialorder %v3892, inf
        %v4265 = vsel %vm4264, %v3892, %v4263
        %vm4266 = vcmp.eq.f32.partialorder %v3892, 0.0
        %v4267 = vand.u32 %v3892, 2147483648
        %v4268 = vsel %vm4266, %v4267, %v4265
        %v4269 = vrsqrt.pop %v3894
        %v4270 = vmul.f32 %v3894, %v4269
        %vm4271 = vcmp.eq.f32.partialorder %v3894, inf
        %v4272 = vsel %vm4271, %v3894, %v4270
        %vm4273 = vcmp.eq.f32.partialorder %v3894, 0.0
        %v4274 = vand.u32 %v3894, 2147483648
        %v4275 = vsel %vm4273, %v4274, %v4272
        %v4276 = vrsqrt.pop %v3896
        %v4277 = vmul.f32 %v3896, %v4276
        %vm4278 = vcmp.eq.f32.partialorder %v3896, inf
        %v4279 = vsel %vm4278, %v3896, %v4277
        %vm4280 = vcmp.eq.f32.partialorder %v3896, 0.0
        %v4281 = vand.u32 %v3896, 2147483648
        %v4282 = vsel %vm4280, %v4281, %v4279
        %v4283 = vrsqrt.pop %v3898
        %v4284 = vmul.f32 %v3898, %v4283
        %vm4285 = vcmp.eq.f32.partialorder %v3898, inf
        %v4286 = vsel %vm4285, %v3898, %v4284
        %vm4287 = vcmp.eq.f32.partialorder %v3898, 0.0
        %v4288 = vand.u32 %v3898, 2147483648
        %v4289 = vsel %vm4287, %v4288, %v4286
        %v4290 = vrsqrt.pop %v3900
        %v4291 = vmul.f32 %v3900, %v4290
        %vm4292 = vcmp.eq.f32.partialorder %v3900, inf
        %v4293 = vsel %vm4292, %v3900, %v4291
        %vm4294 = vcmp.eq.f32.partialorder %v3900, 0.0
        %v4295 = vand.u32 %v3900, 2147483648
        %v4296 = vsel %vm4294, %v4295, %v4293
        %v4297 = vrsqrt.pop %v3902
        %v4298 = vmul.f32 %v3902, %v4297
        %vm4299 = vcmp.eq.f32.partialorder %v3902, inf
        %v4300 = vsel %vm4299, %v3902, %v4298
        %vm4301 = vcmp.eq.f32.partialorder %v3902, 0.0
        %v4302 = vand.u32 %v3902, 2147483648
        %v4303 = vsel %vm4301, %v4302, %v4300
        %v4304 = vrsqrt.pop %v3904
        %v4305 = vmul.f32 %v3904, %v4304
        %vm4306 = vcmp.eq.f32.partialorder %v3904, inf
        %v4307 = vsel %vm4306, %v3904, %v4305
        %vm4308 = vcmp.eq.f32.partialorder %v3904, 0.0
        %v4309 = vand.u32 %v3904, 2147483648
        %v4310 = vsel %vm4308, %v4309, %v4307
        %v4311 = vrsqrt.pop %v3906
        %v4312 = vmul.f32 %v3906, %v4311
        %vm4313 = vcmp.eq.f32.partialorder %v3906, inf
        %v4314 = vsel %vm4313, %v3906, %v4312
        %vm4315 = vcmp.eq.f32.partialorder %v3906, 0.0
        %v4316 = vand.u32 %v3906, 2147483648
        %v4317 = vsel %vm4315, %v4316, %v4314
        %v4318 = vrsqrt.pop %v3908
        %v4319 = vmul.f32 %v3908, %v4318
        %vm4320 = vcmp.eq.f32.partialorder %v3908, inf
        %v4321 = vsel %vm4320, %v3908, %v4319
        %vm4322 = vcmp.eq.f32.partialorder %v3908, 0.0
        %v4323 = vand.u32 %v3908, 2147483648
        %v4324 = vsel %vm4322, %v4323, %v4321
        %v4325 = vrsqrt.pop %v3910
        %v4326 = vmul.f32 %v3910, %v4325
        %vm4327 = vcmp.eq.f32.partialorder %v3910, inf
        %v4328 = vsel %vm4327, %v3910, %v4326
        %vm4329 = vcmp.eq.f32.partialorder %v3910, 0.0
        %v4330 = vand.u32 %v3910, 2147483648
        %v4331 = vsel %vm4329, %v4330, %v4328
        %v4332 = vrsqrt.pop %v3912
        %v4333 = vmul.f32 %v3912, %v4332
        %vm4334 = vcmp.eq.f32.partialorder %v3912, inf
        %v4335 = vsel %vm4334, %v3912, %v4333
        %vm4336 = vcmp.eq.f32.partialorder %v3912, 0.0
        %v4337 = vand.u32 %v3912, 2147483648
        %v4338 = vsel %vm4336, %v4337, %v4335
        %v4339 = vrsqrt.pop %v3914
        %v4340 = vmul.f32 %v3914, %v4339
        %vm4341 = vcmp.eq.f32.partialorder %v3914, inf
        %v4342 = vsel %vm4341, %v3914, %v4340
        %vm4343 = vcmp.eq.f32.partialorder %v3914, 0.0
        %v4344 = vand.u32 %v3914, 2147483648
        %v4345 = vsel %vm4343, %v4344, %v4342
        %v4346 = vrsqrt.pop %v3916
        %v4347 = vmul.f32 %v3916, %v4346
        %vm4348 = vcmp.eq.f32.partialorder %v3916, inf
        %v4349 = vsel %vm4348, %v3916, %v4347
        %vm4350 = vcmp.eq.f32.partialorder %v3916, 0.0
        %v4351 = vand.u32 %v3916, 2147483648
        %v4352 = vsel %vm4350, %v4351, %v4349
        %v4353 = vrsqrt.pop %v3918
        %v4354 = vmul.f32 %v3918, %v4353
        %vm4355 = vcmp.eq.f32.partialorder %v3918, inf
        %v4356 = vsel %vm4355, %v3918, %v4354
        %vm4357 = vcmp.eq.f32.partialorder %v3918, 0.0
        %v4358 = vand.u32 %v3918, 2147483648
        %v4359 = vsel %vm4357, %v4358, %v4356
        %v4360 = vrsqrt.pop %v3920
        %v4361 = vmul.f32 %v3920, %v4360
        %vm4362 = vcmp.eq.f32.partialorder %v3920, inf
        %v4363 = vsel %vm4362, %v3920, %v4361
        %vm4364 = vcmp.eq.f32.partialorder %v3920, 0.0
        %v4365 = vand.u32 %v3920, 2147483648
        %v4366 = vsel %vm4364, %v4365, %v4363
        %v4367 = vrsqrt.pop %v3922
        %v4368 = vmul.f32 %v3922, %v4367
        %vm4369 = vcmp.eq.f32.partialorder %v3922, inf
        %v4370 = vsel %vm4369, %v3922, %v4368
        %vm4371 = vcmp.eq.f32.partialorder %v3922, 0.0
        %v4372 = vand.u32 %v3922, 2147483648
        %v4373 = vsel %vm4371, %v4372, %v4370
        %v4374 = vrsqrt.pop %v3924
        %v4375 = vmul.f32 %v3924, %v4374
        %vm4376 = vcmp.eq.f32.partialorder %v3924, inf
        %v4377 = vsel %vm4376, %v3924, %v4375
        %vm4378 = vcmp.eq.f32.partialorder %v3924, 0.0
        %v4379 = vand.u32 %v3924, 2147483648
        %v4380 = vsel %vm4378, %v4379, %v4377
        %v4381 = vrsqrt.pop %v3926
        %v4382 = vmul.f32 %v3926, %v4381
        %vm4383 = vcmp.eq.f32.partialorder %v3926, inf
        %v4384 = vsel %vm4383, %v3926, %v4382
        %vm4385 = vcmp.eq.f32.partialorder %v3926, 0.0
        %v4386 = vand.u32 %v3926, 2147483648
        %v4387 = vsel %vm4385, %v4386, %v4384
        %v4388 = vrsqrt.pop %v3928
        %v4389 = vmul.f32 %v3928, %v4388
        %vm4390 = vcmp.eq.f32.partialorder %v3928, inf
        %v4391 = vsel %vm4390, %v3928, %v4389
        %vm4392 = vcmp.eq.f32.partialorder %v3928, 0.0
        %v4393 = vand.u32 %v3928, 2147483648
        %v4394 = vsel %vm4392, %v4393, %v4391
        %v4395 = vrsqrt.pop %v3930
        %v4396 = vmul.f32 %v3930, %v4395
        %vm4397 = vcmp.eq.f32.partialorder %v3930, inf
        %v4398 = vsel %vm4397, %v3930, %v4396
        %vm4399 = vcmp.eq.f32.partialorder %v3930, 0.0
        %v4400 = vand.u32 %v3930, 2147483648
        %v4401 = vsel %vm4399, %v4400, %v4398
        %v4402 = vrsqrt.pop %v3932
        %v4403 = vmul.f32 %v3932, %v4402
        %vm4404 = vcmp.eq.f32.partialorder %v3932, inf
        %v4405 = vsel %vm4404, %v3932, %v4403
        %vm4406 = vcmp.eq.f32.partialorder %v3932, 0.0
        %v4407 = vand.u32 %v3932, 2147483648
        %v4408 = vsel %vm4406, %v4407, %v4405
        %v4409 = vrsqrt.pop %v3934
        %v4410 = vmul.f32 %v3934, %v4409
        %vm4411 = vcmp.eq.f32.partialorder %v3934, inf
        %v4412 = vsel %vm4411, %v3934, %v4410
        %vm4413 = vcmp.eq.f32.partialorder %v3934, 0.0
        %v4414 = vand.u32 %v3934, 2147483648
        %v4415 = vsel %vm4413, %v4414, %v4412
        %v4416 = vrsqrt.pop %v3936
        %v4417 = vmul.f32 %v3936, %v4416
        %vm4418 = vcmp.eq.f32.partialorder %v3936, inf
        %v4419 = vsel %vm4418, %v3936, %v4417
        %vm4420 = vcmp.eq.f32.partialorder %v3936, 0.0
        %v4421 = vand.u32 %v3936, 2147483648
        %v4422 = vsel %vm4420, %v4421, %v4419
        %v4423 = vrsqrt.pop %v3938
        %v4424 = vmul.f32 %v3938, %v4423
        %vm4425 = vcmp.eq.f32.partialorder %v3938, inf
        %v4426 = vsel %vm4425, %v3938, %v4424
        %vm4427 = vcmp.eq.f32.partialorder %v3938, 0.0
        %v4428 = vand.u32 %v3938, 2147483648
        %v4429 = vsel %vm4427, %v4428, %v4426
        %v4430 = vrsqrt.pop %v3940
        %v4431 = vmul.f32 %v3940, %v4430
        %vm4432 = vcmp.eq.f32.partialorder %v3940, inf
        %v4433 = vsel %vm4432, %v3940, %v4431
        %vm4434 = vcmp.eq.f32.partialorder %v3940, 0.0
        %v4435 = vand.u32 %v3940, 2147483648
        %v4436 = vsel %vm4434, %v4435, %v4433
        %v4437 = vrsqrt.pop %v3942
        %v4438 = vmul.f32 %v3942, %v4437
        %vm4439 = vcmp.eq.f32.partialorder %v3942, inf
        %v4440 = vsel %vm4439, %v3942, %v4438
        %vm4441 = vcmp.eq.f32.partialorder %v3942, 0.0
        %v4442 = vand.u32 %v3942, 2147483648
        %v4443 = vsel %vm4441, %v4442, %v4440
        %v4444 = vrsqrt.pop %v3944
        %v4445 = vmul.f32 %v3944, %v4444
        %vm4446 = vcmp.eq.f32.partialorder %v3944, inf
        %v4447 = vsel %vm4446, %v3944, %v4445
        %vm4448 = vcmp.eq.f32.partialorder %v3944, 0.0
        %v4449 = vand.u32 %v3944, 2147483648
        %v4450 = vsel %vm4448, %v4449, %v4447
        %v4451 = vrsqrt.pop %v3946
        %v4452 = vmul.f32 %v3946, %v4451
        %vm4453 = vcmp.eq.f32.partialorder %v3946, inf
        %v4454 = vsel %vm4453, %v3946, %v4452
        %vm4455 = vcmp.eq.f32.partialorder %v3946, 0.0
        %v4456 = vand.u32 %v3946, 2147483648
        %v4457 = vsel %vm4455, %v4456, %v4454
        %v4458 = vrsqrt.pop %v3948
        %v4459 = vmul.f32 %v3948, %v4458
        %vm4460 = vcmp.eq.f32.partialorder %v3948, inf
        %v4461 = vsel %vm4460, %v3948, %v4459
        %vm4462 = vcmp.eq.f32.partialorder %v3948, 0.0
        %v4463 = vand.u32 %v3948, 2147483648
        %v4464 = vsel %vm4462, %v4463, %v4461
        %v4465 = vrsqrt.pop %v3950
        %v4466 = vmul.f32 %v3950, %v4465
        %vm4467 = vcmp.eq.f32.partialorder %v3950, inf
        %v4468 = vsel %vm4467, %v3950, %v4466
        %vm4469 = vcmp.eq.f32.partialorder %v3950, 0.0
        %v4470 = vand.u32 %v3950, 2147483648
        %v4471 = vsel %vm4469, %v4470, %v4468
        %v4472 = vrsqrt.pop %v3952
        %v4473 = vmul.f32 %v3952, %v4472
        %vm4474 = vcmp.eq.f32.partialorder %v3952, inf
        %v4475 = vsel %vm4474, %v3952, %v4473
        %vm4476 = vcmp.eq.f32.partialorder %v3952, 0.0
        %v4477 = vand.u32 %v3952, 2147483648
        %v4478 = vsel %vm4476, %v4477, %v4475
        %v4479 = vrsqrt.pop %v3954
        %v4480 = vmul.f32 %v3954, %v4479
        %vm4481 = vcmp.eq.f32.partialorder %v3954, inf
        %v4482 = vsel %vm4481, %v3954, %v4480
        %vm4483 = vcmp.eq.f32.partialorder %v3954, 0.0
        %v4484 = vand.u32 %v3954, 2147483648
        %v4485 = vsel %vm4483, %v4484, %v4482
        %v4486 = vrsqrt.pop %v3956
        %v4487 = vmul.f32 %v3956, %v4486
        %vm4488 = vcmp.eq.f32.partialorder %v3956, inf
        %v4489 = vsel %vm4488, %v3956, %v4487
        %vm4490 = vcmp.eq.f32.partialorder %v3956, 0.0
        %v4491 = vand.u32 %v3956, 2147483648
        %v4492 = vsel %vm4490, %v4491, %v4489
        %v4493 = vrsqrt.pop %v3958
        %v4494 = vmul.f32 %v3958, %v4493
        %vm4495 = vcmp.eq.f32.partialorder %v3958, inf
        %v4496 = vsel %vm4495, %v3958, %v4494
        %vm4497 = vcmp.eq.f32.partialorder %v3958, 0.0
        %v4498 = vand.u32 %v3958, 2147483648
        %v4499 = vsel %vm4497, %v4498, %v4496
        %v4500 = vrsqrt.pop %v3960
        %v4501 = vmul.f32 %v3960, %v4500
        %vm4502 = vcmp.eq.f32.partialorder %v3960, inf
        %v4503 = vsel %vm4502, %v3960, %v4501
        %vm4504 = vcmp.eq.f32.partialorder %v3960, 0.0
        %v4505 = vand.u32 %v3960, 2147483648
        %v4506 = vsel %vm4504, %v4505, %v4503
        %v4507 = vrsqrt.pop %v3962
        %v4508 = vmul.f32 %v3962, %v4507
        %vm4509 = vcmp.eq.f32.partialorder %v3962, inf
        %v4510 = vsel %vm4509, %v3962, %v4508
        %vm4511 = vcmp.eq.f32.partialorder %v3962, 0.0
        %v4512 = vand.u32 %v3962, 2147483648
        %v4513 = vsel %vm4511, %v4512, %v4510
        %v4514 = vrsqrt.pop %v3964
        %v4515 = vmul.f32 %v3964, %v4514
        %vm4516 = vcmp.eq.f32.partialorder %v3964, inf
        %v4517 = vsel %vm4516, %v3964, %v4515
        %vm4518 = vcmp.eq.f32.partialorder %v3964, 0.0
        %v4519 = vand.u32 %v3964, 2147483648
        %v4520 = vsel %vm4518, %v4519, %v4517
        %v4521 = vrsqrt.pop %v3966
        %v4522 = vmul.f32 %v3966, %v4521
        %vm4523 = vcmp.eq.f32.partialorder %v3966, inf
        %v4524 = vsel %vm4523, %v3966, %v4522
        %vm4525 = vcmp.eq.f32.partialorder %v3966, 0.0
        %v4526 = vand.u32 %v3966, 2147483648
        %v4527 = vsel %vm4525, %v4526, %v4524
        %v4528 = vrsqrt.pop %v3968
        %v4529 = vmul.f32 %v3968, %v4528
        %vm4530 = vcmp.eq.f32.partialorder %v3968, inf
        %v4531 = vsel %vm4530, %v3968, %v4529
        %vm4532 = vcmp.eq.f32.partialorder %v3968, 0.0
        %v4533 = vand.u32 %v3968, 2147483648
        %v4534 = vsel %vm4532, %v4533, %v4531
        %v4535 = vrsqrt.pop %v3970
        %v4536 = vmul.f32 %v3970, %v4535
        %vm4537 = vcmp.eq.f32.partialorder %v3970, inf
        %v4538 = vsel %vm4537, %v3970, %v4536
        %vm4539 = vcmp.eq.f32.partialorder %v3970, 0.0
        %v4540 = vand.u32 %v3970, 2147483648
        %v4541 = vsel %vm4539, %v4540, %v4538
        %v4542 = vrsqrt.pop %v3972
        %v4543 = vmul.f32 %v3972, %v4542
        %vm4544 = vcmp.eq.f32.partialorder %v3972, inf
        %v4545 = vsel %vm4544, %v3972, %v4543
        %vm4546 = vcmp.eq.f32.partialorder %v3972, 0.0
        %v4547 = vand.u32 %v3972, 2147483648
        %v4548 = vsel %vm4546, %v4547, %v4545
        %v4549 = vrsqrt.pop %v3974
        %v4550 = vmul.f32 %v3974, %v4549
        %vm4551 = vcmp.eq.f32.partialorder %v3974, inf
        %v4552 = vsel %vm4551, %v3974, %v4550
        %vm4553 = vcmp.eq.f32.partialorder %v3974, 0.0
        %v4554 = vand.u32 %v3974, 2147483648
        %v4555 = vsel %vm4553, %v4554, %v4552
        %v4556 = vrsqrt.pop %v3976
        %v4557 = vmul.f32 %v3976, %v4556
        %vm4558 = vcmp.eq.f32.partialorder %v3976, inf
        %v4559 = vsel %vm4558, %v3976, %v4557
        %vm4560 = vcmp.eq.f32.partialorder %v3976, 0.0
        %v4561 = vand.u32 %v3976, 2147483648
        %v4562 = vsel %vm4560, %v4561, %v4559
        %v4563 = vrsqrt.pop %v3978
        %v4564 = vmul.f32 %v3978, %v4563
        %vm4565 = vcmp.eq.f32.partialorder %v3978, inf
        %v4566 = vsel %vm4565, %v3978, %v4564
        %vm4567 = vcmp.eq.f32.partialorder %v3978, 0.0
        %v4568 = vand.u32 %v3978, 2147483648
        %v4569 = vsel %vm4567, %v4568, %v4566
        %v4570 = vrsqrt.pop %v3980
        %v4571 = vmul.f32 %v3980, %v4570
        %vm4572 = vcmp.eq.f32.partialorder %v3980, inf
        %v4573 = vsel %vm4572, %v3980, %v4571
        %vm4574 = vcmp.eq.f32.partialorder %v3980, 0.0
        %v4575 = vand.u32 %v3980, 2147483648
        %v4576 = vsel %vm4574, %v4575, %v4573
        %v4577 = vrsqrt.pop %v3982
        %v4578 = vmul.f32 %v3982, %v4577
        %vm4579 = vcmp.eq.f32.partialorder %v3982, inf
        %v4580 = vsel %vm4579, %v3982, %v4578
        %vm4581 = vcmp.eq.f32.partialorder %v3982, 0.0
        %v4582 = vand.u32 %v3982, 2147483648
        %v4583 = vsel %vm4581, %v4582, %v4580
        %v4584 = vrsqrt.pop %v3984
        %v4585 = vmul.f32 %v3984, %v4584
        %vm4586 = vcmp.eq.f32.partialorder %v3984, inf
        %v4587 = vsel %vm4586, %v3984, %v4585
        %vm4588 = vcmp.eq.f32.partialorder %v3984, 0.0
        %v4589 = vand.u32 %v3984, 2147483648
        %v4590 = vsel %vm4588, %v4589, %v4587
        %v4591 = vrsqrt.pop %v3986
        %v4592 = vmul.f32 %v3986, %v4591
        %vm4593 = vcmp.eq.f32.partialorder %v3986, inf
        %v4594 = vsel %vm4593, %v3986, %v4592
        %vm4595 = vcmp.eq.f32.partialorder %v3986, 0.0
        %v4596 = vand.u32 %v3986, 2147483648
        %v4597 = vsel %vm4595, %v4596, %v4594
        %v4598 = vrsqrt.pop %v3988
        %v4599 = vmul.f32 %v3988, %v4598
        %vm4600 = vcmp.eq.f32.partialorder %v3988, inf
        %v4601 = vsel %vm4600, %v3988, %v4599
        %vm4602 = vcmp.eq.f32.partialorder %v3988, 0.0
        %v4603 = vand.u32 %v3988, 2147483648
        %v4604 = vsel %vm4602, %v4603, %v4601
        %v4605 = vrsqrt.pop %v3990
        %v4606 = vmul.f32 %v3990, %v4605
        %vm4607 = vcmp.eq.f32.partialorder %v3990, inf
        %v4608 = vsel %vm4607, %v3990, %v4606
        %vm4609 = vcmp.eq.f32.partialorder %v3990, 0.0
        %v4610 = vand.u32 %v3990, 2147483648
        %v4611 = vsel %vm4609, %v4610, %v4608
        %v4612 = vrsqrt.pop %v3992
        %v4613 = vmul.f32 %v3992, %v4612
        %vm4614 = vcmp.eq.f32.partialorder %v3992, inf
        %v4615 = vsel %vm4614, %v3992, %v4613
        %vm4616 = vcmp.eq.f32.partialorder %v3992, 0.0
        %v4617 = vand.u32 %v3992, 2147483648
        %v4618 = vsel %vm4616, %v4617, %v4615
        %v4619 = vrsqrt.pop %v3994
        %v4620 = vmul.f32 %v3994, %v4619
        %vm4621 = vcmp.eq.f32.partialorder %v3994, inf
        %v4622 = vsel %vm4621, %v3994, %v4620
        %vm4623 = vcmp.eq.f32.partialorder %v3994, 0.0
        %v4624 = vand.u32 %v3994, 2147483648
        %v4625 = vsel %vm4623, %v4624, %v4622
        %v4626 = vrsqrt.pop %v3996
        %v4627 = vmul.f32 %v3996, %v4626
        %vm4628 = vcmp.eq.f32.partialorder %v3996, inf
        %v4629 = vsel %vm4628, %v3996, %v4627
        %vm4630 = vcmp.eq.f32.partialorder %v3996, 0.0
        %v4631 = vand.u32 %v3996, 2147483648
        %v4632 = vsel %vm4630, %v4631, %v4629
        %v4633 = vrsqrt.pop %v3998
        %v4634 = vmul.f32 %v3998, %v4633
        %vm4635 = vcmp.eq.f32.partialorder %v3998, inf
        %v4636 = vsel %vm4635, %v3998, %v4634
        %vm4637 = vcmp.eq.f32.partialorder %v3998, 0.0
        %v4638 = vand.u32 %v3998, 2147483648
        %v4639 = vsel %vm4637, %v4638, %v4636
        %v4640 = vrsqrt.pop %v4000
        %v4641 = vmul.f32 %v4000, %v4640
        %vm4642 = vcmp.eq.f32.partialorder %v4000, inf
        %v4643 = vsel %vm4642, %v4000, %v4641
        %vm4644 = vcmp.eq.f32.partialorder %v4000, 0.0
        %v4645 = vand.u32 %v4000, 2147483648
        %v4646 = vsel %vm4644, %v4645, %v4643
        %v4647 = vrsqrt.pop %v4002
        %v4648 = vmul.f32 %v4002, %v4647
        %vm4649 = vcmp.eq.f32.partialorder %v4002, inf
        %v4650 = vsel %vm4649, %v4002, %v4648
        %vm4651 = vcmp.eq.f32.partialorder %v4002, 0.0
        %v4652 = vand.u32 %v4002, 2147483648
        %v4653 = vsel %vm4651, %v4652, %v4650
        %v4654 = vrsqrt.pop %v4004
        %v4655 = vmul.f32 %v4004, %v4654
        %vm4656 = vcmp.eq.f32.partialorder %v4004, inf
        %v4657 = vsel %vm4656, %v4004, %v4655
        %vm4658 = vcmp.eq.f32.partialorder %v4004, 0.0
        %v4659 = vand.u32 %v4004, 2147483648
        %v4660 = vsel %vm4658, %v4659, %v4657
        %v4661 = vrsqrt.pop %v4006
        %v4662 = vmul.f32 %v4006, %v4661
        %vm4663 = vcmp.eq.f32.partialorder %v4006, inf
        %v4664 = vsel %vm4663, %v4006, %v4662
        %vm4665 = vcmp.eq.f32.partialorder %v4006, 0.0
        %v4666 = vand.u32 %v4006, 2147483648
        %v4667 = vsel %vm4665, %v4666, %v4664
        %v4668 = vrsqrt.pop %v4008
        %v4669 = vmul.f32 %v4008, %v4668
        %vm4670 = vcmp.eq.f32.partialorder %v4008, inf
        %v4671 = vsel %vm4670, %v4008, %v4669
        %vm4672 = vcmp.eq.f32.partialorder %v4008, 0.0
        %v4673 = vand.u32 %v4008, 2147483648
        %v4674 = vsel %vm4672, %v4673, %v4671
        %v4675 = vrsqrt.pop %v4010
        %v4676 = vmul.f32 %v4010, %v4675
        %vm4677 = vcmp.eq.f32.partialorder %v4010, inf
        %v4678 = vsel %vm4677, %v4010, %v4676
        %vm4679 = vcmp.eq.f32.partialorder %v4010, 0.0
        %v4680 = vand.u32 %v4010, 2147483648
        %v4681 = vsel %vm4679, %v4680, %v4678
        %v4682 = vrsqrt.pop %v4012
        %v4683 = vmul.f32 %v4012, %v4682
        %vm4684 = vcmp.eq.f32.partialorder %v4012, inf
        %v4685 = vsel %vm4684, %v4012, %v4683
        %vm4686 = vcmp.eq.f32.partialorder %v4012, 0.0
        %v4687 = vand.u32 %v4012, 2147483648
        %v4688 = vsel %vm4686, %v4687, %v4685
        %v4689 = vrsqrt.pop %v4014
        %v4690 = vmul.f32 %v4014, %v4689
        %vm4691 = vcmp.eq.f32.partialorder %v4014, inf
        %v4692 = vsel %vm4691, %v4014, %v4690
        %vm4693 = vcmp.eq.f32.partialorder %v4014, 0.0
        %v4694 = vand.u32 %v4014, 2147483648
        %v4695 = vsel %vm4693, %v4694, %v4692
        %v4696 = vrsqrt.pop %v4016
        %v4697 = vmul.f32 %v4016, %v4696
        %vm4698 = vcmp.eq.f32.partialorder %v4016, inf
        %v4699 = vsel %vm4698, %v4016, %v4697
        %vm4700 = vcmp.eq.f32.partialorder %v4016, 0.0
        %v4701 = vand.u32 %v4016, 2147483648
        %v4702 = vsel %vm4700, %v4701, %v4699
        %v4703 = vrsqrt.pop %v4018
        %v4704 = vmul.f32 %v4018, %v4703
        %vm4705 = vcmp.eq.f32.partialorder %v4018, inf
        %v4706 = vsel %vm4705, %v4018, %v4704
        %vm4707 = vcmp.eq.f32.partialorder %v4018, 0.0
        %v4708 = vand.u32 %v4018, 2147483648
        %v4709 = vsel %vm4707, %v4708, %v4706
        %v4710 = vrsqrt.pop %v4020
        %v4711 = vmul.f32 %v4020, %v4710
        %vm4712 = vcmp.eq.f32.partialorder %v4020, inf
        %v4713 = vsel %vm4712, %v4020, %v4711
        %vm4714 = vcmp.eq.f32.partialorder %v4020, 0.0
        %v4715 = vand.u32 %v4020, 2147483648
        %v4716 = vsel %vm4714, %v4715, %v4713
        %v4717 = vrsqrt.pop %v4022
        %v4718 = vmul.f32 %v4022, %v4717
        %vm4719 = vcmp.eq.f32.partialorder %v4022, inf
        %v4720 = vsel %vm4719, %v4022, %v4718
        %vm4721 = vcmp.eq.f32.partialorder %v4022, 0.0
        %v4722 = vand.u32 %v4022, 2147483648
        %v4723 = vsel %vm4721, %v4722, %v4720
        %v4724 = vrsqrt.pop %v4024
        %v4725 = vmul.f32 %v4024, %v4724
        %vm4726 = vcmp.eq.f32.partialorder %v4024, inf
        %v4727 = vsel %vm4726, %v4024, %v4725
        %vm4728 = vcmp.eq.f32.partialorder %v4024, 0.0
        %v4729 = vand.u32 %v4024, 2147483648
        %v4730 = vsel %vm4728, %v4729, %v4727
        %v4731 = vrsqrt.pop %v4026
        %v4732 = vmul.f32 %v4026, %v4731
        %vm4733 = vcmp.eq.f32.partialorder %v4026, inf
        %v4734 = vsel %vm4733, %v4026, %v4732
        %vm4735 = vcmp.eq.f32.partialorder %v4026, 0.0
        %v4736 = vand.u32 %v4026, 2147483648
        %v4737 = vsel %vm4735, %v4736, %v4734
        %v4738 = vrsqrt.pop %v4028
        %v4739 = vmul.f32 %v4028, %v4738
        %vm4740 = vcmp.eq.f32.partialorder %v4028, inf
        %v4741 = vsel %vm4740, %v4028, %v4739
        %vm4742 = vcmp.eq.f32.partialorder %v4028, 0.0
        %v4743 = vand.u32 %v4028, 2147483648
        %v4744 = vsel %vm4742, %v4743, %v4741
        %v4745 = vrsqrt.pop %v4030
        %v4746 = vmul.f32 %v4030, %v4745
        %vm4747 = vcmp.eq.f32.partialorder %v4030, inf
        %v4748 = vsel %vm4747, %v4030, %v4746
        %vm4749 = vcmp.eq.f32.partialorder %v4030, 0.0
        %v4750 = vand.u32 %v4030, 2147483648
        %v4751 = vsel %vm4749, %v4750, %v4748
        %v4752 = vrsqrt.pop %v4032
        %v4753 = vmul.f32 %v4032, %v4752
        %vm4754 = vcmp.eq.f32.partialorder %v4032, inf
        %v4755 = vsel %vm4754, %v4032, %v4753
        %vm4756 = vcmp.eq.f32.partialorder %v4032, 0.0
        %v4757 = vand.u32 %v4032, 2147483648
        %v4758 = vsel %vm4756, %v4757, %v4755
        %v4759 = vrsqrt.pop %v4034
        %v4760 = vmul.f32 %v4034, %v4759
        %vm4761 = vcmp.eq.f32.partialorder %v4034, inf
        %v4762 = vsel %vm4761, %v4034, %v4760
        %vm4763 = vcmp.eq.f32.partialorder %v4034, 0.0
        %v4764 = vand.u32 %v4034, 2147483648
        %v4765 = vsel %vm4763, %v4764, %v4762
        %v4766 = vrsqrt.pop %v4036
        %v4767 = vmul.f32 %v4036, %v4766
        %vm4768 = vcmp.eq.f32.partialorder %v4036, inf
        %v4769 = vsel %vm4768, %v4036, %v4767
        %vm4770 = vcmp.eq.f32.partialorder %v4036, 0.0
        %v4771 = vand.u32 %v4036, 2147483648
        %v4772 = vsel %vm4770, %v4771, %v4769
        %v4773 = vrsqrt.pop %v4038
        %v4774 = vmul.f32 %v4038, %v4773
        %vm4775 = vcmp.eq.f32.partialorder %v4038, inf
        %v4776 = vsel %vm4775, %v4038, %v4774
        %vm4777 = vcmp.eq.f32.partialorder %v4038, 0.0
        %v4778 = vand.u32 %v4038, 2147483648
        %v4779 = vsel %vm4777, %v4778, %v4776
        %v4780 = vrsqrt.pop %v4040
        %v4781 = vmul.f32 %v4040, %v4780
        %vm4782 = vcmp.eq.f32.partialorder %v4040, inf
        %v4783 = vsel %vm4782, %v4040, %v4781
        %vm4784 = vcmp.eq.f32.partialorder %v4040, 0.0
        %v4785 = vand.u32 %v4040, 2147483648
        %v4786 = vsel %vm4784, %v4785, %v4783
        %v4787 = vrsqrt.pop %v4042
        %v4788 = vmul.f32 %v4042, %v4787
        %vm4789 = vcmp.eq.f32.partialorder %v4042, inf
        %v4790 = vsel %vm4789, %v4042, %v4788
        %vm4791 = vcmp.eq.f32.partialorder %v4042, 0.0
        %v4792 = vand.u32 %v4042, 2147483648
        %v4793 = vsel %vm4791, %v4792, %v4790
        %v4794 = vrsqrt.pop %v4044
        %v4795 = vmul.f32 %v4044, %v4794
        %vm4796 = vcmp.eq.f32.partialorder %v4044, inf
        %v4797 = vsel %vm4796, %v4044, %v4795
        %vm4798 = vcmp.eq.f32.partialorder %v4044, 0.0
        %v4799 = vand.u32 %v4044, 2147483648
        %v4800 = vsel %vm4798, %v4799, %v4797
        %v4801 = vrsqrt.pop %v4046
        %v4802 = vmul.f32 %v4046, %v4801
        %vm4803 = vcmp.eq.f32.partialorder %v4046, inf
        %v4804 = vsel %vm4803, %v4046, %v4802
        %vm4805 = vcmp.eq.f32.partialorder %v4046, 0.0
        %v4806 = vand.u32 %v4046, 2147483648
        %v4807 = vsel %vm4805, %v4806, %v4804
        %v4808 = vrsqrt.pop %v4048
        %v4809 = vmul.f32 %v4048, %v4808
        %vm4810 = vcmp.eq.f32.partialorder %v4048, inf
        %v4811 = vsel %vm4810, %v4048, %v4809
        %vm4812 = vcmp.eq.f32.partialorder %v4048, 0.0
        %v4813 = vand.u32 %v4048, 2147483648
        %v4814 = vsel %vm4812, %v4813, %v4811
        %v4815 = vrsqrt.pop %v4050
        %v4816 = vmul.f32 %v4050, %v4815
        %vm4817 = vcmp.eq.f32.partialorder %v4050, inf
        %v4818 = vsel %vm4817, %v4050, %v4816
        %vm4819 = vcmp.eq.f32.partialorder %v4050, 0.0
        %v4820 = vand.u32 %v4050, 2147483648
        %v4821 = vsel %vm4819, %v4820, %v4818
        %v4822 = vrsqrt.pop %v4052
        %v4823 = vmul.f32 %v4052, %v4822
        %vm4824 = vcmp.eq.f32.partialorder %v4052, inf
        %v4825 = vsel %vm4824, %v4052, %v4823
        %vm4826 = vcmp.eq.f32.partialorder %v4052, 0.0
        %v4827 = vand.u32 %v4052, 2147483648
        %v4828 = vsel %vm4826, %v4827, %v4825
        %v4829 = vrsqrt.pop %v4054
        %v4830 = vmul.f32 %v4054, %v4829
        %vm4831 = vcmp.eq.f32.partialorder %v4054, inf
        %v4832 = vsel %vm4831, %v4054, %v4830
        %vm4833 = vcmp.eq.f32.partialorder %v4054, 0.0
        %v4834 = vand.u32 %v4054, 2147483648
        %v4835 = vsel %vm4833, %v4834, %v4832
        %v4836 = vrsqrt.pop %v4056
        %v4837 = vmul.f32 %v4056, %v4836
        %vm4838 = vcmp.eq.f32.partialorder %v4056, inf
        %v4839 = vsel %vm4838, %v4056, %v4837
        %vm4840 = vcmp.eq.f32.partialorder %v4056, 0.0
        %v4841 = vand.u32 %v4056, 2147483648
        %v4842 = vsel %vm4840, %v4841, %v4839
        %v4843 = vrsqrt.pop %v4058
        %v4844 = vmul.f32 %v4058, %v4843
        %vm4845 = vcmp.eq.f32.partialorder %v4058, inf
        %v4846 = vsel %vm4845, %v4058, %v4844
        %vm4847 = vcmp.eq.f32.partialorder %v4058, 0.0
        %v4848 = vand.u32 %v4058, 2147483648
        %v4849 = vsel %vm4847, %v4848, %v4846
        %v4850 = vrsqrt.pop %v4060
        %v4851 = vmul.f32 %v4060, %v4850
        %vm4852 = vcmp.eq.f32.partialorder %v4060, inf
        %v4853 = vsel %vm4852, %v4060, %v4851
        %vm4854 = vcmp.eq.f32.partialorder %v4060, 0.0
        %v4855 = vand.u32 %v4060, 2147483648
        %v4856 = vsel %vm4854, %v4855, %v4853
        %v4857 = vrsqrt.pop %v4062
        %v4858 = vmul.f32 %v4062, %v4857
        %vm4859 = vcmp.eq.f32.partialorder %v4062, inf
        %v4860 = vsel %vm4859, %v4062, %v4858
        %vm4861 = vcmp.eq.f32.partialorder %v4062, 0.0
        %v4862 = vand.u32 %v4062, 2147483648
        %v4863 = vsel %vm4861, %v4862, %v4860
        %v4864 = vrsqrt.pop %v4064
        %v4865 = vmul.f32 %v4064, %v4864
        %vm4866 = vcmp.eq.f32.partialorder %v4064, inf
        %v4867 = vsel %vm4866, %v4064, %v4865
        %vm4868 = vcmp.eq.f32.partialorder %v4064, 0.0
        %v4869 = vand.u32 %v4064, 2147483648
        %v4870 = vsel %vm4868, %v4869, %v4867
        %v4871 = vrsqrt.pop %v4066
        %v4872 = vmul.f32 %v4066, %v4871
        %vm4873 = vcmp.eq.f32.partialorder %v4066, inf
        %v4874 = vsel %vm4873, %v4066, %v4872
        %vm4875 = vcmp.eq.f32.partialorder %v4066, 0.0
        %v4876 = vand.u32 %v4066, 2147483648
        %v4877 = vsel %vm4875, %v4876, %v4874
        %v4878 = vrsqrt.pop %v4068
        %v4879 = vmul.f32 %v4068, %v4878
        %vm4880 = vcmp.eq.f32.partialorder %v4068, inf
        %v4881 = vsel %vm4880, %v4068, %v4879
        %vm4882 = vcmp.eq.f32.partialorder %v4068, 0.0
        %v4883 = vand.u32 %v4068, 2147483648
        %v4884 = vsel %vm4882, %v4883, %v4881
        %v4885 = vrsqrt.pop %v4070
        %v4886 = vmul.f32 %v4070, %v4885
        %vm4887 = vcmp.eq.f32.partialorder %v4070, inf
        %v4888 = vsel %vm4887, %v4070, %v4886
        %vm4889 = vcmp.eq.f32.partialorder %v4070, 0.0
        %v4890 = vand.u32 %v4070, 2147483648
        %v4891 = vsel %vm4889, %v4890, %v4888
        %v4892 = vrsqrt.pop %v4072
        %v4893 = vmul.f32 %v4072, %v4892
        %vm4894 = vcmp.eq.f32.partialorder %v4072, inf
        %v4895 = vsel %vm4894, %v4072, %v4893
        %vm4896 = vcmp.eq.f32.partialorder %v4072, 0.0
        %v4897 = vand.u32 %v4072, 2147483648
        %v4898 = vsel %vm4896, %v4897, %v4895
        %v4899 = vrsqrt.pop %v4074
        %v4900 = vmul.f32 %v4074, %v4899
        %vm4901 = vcmp.eq.f32.partialorder %v4074, inf
        %v4902 = vsel %vm4901, %v4074, %v4900
        %vm4903 = vcmp.eq.f32.partialorder %v4074, 0.0
        %v4904 = vand.u32 %v4074, 2147483648
        %v4905 = vsel %vm4903, %v4904, %v4902
        %v4906 = vrsqrt.pop %v4076
        %v4907 = vmul.f32 %v4076, %v4906
        %vm4908 = vcmp.eq.f32.partialorder %v4076, inf
        %v4909 = vsel %vm4908, %v4076, %v4907
        %vm4910 = vcmp.eq.f32.partialorder %v4076, 0.0
        %v4911 = vand.u32 %v4076, 2147483648
        %v4912 = vsel %vm4910, %v4911, %v4909
        %v4913 = vrsqrt.pop %v4078
        %v4914 = vmul.f32 %v4078, %v4913
        %vm4915 = vcmp.eq.f32.partialorder %v4078, inf
        %v4916 = vsel %vm4915, %v4078, %v4914
        %vm4917 = vcmp.eq.f32.partialorder %v4078, 0.0
        %v4918 = vand.u32 %v4078, 2147483648
        %v4919 = vsel %vm4917, %v4918, %v4916
        %v4920 = vrsqrt.pop %v4080
        %v4921 = vmul.f32 %v4080, %v4920
        %vm4922 = vcmp.eq.f32.partialorder %v4080, inf
        %v4923 = vsel %vm4922, %v4080, %v4921
        %vm4924 = vcmp.eq.f32.partialorder %v4080, 0.0
        %v4925 = vand.u32 %v4080, 2147483648
        %v4926 = vsel %vm4924, %v4925, %v4923
        %v4927 = vrsqrt.pop %v4082
        %v4928 = vmul.f32 %v4082, %v4927
        %vm4929 = vcmp.eq.f32.partialorder %v4082, inf
        %v4930 = vsel %vm4929, %v4082, %v4928
        %vm4931 = vcmp.eq.f32.partialorder %v4082, 0.0
        %v4932 = vand.u32 %v4082, 2147483648
        %v4933 = vsel %vm4931, %v4932, %v4930
        %v4934 = vrsqrt.pop %v4084
        %v4935 = vmul.f32 %v4084, %v4934
        %vm4936 = vcmp.eq.f32.partialorder %v4084, inf
        %v4937 = vsel %vm4936, %v4084, %v4935
        %vm4938 = vcmp.eq.f32.partialorder %v4084, 0.0
        %v4939 = vand.u32 %v4084, 2147483648
        %v4940 = vsel %vm4938, %v4939, %v4937
        %v4941 = vrsqrt.pop %v4086
        %v4942 = vmul.f32 %v4086, %v4941
        %vm4943 = vcmp.eq.f32.partialorder %v4086, inf
        %v4944 = vsel %vm4943, %v4086, %v4942
        %vm4945 = vcmp.eq.f32.partialorder %v4086, 0.0
        %v4946 = vand.u32 %v4086, 2147483648
        %v4947 = vsel %vm4945, %v4946, %v4944
        %v4948 = vrsqrt.pop %v4088
        %v4949 = vmul.f32 %v4088, %v4948
        %vm4950 = vcmp.eq.f32.partialorder %v4088, inf
        %v4951 = vsel %vm4950, %v4088, %v4949
        %vm4952 = vcmp.eq.f32.partialorder %v4088, 0.0
        %v4953 = vand.u32 %v4088, 2147483648
        %v4954 = vsel %vm4952, %v4953, %v4951
        %v4955 = vrsqrt.pop %v4090
        %v4956 = vmul.f32 %v4090, %v4955
        %vm4957 = vcmp.eq.f32.partialorder %v4090, inf
        %v4958 = vsel %vm4957, %v4090, %v4956
        %vm4959 = vcmp.eq.f32.partialorder %v4090, 0.0
        %v4960 = vand.u32 %v4090, 2147483648
        %v4961 = vsel %vm4959, %v4960, %v4958
        %v4962 = vrsqrt.pop %v4092
        %v4963 = vmul.f32 %v4092, %v4962
        %vm4964 = vcmp.eq.f32.partialorder %v4092, inf
        %v4965 = vsel %vm4964, %v4092, %v4963
        %vm4966 = vcmp.eq.f32.partialorder %v4092, 0.0
        %v4967 = vand.u32 %v4092, 2147483648
        %v4968 = vsel %vm4966, %v4967, %v4965
        %v4969 = vrsqrt.pop %v4094
        %v4970 = vmul.f32 %v4094, %v4969
        %vm4971 = vcmp.eq.f32.partialorder %v4094, inf
        %v4972 = vsel %vm4971, %v4094, %v4970
        %vm4973 = vcmp.eq.f32.partialorder %v4094, 0.0
        %v4974 = vand.u32 %v4094, 2147483648
        %v4975 = vsel %vm4973, %v4974, %v4972
        %v4976 = vrsqrt.pop %v4096
        %v4977 = vmul.f32 %v4096, %v4976
        %vm4978 = vcmp.eq.f32.partialorder %v4096, inf
        %v4979 = vsel %vm4978, %v4096, %v4977
        %vm4980 = vcmp.eq.f32.partialorder %v4096, 0.0
        %v4981 = vand.u32 %v4096, 2147483648
        %v4982 = vsel %vm4980, %v4981, %v4979
        %v4983 = vrsqrt.pop %v4098
        %v4984 = vmul.f32 %v4098, %v4983
        %vm4985 = vcmp.eq.f32.partialorder %v4098, inf
        %v4986 = vsel %vm4985, %v4098, %v4984
        %vm4987 = vcmp.eq.f32.partialorder %v4098, 0.0
        %v4988 = vand.u32 %v4098, 2147483648
        %v4989 = vsel %vm4987, %v4988, %v4986
        %v4990 = vrsqrt.pop %v4100
        %v4991 = vmul.f32 %v4100, %v4990
        %vm4992 = vcmp.eq.f32.partialorder %v4100, inf
        %v4993 = vsel %vm4992, %v4100, %v4991
        %vm4994 = vcmp.eq.f32.partialorder %v4100, 0.0
        %v4995 = vand.u32 %v4100, 2147483648
        %v4996 = vsel %vm4994, %v4995, %v4993
        %v4997 = vadd.f32 %v4107, 1e-10
        %v4998 = vadd.f32 %v4114, 1e-10
        %v4999 = vadd.f32 %v4121, 1e-10
        %v5000 = vadd.f32 %v4128, 1e-10
        %v5001 = vadd.f32 %v4135, 1e-10
        %v5002 = vadd.f32 %v4142, 1e-10
        %v5003 = vadd.f32 %v4149, 1e-10
        %v5004 = vadd.f32 %v4156, 1e-10
        %v5005 = vadd.f32 %v4163, 1e-10
        %v5006 = vadd.f32 %v4170, 1e-10
        %v5007 = vadd.f32 %v4177, 1e-10
        %v5008 = vadd.f32 %v4184, 1e-10
        %v5009 = vadd.f32 %v4191, 1e-10
        %v5010 = vadd.f32 %v4198, 1e-10
        %v5011 = vadd.f32 %v4205, 1e-10
        %v5012 = vadd.f32 %v4212, 1e-10
        %v5013 = vadd.f32 %v4219, 1e-10
        %v5014 = vadd.f32 %v4226, 1e-10
        %v5015 = vadd.f32 %v4233, 1e-10
        %v5016 = vadd.f32 %v4240, 1e-10
        %v5017 = vadd.f32 %v4247, 1e-10
        %v5018 = vadd.f32 %v4254, 1e-10
        %v5019 = vadd.f32 %v4261, 1e-10
        %v5020 = vadd.f32 %v4268, 1e-10
        %v5021 = vadd.f32 %v4275, 1e-10
        %v5022 = vadd.f32 %v4282, 1e-10
        %v5023 = vadd.f32 %v4289, 1e-10
        %v5024 = vadd.f32 %v4296, 1e-10
        %v5025 = vadd.f32 %v4303, 1e-10
        %v5026 = vadd.f32 %v4310, 1e-10
        %v5027 = vadd.f32 %v4317, 1e-10
        %v5028 = vadd.f32 %v4324, 1e-10
        %v5029 = vadd.f32 %v4331, 1e-10
        %v5030 = vadd.f32 %v4338, 1e-10
        %v5031 = vadd.f32 %v4345, 1e-10
        %v5032 = vadd.f32 %v4352, 1e-10
        %v5033 = vadd.f32 %v4359, 1e-10
        %v5034 = vadd.f32 %v4366, 1e-10
        %v5035 = vadd.f32 %v4373, 1e-10
        %v5036 = vadd.f32 %v4380, 1e-10
        %v5037 = vadd.f32 %v4387, 1e-10
        %v5038 = vadd.f32 %v4394, 1e-10
        %v5039 = vadd.f32 %v4401, 1e-10
        %v5040 = vadd.f32 %v4408, 1e-10
        %v5041 = vadd.f32 %v4415, 1e-10
        %v5042 = vadd.f32 %v4422, 1e-10
        %v5043 = vadd.f32 %v4429, 1e-10
        %v5044 = vadd.f32 %v4436, 1e-10
        %v5045 = vadd.f32 %v4443, 1e-10
        %v5046 = vadd.f32 %v4450, 1e-10
        %v5047 = vadd.f32 %v4457, 1e-10
        %v5048 = vadd.f32 %v4464, 1e-10
        %v5049 = vadd.f32 %v4471, 1e-10
        %v5050 = vadd.f32 %v4478, 1e-10
        %v5051 = vadd.f32 %v4485, 1e-10
        %v5052 = vadd.f32 %v4492, 1e-10
        %v5053 = vadd.f32 %v4499, 1e-10
        %v5054 = vadd.f32 %v4506, 1e-10
        %v5055 = vadd.f32 %v4513, 1e-10
        %v5056 = vadd.f32 %v4520, 1e-10
        %v5057 = vadd.f32 %v4527, 1e-10
        %v5058 = vadd.f32 %v4534, 1e-10
        %v5059 = vadd.f32 %v4541, 1e-10
        %v5060 = vadd.f32 %v4548, 1e-10
        %v5061 = vadd.f32 %v4555, 1e-10
        %v5062 = vadd.f32 %v4562, 1e-10
        %v5063 = vadd.f32 %v4569, 1e-10
        %v5064 = vadd.f32 %v4576, 1e-10
        %v5065 = vadd.f32 %v4583, 1e-10
        %v5066 = vadd.f32 %v4590, 1e-10
        %v5067 = vadd.f32 %v4597, 1e-10
        %v5068 = vadd.f32 %v4604, 1e-10
        %v5069 = vadd.f32 %v4611, 1e-10
        %v5070 = vadd.f32 %v4618, 1e-10
        %v5071 = vadd.f32 %v4625, 1e-10
        %v5072 = vadd.f32 %v4632, 1e-10
        %v5073 = vadd.f32 %v4639, 1e-10
        %v5074 = vadd.f32 %v4646, 1e-10
        %v5075 = vadd.f32 %v4653, 1e-10
        %v5076 = vadd.f32 %v4660, 1e-10
        %v5077 = vadd.f32 %v4667, 1e-10
        %v5078 = vadd.f32 %v4674, 1e-10
        %v5079 = vadd.f32 %v4681, 1e-10
        %v5080 = vadd.f32 %v4688, 1e-10
        %v5081 = vadd.f32 %v4695, 1e-10
        %v5082 = vadd.f32 %v4702, 1e-10
        %v5083 = vadd.f32 %v4709, 1e-10
        %v5084 = vadd.f32 %v4716, 1e-10
        %v5085 = vadd.f32 %v4723, 1e-10
        %v5086 = vadd.f32 %v4730, 1e-10
        %v5087 = vadd.f32 %v4737, 1e-10
        %v5088 = vadd.f32 %v4744, 1e-10
        %v5089 = vadd.f32 %v4751, 1e-10
        %v5090 = vadd.f32 %v4758, 1e-10
        %v5091 = vadd.f32 %v4765, 1e-10
        %v5092 = vadd.f32 %v4772, 1e-10
        %v5093 = vadd.f32 %v4779, 1e-10
        %v5094 = vadd.f32 %v4786, 1e-10
        %v5095 = vadd.f32 %v4793, 1e-10
        %v5096 = vadd.f32 %v4800, 1e-10
        %v5097 = vadd.f32 %v4807, 1e-10
        %v5098 = vadd.f32 %v4814, 1e-10
        %v5099 = vadd.f32 %v4821, 1e-10
        %v5100 = vadd.f32 %v4828, 1e-10
        %v5101 = vadd.f32 %v4835, 1e-10
        %v5102 = vadd.f32 %v4842, 1e-10
        %v5103 = vadd.f32 %v4849, 1e-10
        %v5104 = vadd.f32 %v4856, 1e-10
        %v5105 = vadd.f32 %v4863, 1e-10
        %v5106 = vadd.f32 %v4870, 1e-10
        %v5107 = vadd.f32 %v4877, 1e-10
        %v5108 = vadd.f32 %v4884, 1e-10
        %v5109 = vadd.f32 %v4891, 1e-10
        %v5110 = vadd.f32 %v4898, 1e-10
        %v5111 = vadd.f32 %v4905, 1e-10
        %v5112 = vadd.f32 %v4912, 1e-10
        %v5113 = vadd.f32 %v4919, 1e-10
        %v5114 = vadd.f32 %v4926, 1e-10
        %v5115 = vadd.f32 %v4933, 1e-10
        %v5116 = vadd.f32 %v4940, 1e-10
        %v5117 = vadd.f32 %v4947, 1e-10
        %v5118 = vadd.f32 %v4954, 1e-10
        %v5119 = vadd.f32 %v4961, 1e-10
        %v5120 = vadd.f32 %v4968, 1e-10
        %v5121 = vadd.f32 %v4975, 1e-10
        %v5122 = vadd.f32 %v4982, 1e-10
        %v5123 = vadd.f32 %v4989, 1e-10
        %v5124 = vadd.f32 %v4996, 1e-10
        %v5125 = vrcp.pop %v4997
        %v5126 = vrcp.pop %v4998
        %v5127 = vrcp.pop %v4999
        %v5128 = vrcp.pop %v5000
        %v5129 = vrcp.pop %v5001
        %v5130 = vrcp.pop %v5002
        %v5131 = vrcp.pop %v5003
        %v5132 = vrcp.pop %v5004
        %v5133 = vrcp.pop %v5005
        %v5134 = vrcp.pop %v5006
        %v5135 = vrcp.pop %v5007
        %v5136 = vrcp.pop %v5008
        %v5137 = vrcp.pop %v5009
        %v5138 = vrcp.pop %v5010
        %v5139 = vrcp.pop %v5011
        %v5140 = vrcp.pop %v5012
        %v5141 = vrcp.pop %v5013
        %v5142 = vrcp.pop %v5014
        %v5143 = vrcp.pop %v5015
        %v5144 = vrcp.pop %v5016
        %v5145 = vrcp.pop %v5017
        %v5146 = vrcp.pop %v5018
        %v5147 = vrcp.pop %v5019
        %v5148 = vrcp.pop %v5020
        %v5149 = vrcp.pop %v5021
        %v5150 = vrcp.pop %v5022
        %v5151 = vrcp.pop %v5023
        %v5152 = vrcp.pop %v5024
        %v5153 = vrcp.pop %v5025
        %v5154 = vrcp.pop %v5026
        %v5155 = vrcp.pop %v5027
        %v5156 = vrcp.pop %v5028
        %v5157 = vrcp.pop %v5029
        %v5158 = vrcp.pop %v5030
        %v5159 = vrcp.pop %v5031
        %v5160 = vrcp.pop %v5032
        %v5161 = vrcp.pop %v5033
        %v5162 = vrcp.pop %v5034
        %v5163 = vrcp.pop %v5035
        %v5164 = vrcp.pop %v5036
        %v5165 = vrcp.pop %v5037
        %v5166 = vrcp.pop %v5038
        %v5167 = vrcp.pop %v5039
        %v5168 = vrcp.pop %v5040
        %v5169 = vrcp.pop %v5041
        %v5170 = vrcp.pop %v5042
        %v5171 = vrcp.pop %v5043
        %v5172 = vrcp.pop %v5044
        %v5173 = vrcp.pop %v5045
        %v5174 = vrcp.pop %v5046
        %v5175 = vrcp.pop %v5047
        %v5176 = vrcp.pop %v5048
        %v5177 = vrcp.pop %v5049
        %v5178 = vrcp.pop %v5050
        %v5179 = vrcp.pop %v5051
        %v5180 = vrcp.pop %v5052
        %v5181 = vrcp.pop %v5053
        %v5182 = vrcp.pop %v5054
        %v5183 = vrcp.pop %v5055
        %v5184 = vrcp.pop %v5056
        %v5185 = vrcp.pop %v5057
        %v5186 = vrcp.pop %v5058
        %v5187 = vrcp.pop %v5059
        %v5188 = vrcp.pop %v5060
        %v5189 = vrcp.pop %v5061
        %v5190 = vrcp.pop %v5062
        %v5191 = vrcp.pop %v5063
        %v5192 = vrcp.pop %v5064
        %v5193 = vrcp.pop %v5065
        %v5194 = vrcp.pop %v5066
        %v5195 = vrcp.pop %v5067
        %v5196 = vrcp.pop %v5068
        %v5197 = vrcp.pop %v5069
        %v5198 = vrcp.pop %v5070
        %v5199 = vrcp.pop %v5071
        %v5200 = vrcp.pop %v5072
        %v5201 = vrcp.pop %v5073
        %v5202 = vrcp.pop %v5074
        %v5203 = vrcp.pop %v5075
        %v5204 = vrcp.pop %v5076
        %v5205 = vrcp.pop %v5077
        %v5206 = vrcp.pop %v5078
        %v5207 = vrcp.pop %v5079
        %v5208 = vrcp.pop %v5080
        %v5209 = vrcp.pop %v5081
        %v5210 = vrcp.pop %v5082
        %v5211 = vrcp.pop %v5083
        %v5212 = vrcp.pop %v5084
        %v5213 = vrcp.pop %v5085
        %v5214 = vrcp.pop %v5086
        %v5215 = vrcp.pop %v5087
        %v5216 = vrcp.pop %v5088
        %v5217 = vrcp.pop %v5089
        %v5218 = vrcp.pop %v5090
        %v5219 = vrcp.pop %v5091
        %v5220 = vrcp.pop %v5092
        %v5221 = vrcp.pop %v5093
        %v5222 = vrcp.pop %v5094
        %v5223 = vrcp.pop %v5095
        %v5224 = vrcp.pop %v5096
        %v5225 = vrcp.pop %v5097
        %v5226 = vrcp.pop %v5098
        %v5227 = vrcp.pop %v5099
        %v5228 = vrcp.pop %v5100
        %v5229 = vrcp.pop %v5101
        %v5230 = vrcp.pop %v5102
        %v5231 = vrcp.pop %v5103
        %v5232 = vrcp.pop %v5104
        %v5233 = vrcp.pop %v5105
        %v5234 = vrcp.pop %v5106
        %v5235 = vrcp.pop %v5107
        %v5236 = vrcp.pop %v5108
        %v5237 = vrcp.pop %v5109
        %v5238 = vrcp.pop %v5110
        %v5239 = vrcp.pop %v5111
        %v5240 = vrcp.pop %v5112
        %v5241 = vrcp.pop %v5113
        %v5242 = vrcp.pop %v5114
        %v5243 = vrcp.pop %v5115
        %v5244 = vrcp.pop %v5116
        %v5245 = vrcp.pop %v5117
        %v5246 = vrcp.pop %v5118
        %v5247 = vrcp.pop %v5119
        %v5248 = vrcp.pop %v5120
        %v5249 = vrcp.pop %v5121
        %v5250 = vrcp.pop %v5122
        %v5251 = vrcp.pop %v5123
        %v5252 = vrcp.pop %v5124
        %v5253 = vmul.f32 %v3589, %v5125
        %v5254 = vmul.f32 %v3590, %v5126
        %v5255 = vmul.f32 %v3591, %v5127
        %v5256 = vmul.f32 %v3592, %v5128
        %v5257 = vmul.f32 %v3593, %v5129
        %v5258 = vmul.f32 %v3594, %v5130
        %v5259 = vmul.f32 %v3595, %v5131
        %v5260 = vmul.f32 %v3596, %v5132
        %v5261 = vmul.f32 %v3597, %v5133
        %v5262 = vmul.f32 %v3598, %v5134
        %v5263 = vmul.f32 %v3599, %v5135
        %v5264 = vmul.f32 %v3600, %v5136
        %v5265 = vmul.f32 %v3601, %v5137
        %v5266 = vmul.f32 %v3602, %v5138
        %v5267 = vmul.f32 %v3603, %v5139
        %v5268 = vmul.f32 %v3604, %v5140
        %v5269 = vmul.f32 %v3605, %v5141
        %v5270 = vmul.f32 %v3606, %v5142
        %v5271 = vmul.f32 %v3607, %v5143
        %v5272 = vmul.f32 %v3608, %v5144
        %v5273 = vmul.f32 %v3609, %v5145
        %v5274 = vmul.f32 %v3610, %v5146
        %v5275 = vmul.f32 %v3611, %v5147
        %v5276 = vmul.f32 %v3612, %v5148
        %v5277 = vmul.f32 %v3613, %v5149
        %v5278 = vmul.f32 %v3614, %v5150
        %v5279 = vmul.f32 %v3615, %v5151
        %v5280 = vmul.f32 %v3616, %v5152
        %v5281 = vmul.f32 %v3617, %v5153
        %v5282 = vmul.f32 %v3618, %v5154
        %v5283 = vmul.f32 %v3619, %v5155
        %v5284 = vmul.f32 %v3620, %v5156
        %v5285 = vmul.f32 %v3621, %v5157
        %v5286 = vmul.f32 %v3622, %v5158
        %v5287 = vmul.f32 %v3623, %v5159
        %v5288 = vmul.f32 %v3624, %v5160
        %v5289 = vmul.f32 %v3625, %v5161
        %v5290 = vmul.f32 %v3626, %v5162
        %v5291 = vmul.f32 %v3627, %v5163
        %v5292 = vmul.f32 %v3628, %v5164
        %v5293 = vmul.f32 %v3629, %v5165
        %v5294 = vmul.f32 %v3630, %v5166
        %v5295 = vmul.f32 %v3631, %v5167
        %v5296 = vmul.f32 %v3632, %v5168
        %v5297 = vmul.f32 %v3633, %v5169
        %v5298 = vmul.f32 %v3634, %v5170
        %v5299 = vmul.f32 %v3635, %v5171
        %v5300 = vmul.f32 %v3636, %v5172
        %v5301 = vmul.f32 %v3637, %v5173
        %v5302 = vmul.f32 %v3638, %v5174
        %v5303 = vmul.f32 %v3639, %v5175
        %v5304 = vmul.f32 %v3640, %v5176
        %v5305 = vmul.f32 %v3641, %v5177
        %v5306 = vmul.f32 %v3642, %v5178
        %v5307 = vmul.f32 %v3643, %v5179
        %v5308 = vmul.f32 %v3644, %v5180
        %v5309 = vmul.f32 %v3645, %v5181
        %v5310 = vmul.f32 %v3646, %v5182
        %v5311 = vmul.f32 %v3647, %v5183
        %v5312 = vmul.f32 %v3648, %v5184
        %v5313 = vmul.f32 %v3649, %v5185
        %v5314 = vmul.f32 %v3650, %v5186
        %v5315 = vmul.f32 %v3651, %v5187
        %v5316 = vmul.f32 %v3652, %v5188
        %v5317 = vmul.f32 %v3653, %v5189
        %v5318 = vmul.f32 %v3654, %v5190
        %v5319 = vmul.f32 %v3655, %v5191
        %v5320 = vmul.f32 %v3656, %v5192
        %v5321 = vmul.f32 %v3657, %v5193
        %v5322 = vmul.f32 %v3658, %v5194
        %v5323 = vmul.f32 %v3659, %v5195
        %v5324 = vmul.f32 %v3660, %v5196
        %v5325 = vmul.f32 %v3661, %v5197
        %v5326 = vmul.f32 %v3662, %v5198
        %v5327 = vmul.f32 %v3663, %v5199
        %v5328 = vmul.f32 %v3664, %v5200
        %v5329 = vmul.f32 %v3665, %v5201
        %v5330 = vmul.f32 %v3666, %v5202
        %v5331 = vmul.f32 %v3667, %v5203
        %v5332 = vmul.f32 %v3668, %v5204
        %v5333 = vmul.f32 %v3669, %v5205
        %v5334 = vmul.f32 %v3670, %v5206
        %v5335 = vmul.f32 %v3671, %v5207
        %v5336 = vmul.f32 %v3672, %v5208
        %v5337 = vmul.f32 %v3673, %v5209
        %v5338 = vmul.f32 %v3674, %v5210
        %v5339 = vmul.f32 %v3675, %v5211
        %v5340 = vmul.f32 %v3676, %v5212
        %v5341 = vmul.f32 %v3677, %v5213
        %v5342 = vmul.f32 %v3678, %v5214
        %v5343 = vmul.f32 %v3679, %v5215
        %v5344 = vmul.f32 %v3680, %v5216
        %v5345 = vmul.f32 %v3681, %v5217
        %v5346 = vmul.f32 %v3682, %v5218
        %v5347 = vmul.f32 %v3683, %v5219
        %v5348 = vmul.f32 %v3684, %v5220
        %v5349 = vmul.f32 %v3685, %v5221
        %v5350 = vmul.f32 %v3686, %v5222
        %v5351 = vmul.f32 %v3687, %v5223
        %v5352 = vmul.f32 %v3688, %v5224
        %v5353 = vmul.f32 %v3689, %v5225
        %v5354 = vmul.f32 %v3690, %v5226
        %v5355 = vmul.f32 %v3691, %v5227
        %v5356 = vmul.f32 %v3692, %v5228
        %v5357 = vmul.f32 %v3693, %v5229
        %v5358 = vmul.f32 %v3694, %v5230
        %v5359 = vmul.f32 %v3695, %v5231
        %v5360 = vmul.f32 %v3696, %v5232
        %v5361 = vmul.f32 %v3697, %v5233
        %v5362 = vmul.f32 %v3698, %v5234
        %v5363 = vmul.f32 %v3699, %v5235
        %v5364 = vmul.f32 %v3700, %v5236
        %v5365 = vmul.f32 %v3701, %v5237
        %v5366 = vmul.f32 %v3702, %v5238
        %v5367 = vmul.f32 %v3703, %v5239
        %v5368 = vmul.f32 %v3704, %v5240
        %v5369 = vmul.f32 %v3705, %v5241
        %v5370 = vmul.f32 %v3706, %v5242
        %v5371 = vmul.f32 %v3707, %v5243
        %v5372 = vmul.f32 %v3708, %v5244
        %v5373 = vmul.f32 %v3709, %v5245
        %v5374 = vmul.f32 %v3710, %v5246
        %v5375 = vmul.f32 %v3711, %v5247
        %v5376 = vmul.f32 %v3712, %v5248
        %v5377 = vmul.f32 %v3713, %v5249
        %v5378 = vmul.f32 %v3714, %v5250
        %v5379 = vmul.f32 %v3715, %v5251
        %v5380 = vmul.f32 %v3716, %v5252
        %v5381 = vsub.f32 %v5253, %v5317
        %v5382 = vsub.f32 %v5254, %v5318
        %v5383 = vsub.f32 %v5255, %v5319
        %v5384 = vsub.f32 %v5256, %v5320
        %v5385 = vsub.f32 %v5257, %v5321
        %v5386 = vsub.f32 %v5258, %v5322
        %v5387 = vsub.f32 %v5259, %v5323
        %v5388 = vsub.f32 %v5260, %v5324
        %v5389 = vsub.f32 %v5261, %v5325
        %v5390 = vsub.f32 %v5262, %v5326
        %v5391 = vsub.f32 %v5263, %v5327
        %v5392 = vsub.f32 %v5264, %v5328
        %v5393 = vsub.f32 %v5265, %v5329
        %v5394 = vsub.f32 %v5266, %v5330
        %v5395 = vsub.f32 %v5267, %v5331
        %v5396 = vsub.f32 %v5268, %v5332
        %v5397 = vsub.f32 %v5269, %v5333
        %v5398 = vsub.f32 %v5270, %v5334
        %v5399 = vsub.f32 %v5271, %v5335
        %v5400 = vsub.f32 %v5272, %v5336
        %v5401 = vsub.f32 %v5273, %v5337
        %v5402 = vsub.f32 %v5274, %v5338
        %v5403 = vsub.f32 %v5275, %v5339
        %v5404 = vsub.f32 %v5276, %v5340
        %v5405 = vsub.f32 %v5277, %v5341
        %v5406 = vsub.f32 %v5278, %v5342
        %v5407 = vsub.f32 %v5279, %v5343
        %v5408 = vsub.f32 %v5280, %v5344
        %v5409 = vsub.f32 %v5281, %v5345
        %v5410 = vsub.f32 %v5282, %v5346
        %v5411 = vsub.f32 %v5283, %v5347
        %v5412 = vsub.f32 %v5284, %v5348
        %v5413 = vsub.f32 %v5285, %v5349
        %v5414 = vsub.f32 %v5286, %v5350
        %v5415 = vsub.f32 %v5287, %v5351
        %v5416 = vsub.f32 %v5288, %v5352
        %v5417 = vsub.f32 %v5289, %v5353
        %v5418 = vsub.f32 %v5290, %v5354
        %v5419 = vsub.f32 %v5291, %v5355
        %v5420 = vsub.f32 %v5292, %v5356
        %v5421 = vsub.f32 %v5293, %v5357
        %v5422 = vsub.f32 %v5294, %v5358
        %v5423 = vsub.f32 %v5295, %v5359
        %v5424 = vsub.f32 %v5296, %v5360
        %v5425 = vsub.f32 %v5297, %v5361
        %v5426 = vsub.f32 %v5298, %v5362
        %v5427 = vsub.f32 %v5299, %v5363
        %v5428 = vsub.f32 %v5300, %v5364
        %v5429 = vsub.f32 %v5301, %v5365
        %v5430 = vsub.f32 %v5302, %v5366
        %v5431 = vsub.f32 %v5303, %v5367
        %v5432 = vsub.f32 %v5304, %v5368
        %v5433 = vsub.f32 %v5305, %v5369
        %v5434 = vsub.f32 %v5306, %v5370
        %v5435 = vsub.f32 %v5307, %v5371
        %v5436 = vsub.f32 %v5308, %v5372
        %v5437 = vsub.f32 %v5309, %v5373
        %v5438 = vsub.f32 %v5310, %v5374
        %v5439 = vsub.f32 %v5311, %v5375
        %v5440 = vsub.f32 %v5312, %v5376
        %v5441 = vsub.f32 %v5313, %v5377
        %v5442 = vsub.f32 %v5314, %v5378
        %v5443 = vsub.f32 %v5315, %v5379
        %v5444 = vsub.f32 %v5316, %v5380
        %v5445 = vmul.f32 %v5381, %v5381
        %v5446 = vmul.f32 %v5382, %v5382
        %v5447 = vmul.f32 %v5383, %v5383
        %v5448 = vmul.f32 %v5384, %v5384
        %v5449 = vmul.f32 %v5385, %v5385
        %v5450 = vmul.f32 %v5386, %v5386
        %v5451 = vmul.f32 %v5387, %v5387
        %v5452 = vmul.f32 %v5388, %v5388
        %v5453 = vmul.f32 %v5389, %v5389
        %v5454 = vmul.f32 %v5390, %v5390
        %v5455 = vmul.f32 %v5391, %v5391
        %v5456 = vmul.f32 %v5392, %v5392
        %v5457 = vmul.f32 %v5393, %v5393
        %v5458 = vmul.f32 %v5394, %v5394
        %v5459 = vmul.f32 %v5395, %v5395
        %v5460 = vmul.f32 %v5396, %v5396
        %v5461 = vmul.f32 %v5397, %v5397
        %v5462 = vmul.f32 %v5398, %v5398
        %v5463 = vmul.f32 %v5399, %v5399
        %v5464 = vmul.f32 %v5400, %v5400
        %v5465 = vmul.f32 %v5401, %v5401
        %v5466 = vmul.f32 %v5402, %v5402
        %v5467 = vmul.f32 %v5403, %v5403
        %v5468 = vmul.f32 %v5404, %v5404
        %v5469 = vmul.f32 %v5405, %v5405
        %v5470 = vmul.f32 %v5406, %v5406
        %v5471 = vmul.f32 %v5407, %v5407
        %v5472 = vmul.f32 %v5408, %v5408
        %v5473 = vmul.f32 %v5409, %v5409
        %v5474 = vmul.f32 %v5410, %v5410
        %v5475 = vmul.f32 %v5411, %v5411
        %v5476 = vmul.f32 %v5412, %v5412
        %v5477 = vmul.f32 %v5413, %v5413
        %v5478 = vmul.f32 %v5414, %v5414
        %v5479 = vmul.f32 %v5415, %v5415
        %v5480 = vmul.f32 %v5416, %v5416
        %v5481 = vmul.f32 %v5417, %v5417
        %v5482 = vmul.f32 %v5418, %v5418
        %v5483 = vmul.f32 %v5419, %v5419
        %v5484 = vmul.f32 %v5420, %v5420
        %v5485 = vmul.f32 %v5421, %v5421
        %v5486 = vmul.f32 %v5422, %v5422
        %v5487 = vmul.f32 %v5423, %v5423
        %v5488 = vmul.f32 %v5424, %v5424
        %v5489 = vmul.f32 %v5425, %v5425
        %v5490 = vmul.f32 %v5426, %v5426
        %v5491 = vmul.f32 %v5427, %v5427
        %v5492 = vmul.f32 %v5428, %v5428
        %v5493 = vmul.f32 %v5429, %v5429
        %v5494 = vmul.f32 %v5430, %v5430
        %v5495 = vmul.f32 %v5431, %v5431
        %v5496 = vmul.f32 %v5432, %v5432
        %v5497 = vmul.f32 %v5433, %v5433
        %v5498 = vmul.f32 %v5434, %v5434
        %v5499 = vmul.f32 %v5435, %v5435
        %v5500 = vmul.f32 %v5436, %v5436
        %v5501 = vmul.f32 %v5437, %v5437
        %v5502 = vmul.f32 %v5438, %v5438
        %v5503 = vmul.f32 %v5439, %v5439
        %v5504 = vmul.f32 %v5440, %v5440
        %v5505 = vmul.f32 %v5441, %v5441
        %v5506 = vmul.f32 %v5442, %v5442
        %v5507 = vmul.f32 %v5443, %v5443
        %v5508 = vmul.f32 %v5444, %v5444
        %v5509 = vadd.f32 %v5445, %v5446
        %v5510 = vadd.f32 %v5509, %v5447
        %v5511 = vadd.f32 %v5510, %v5448
        %v5512 = vadd.f32 %v5511, %v5449
        %v5513 = vadd.f32 %v5512, %v5450
        %v5514 = vadd.f32 %v5513, %v5451
        %v5515 = vadd.f32 %v5514, %v5452
        %v5516 = vadd.f32 %v5515, %v5453
        %v5517 = vadd.f32 %v5516, %v5454
        %v5518 = vadd.f32 %v5517, %v5455
        %v5519 = vadd.f32 %v5518, %v5456
        %v5520 = vadd.f32 %v5519, %v5457
        %v5521 = vadd.f32 %v5520, %v5458
        %v5522 = vadd.f32 %v5521, %v5459
        %v5523 = vadd.f32 %v5522, %v5460
        %v5524 = vadd.f32 %v5523, %v5461
        %v5525 = vadd.f32 %v5524, %v5462
        %v5526 = vadd.f32 %v5525, %v5463
        %v5527 = vadd.f32 %v5526, %v5464
        %v5528 = vadd.f32 %v5527, %v5465
        %v5529 = vadd.f32 %v5528, %v5466
        %v5530 = vadd.f32 %v5529, %v5467
        %v5531 = vadd.f32 %v5530, %v5468
        %v5532 = vadd.f32 %v5531, %v5469
        %v5533 = vadd.f32 %v5532, %v5470
        %v5534 = vadd.f32 %v5533, %v5471
        %v5535 = vadd.f32 %v5534, %v5472
        %v5536 = vadd.f32 %v5535, %v5473
        %v5537 = vadd.f32 %v5536, %v5474
        %v5538 = vadd.f32 %v5537, %v5475
        %v5539 = vadd.f32 %v5538, %v5476
        %v5540 = vadd.f32 %v5539, %v5477
        %v5541 = vadd.f32 %v5540, %v5478
        %v5542 = vadd.f32 %v5541, %v5479
        %v5543 = vadd.f32 %v5542, %v5480
        %v5544 = vadd.f32 %v5543, %v5481
        %v5545 = vadd.f32 %v5544, %v5482
        %v5546 = vadd.f32 %v5545, %v5483
        %v5547 = vadd.f32 %v5546, %v5484
        %v5548 = vadd.f32 %v5547, %v5485
        %v5549 = vadd.f32 %v5548, %v5486
        %v5550 = vadd.f32 %v5549, %v5487
        %v5551 = vadd.f32 %v5550, %v5488
        %v5552 = vadd.f32 %v5551, %v5489
        %v5553 = vadd.f32 %v5552, %v5490
        %v5554 = vadd.f32 %v5553, %v5491
        %v5555 = vadd.f32 %v5554, %v5492
        %v5556 = vadd.f32 %v5555, %v5493
        %v5557 = vadd.f32 %v5556, %v5494
        %v5558 = vadd.f32 %v5557, %v5495
        %v5559 = vadd.f32 %v5558, %v5496
        %v5560 = vadd.f32 %v5559, %v5497
        %v5561 = vadd.f32 %v5560, %v5498
        %v5562 = vadd.f32 %v5561, %v5499
        %v5563 = vadd.f32 %v5562, %v5500
        %v5564 = vadd.f32 %v5563, %v5501
        %v5565 = vadd.f32 %v5564, %v5502
        %v5566 = vadd.f32 %v5565, %v5503
        %v5567 = vadd.f32 %v5566, %v5504
        %v5568 = vadd.f32 %v5567, %v5505
        %v5569 = vadd.f32 %v5568, %v5506
        %v5570 = vadd.f32 %v5569, %v5507
        %v5571 = vadd.f32 %v5570, %v5508
        %v5572 = vrot.slane %v5571, 4
        %v5573 = vadd.f32 %v5571, %v5572
        %v5574 = vrot.slane %v5573, 2
        %v5575 = vadd.f32 %v5573, %v5574
        %v5576 = vrot.slane %v5575, 1
        %v5577 = vadd.f32 %v5575, %v5576
        %v5578 = vld [vmem:[%s746] sm:$0xff]
        %v5579 = vadd.f32 %v5578, %v5577
        %5580 = vst [vmem:[%s746] sm:$0xff] %v5579
        %p5581 = scmp.lt.s32.totalorder %s19, 1
        %s5582 = scalar_select %p5581, %s19, 1
        %p5583 = scmp.lt.s32.totalorder %s20, 1
        %s5584 = scalar_select %p5583, %s20, 1
        %s5585 = smul.addr %s5582, 2
        %s5586 = sadd.s32 %s5584, %s5585
        %s5587 = smul.addr %s5586, 8
        %s5588 = scalar_lea.vmem %s3, %s5587
        // Predicated region
        $region63: #{medicalnet_perceptual_similarity.5} parent=53 // pred_check
          %p5589 = pneg %p125
        $region64: #{medicalnet_perceptual_similarity.5} parent=53 // pred_check_branch
          %5591 = sbr.rel (%p5589) target = $region66
        $region65: #{medicalnet_perceptual_similarity.5} parent=53 // pred_region
          _
        $region66: #{medicalnet_perceptual_similarity.5} parent=53 // pred_fallthru
          _
      $region54: #{medicalnet_perceptual_similarity.5} parent=5 // pred_fallthru
        _
      %p5592 = scmp.le.s32.totalorder 2, %s9
      // Predicated region
      $region67: #{medicalnet_perceptual_similarity.5} parent=5 // pred_check
        %p5593 = pneg %p5592
      $region68: #{medicalnet_perceptual_similarity.5} parent=5 // pred_check_branch
        %5595 = sbr.rel (%p5593) target = $region70
      $region69: #{medicalnet_perceptual_similarity.5} parent=5 // pred_region
        %s5596 = ssub.s32 %s9, 2
        // Predicated region
        $region71: #{medicalnet_perceptual_similarity.5} parent=69 // pred_check
          %p5597 = pneg %p131
        $region72: #{medicalnet_perceptual_similarity.5} parent=69 // pred_check_branch
          %5599 = sbr.rel (%p5597) target = $region74
        $region73: #{medicalnet_perceptual_similarity.5} parent=69 // pred_region
          %p5600 = scmp.lt.s32.totalorder %s22, 1
          %s5601 = scalar_select %p5600, %s22, 1
          %p5602 = scmp.lt.s32.totalorder %s23, 1
          %s5603 = scalar_select %p5602, %s23, 1
          %s5604 = smul.addr %s5601, 2
          %s5605 = sadd.s32 %s5603, %s5604
          %s5606 = smul.addr %s5605, 8
          %s5607 = scalar_lea.vmem %s3, %s5606
        $region74: #{medicalnet_perceptual_similarity.5} parent=69 // pred_fallthru
          _
      $region70: #{medicalnet_perceptual_similarity.5} parent=5 // pred_fallthru
        _
    $region6: #{medicalnet_perceptual_similarity.5} parent=1 // loop_footer
      %s13 = sadd.s32 1, %s9
    $region7: #{medicalnet_perceptual_similarity.5} parent=1 // loop_footer_branch
      %8 = sbr.rel target = $region3
    $region8: #{medicalnet_perceptual_similarity.5} parent=1 // loop_exit
      _

</llo_original>
